<compile_context>
chip_gen: v7x
topology: tpu7x:2x2x1
jax: 0.10.0
libtpu: 0.0.40
codegen_flags: <defaults>
</compile_context>

<pallas_src>
import jax
import jax.numpy as jnp
import numpy as np
from jax.experimental import pallas as pl
from jax.experimental.pallas import tpu as pltpu

SEQ, BATCH, IN, HID, OUT = 8, 2, 3, 8, 4
GATES = 4 * HID            # 32 (gate order i | f | g | o)
TB = SEQ * BATCH           # 16

# ---- static weight slab layout: (80, 32), every matrix padded to 8 rows ----
_WX00, _WH00 = 0, 8
_WX01, _WH01 = 16, 24
_WX10, _WH10 = 32, 40
_WX11, _WH11 = 48, 56
_LINW = 64                                   # (8, 32), lanes OUT.. are zero
_B00, _B01, _B10, _B11, _LINB = 72, 73, 74, 75, 76
_WROWS = 80

# ---- dynamic slab layout: (24, 8): x (16 rows), h0 (4 rows), c0 (4 rows) ----
_DX, _DH, _DC = 0, TB, TB + 2 * BATCH
_DROWS = TB + 4 * BATCH                      # 24

# ---- output slab layout: (24, 32): linear (16 rows), hn (4 rows), cn (4) ----
_OLIN, _OHN, _OCN = 0, TB, TB + 2 * BATCH
_OROWS = TB + 4 * BATCH                      # 24


# ----------------------------------------------------------------------------
# Single fused Pallas kernel, no grid:
#   lstm0 (2 layers) -> lstm1 (2 layers, init from lstm0 final state)
#   -> hardtanh -> sigmoid -> dropout(identity) -> linear(8->4)
# Layer-sequential formulation (mathematically identical to step-nested):
# each layer's input projection is one batched matmul; only h @ wh is serial.
# ----------------------------------------------------------------------------
def model_kernel(d_ref, w_ref, out_ref, y_ref):
    # Recurrent weights: static row views of the packed slab, loaded once.
    wh00 = w_ref[_WH00:_WH00 + HID, :]
    wh01 = w_ref[_WH01:_WH01 + HID, :]
    wh10 = w_ref[_WH10:_WH10 + HID, :]
    wh11 = w_ref[_WH11:_WH11 + HID, :]

    def cell(z, c):
        # z: (BATCH, 4H) pre-activations, PyTorch gate order (i, f, g, o).
        sig = jax.nn.sigmoid(z)              # one full-tile EUP pass
        th = jnp.tanh(z)                     # one full-tile EUP pass
        i = sig[:, 0:HID]
        f = sig[:, HID:2 * HID]
        g = th[:, 2 * HID:3 * HID]
        o = sig[:, 3 * HID:4 * HID]
        c_new = f * c + i * g
        return o * jnp.tanh(c_new), c_new

    def zx_of(inp, wx_row, b_row):
        # Hoisted input projection for a whole layer: (16, In) @ (In, 32) + b.
        wx = w_ref[wx_row:wx_row + HID, :]
        b = w_ref[b_row:b_row + 1, :]
        return jnp.dot(inp, wx, preferred_element_type=jnp.float32) + b

    def run_layer(zx, h, c, wh):
        # Only the recurrent term stays on the serialized chain; the layer
        # output streams into the y_ref scratch (feeds the next layer / head).
        for t in range(SEQ):                 # T=8, fully unrolled
            z = zx[t * BATCH:(t + 1) * BATCH, :] + jnp.dot(
                h, wh, preferred_element_type=jnp.float32)
            h, c = cell(z, c)
            y_ref[t * BATCH:(t + 1) * BATCH, :] = h
        return h, c

    # ---- dynamic inputs (one packed slab) ----
    x_flat = d_ref[_DX:_DX + TB, :]                    # (16, 8); lanes IN.. zero
    h0a = d_ref[_DH:_DH + BATCH, :]
    h0b = d_ref[_DH + BATCH:_DH + 2 * BATCH, :]
    c0a = d_ref[_DC:_DC + BATCH, :]
    c0b = d_ref[_DC + BATCH:_DC + 2 * BATCH, :]

    # ---- lstm0 (2 layers), initial state (h0, c0) ----
    h_a, c_a = run_layer(zx_of(x_flat, _WX00, _B00), h0a, c0a, wh00)
    h_b, c_b = run_layer(zx_of(y_ref[...], _WX01, _B01), h0b, c0b, wh01)

    # ---- lstm1 (2 layers), initial state = lstm0 final state (hn0, cn0) ----
    h_c, c_c = run_layer(zx_of(y_ref[...], _WX10, _B10), h_a, c_a, wh10)
    h_d, c_d = run_layer(zx_of(y_ref[...], _WX11, _B11), h_b, c_b, wh11)

    # ---- head: hardtanh -> sigmoid -> dropout(identity) -> linear(8 -> 4) ----
    act = jax.nn.sigmoid(jnp.clip(y_ref[...], -1.0, 1.0))            # (16, 8)
    lin = jnp.dot(act, w_ref[_LINW:_LINW + HID, :],
                  preferred_element_type=jnp.float32) \
          + w_ref[_LINB:_LINB + 1, :]                                 # (16, 32)

    # ---- single lane-dense output store (lin | hn | cn packed by rows) ----
    state = jnp.concatenate([h_c, h_d, c_c, c_d], axis=0)            # (8, 8)
    state = jnp.concatenate(
        [state, jnp.zeros((4 * BATCH, GATES - HID), jnp.float32)], axis=1)
    out_ref[...] = jnp.concatenate([lin, state], axis=0)             # (24, 32)


# ----------------------------------------------------------------------------
# Host-side packing + wrapper
# ----------------------------------------------------------------------------
def pack_weights(lstm0_params, lstm1_params, lin_w, lin_b):
    (wx00, wh00, b00), (wx01, wh01, b01) = lstm0_params
    (wx10, wh10, b10), (wx11, wh11, b11) = lstm1_params
    wx00p = jnp.pad(wx00, ((0, HID - IN), (0, 0)))                   # (8, 32)
    linwp = jnp.pad(lin_w, ((0, 0), (0, GATES - OUT)))               # (8, 32)
    linbp = jnp.pad(lin_b, ((0, 0), (0, GATES - OUT)))               # (1, 32)
    rows = [wx00p, wh00, wx01, wh01, wx10, wh10, wx11, wh11, linwp,
            b00, b01, b10, b11, linbp]
    slab = jnp.concatenate(rows, axis=0)                             # (77, 32)
    return jnp.pad(slab, ((0, _WROWS - slab.shape[0]), (0, 0)))      # (80, 32)


def pack_inputs(input0, h0, c0):
    x_flat = jnp.pad(input0.reshape(TB, IN), ((0, 0), (0, HID - IN)))
    return jnp.concatenate(
        [x_flat, h0.reshape(2 * BATCH, HID), c0.reshape(2 * BATCH, HID)],
        axis=0)                                                       # (24, 8)


def model_forward(input0, h0, c0, w_slab):
    d_slab = pack_inputs(input0, h0, c0)
    out = pl.pallas_call(
        model_kernel,
        out_shape=jax.ShapeDtypeStruct((_OROWS, GATES), jnp.float32),
        scratch_shapes=[pltpu.VMEM((TB, HID), jnp.float32)],
    )(d_slab, w_slab)
    lin_out = out[_OLIN:_OLIN + TB, 0:OUT]
    hn = out[_OHN:_OHN + 2 * BATCH, 0:HID].reshape(2, BATCH, HID)
    cn = out[_OCN:_OCN + 2 * BATCH, 0:HID].reshape(2, BATCH, HID)
    return lin_out, (hn, cn)


# ----------------------------------------------------------------------------
# Parameter construction (deterministic). Weights pre-transposed and
# gate-stacked: wx (In, 4H), wh (H, 4H), bias (1, 4H), gate order (i, f, g, o),
# bias = b_ih + b_hh.
# ----------------------------------------------------------------------------
def make_lstm_params(key, input_size, hidden_size, num_layers):
    params = []
    bound = 1.0 / (hidden_size ** 0.5)
    for l in range(num_layers):
        in_sz = input_size if l == 0 else hidden_size
        key, k1, k2, k3, k4 = jax.random.split(key, 5)
        wx = jax.random.uniform(k1, (in_sz, 4 * hidden_size), jnp.float32, -bound, bound)
        wh = jax.random.uniform(k2, (hidden_size, 4 * hidden_size), jnp.float32, -bound, bound)
        b_ih = jax.random.uniform(k3, (1, 4 * hidden_size), jnp.float32, -bound, bound)
        b_hh = jax.random.uniform(k4, (1, 4 * hidden_size), jnp.float32, -bound, bound)
        params.append((wx, wh, b_ih + b_hh))
    return params, key


# ----------------------------------------------------------------------------
# Pure-JAX reference (step-nested like PyTorch) for a numeric sanity check.
# ----------------------------------------------------------------------------
def _ref_lstm_stack(x_seq, h0, c0, params):
    hp = jax.lax.Precision.HIGHEST
    h = [h0[0], h0[1]]
    c = [c0[0], c0[1]]
    ys = []
    for t in range(SEQ):
        inp = x_seq[t]
        for l, (wx, wh, b) in enumerate(params):
            z = jnp.dot(inp, wx, precision=hp) + jnp.dot(h[l], wh, precision=hp) + b
            i = jax.nn.sigmoid(z[:, 0:HID])
            f = jax.nn.sigmoid(z[:, HID:2 * HID])
            g = jnp.tanh(z[:, 2 * HID:3 * HID])
            o = jax.nn.sigmoid(z[:, 3 * HID:4 * HID])
            c[l] = f * c[l] + i * g
            h[l] = o * jnp.tanh(c[l])
            inp = h[l]
        ys.append(inp)
    return jnp.stack(ys), jnp.stack(h), jnp.stack(c)


def reference_forward(input0, h0, c0, lstm0_params, lstm1_params, lin_w, lin_b):
    y0, hn0, cn0 = _ref_lstm_stack(input0, h0, c0, lstm0_params)
    y1, hn1, cn1 = _ref_lstm_stack(y0, hn0, cn0, lstm1_params)
    act = jax.nn.sigmoid(jnp.clip(y1, -1.0, 1.0)).reshape(TB, HID)
    lin = jnp.dot(act, lin_w, precision=jax.lax.Precision.HIGHEST) + lin_b
    return lin, hn1, cn1


if __name__ == "__main__":
    key = jax.random.PRNGKey(0)

    # input sequence: (T, B, input_size) = (8, 2, 3)
    key, kx = jax.random.split(key)
    input0 = jax.random.normal(kx, (SEQ, BATCH, IN), jnp.float32)

    # h0/c0: torch.rand(1, 2, 2, 8) squeezed -> (num_layers=2, batch=2, hidden=8)
    key, kh, kc = jax.random.split(key, 3)
    h0 = jax.random.uniform(kh, (1, 2, BATCH, HID), jnp.float32).reshape(2, BATCH, HID)
    c0 = jax.random.uniform(kc, (1, 2, BATCH, HID), jnp.float32).reshape(2, BATCH, HID)

    # LSTM parameters (deterministic stand-ins; see fidelity notes).
    lstm0_params, key = make_lstm_params(key, IN, HID, 2)
    lstm1_params, key = make_lstm_params(key, HID, HID, 2)

    # Linear(8, 4)
    key, kw, kb = jax.random.split(key, 3)
    lb = 1.0 / (HID ** 0.5)
    lin_w = jax.random.uniform(kw, (HID, OUT), jnp.float32, -lb, lb)
    lin_b = jax.random.uniform(kb, (1, OUT), jnp.float32, -lb, lb)

    # Pack static weights once (outside the per-call path).
    w_slab = pack_weights(lstm0_params, lstm1_params, lin_w, lin_b)

    fwd = jax.jit(model_forward)
    linear_out, (hn1, cn1) = fwd(input0, h0, c0, w_slab)
    jax.block_until_ready((linear_out, hn1, cn1))

    assert linear_out.shape == (TB, OUT)
    assert hn1.shape == (2, BATCH, HID)
    assert cn1.shape == (2, BATCH, HID)

    # Numeric sanity check vs. pure-JAX reference (same math, step-nested).
    ref_lin, ref_hn, ref_cn = reference_forward(
        input0, h0, c0, lstm0_params, lstm1_params, lin_w, lin_b)
    np.testing.assert_allclose(np.asarray(linear_out), np.asarray(ref_lin),
                               rtol=5e-3, atol=5e-3)
    np.testing.assert_allclose(np.asarray(hn1), np.asarray(ref_hn),
                               rtol=5e-3, atol=5e-3)
    np.testing.assert_allclose(np.asarray(cn1), np.asarray(ref_cn),
                               rtol=5e-3, atol=5e-3)

    print("KERNEL_OK")
</pallas_src>

<mosaic_0001>
module attributes {stable_mosaic.version = 11 : i64} {
  func.func @model_kernel(%arg0: memref<24x8xf32, #tpu.memory_space<vmem>>, %arg1: memref<80x32xf32, #tpu.memory_space<vmem>>, %arg2: memref<24x32xf32, #tpu.memory_space<vmem>>, %arg3: memref<16x8xf32, #tpu.memory_space<vmem>>) attributes {dimension_semantics = [], scalar_prefetch = 0 : i64, scratch_operands = 1 : i64, tpu.core_type = #tpu.core_type<tc>} {
    %c8 = arith.constant 8 : index
    %c0 = arith.constant 0 : index
    %0 = vector.load %arg1[%c8, %c0] : memref<80x32xf32, #tpu.memory_space<vmem>>, vector<8x32xf32>
    %c24 = arith.constant 24 : index
    %c0_0 = arith.constant 0 : index
    %1 = vector.load %arg1[%c24, %c0_0] : memref<80x32xf32, #tpu.memory_space<vmem>>, vector<8x32xf32>
    %c40 = arith.constant 40 : index
    %c0_1 = arith.constant 0 : index
    %2 = vector.load %arg1[%c40, %c0_1] : memref<80x32xf32, #tpu.memory_space<vmem>>, vector<8x32xf32>
    %c56 = arith.constant 56 : index
    %c0_2 = arith.constant 0 : index
    %3 = vector.load %arg1[%c56, %c0_2] : memref<80x32xf32, #tpu.memory_space<vmem>>, vector<8x32xf32>
    %c0_3 = arith.constant 0 : index
    %c0_4 = arith.constant 0 : index
    %4 = vector.load %arg0[%c0_3, %c0_4] : memref<24x8xf32, #tpu.memory_space<vmem>>, vector<16x8xf32>
    %c16 = arith.constant 16 : index
    %c0_5 = arith.constant 0 : index
    %5 = vector.load %arg0[%c16, %c0_5] : memref<24x8xf32, #tpu.memory_space<vmem>>, vector<2x8xf32>
    %c18 = arith.constant 18 : index
    %c0_6 = arith.constant 0 : index
    %6 = vector.load %arg0[%c18, %c0_6] : memref<24x8xf32, #tpu.memory_space<vmem>>, vector<2x8xf32>
    %c20 = arith.constant 20 : index
    %c0_7 = arith.constant 0 : index
    %7 = vector.load %arg0[%c20, %c0_7] : memref<24x8xf32, #tpu.memory_space<vmem>>, vector<2x8xf32>
    %c22 = arith.constant 22 : index
    %c0_8 = arith.constant 0 : index
    %8 = vector.load %arg0[%c22, %c0_8] : memref<24x8xf32, #tpu.memory_space<vmem>>, vector<2x8xf32>
    %c0_9 = arith.constant 0 : index
    %c0_10 = arith.constant 0 : index
    %9 = vector.load %arg1[%c0_9, %c0_10] : memref<80x32xf32, #tpu.memory_space<vmem>>, vector<8x32xf32>
    %c72 = arith.constant 72 : index
    %c0_11 = arith.constant 0 : index
    %10 = vector.load %arg1[%c72, %c0_11] : memref<80x32xf32, #tpu.memory_space<vmem>>, vector<1x32xf32>
    %cst = arith.constant dense<0.000000e+00> : vector<16x32xf32>
    %11 = tpu.matmul %4, %9, %cst {dimension_numbers = #tpu.dot_dimension_numbers<[1], [0], [0], [1], [0, 0, 1, 1], [], []>} : vector<16x8xf32>, vector<8x32xf32>, vector<16x32xf32> -> vector<16x32xf32>
    %12 = vector.broadcast %10 : vector<1x32xf32> to vector<16x32xf32>
    %13 = arith.addf %11, %12 : vector<16x32xf32>
    %14 = vector.extract_strided_slice %13 {offsets = [0, 0], sizes = [2, 32], strides = [1, 1]} : vector<16x32xf32> to vector<2x32xf32>
    %cst_12 = arith.constant dense<0.000000e+00> : vector<2x32xf32>
    %15 = tpu.matmul %5, %0, %cst_12 {dimension_numbers = #tpu.dot_dimension_numbers<[1], [0], [0], [1], [0, 0, 1, 1], [], []>} : vector<2x8xf32>, vector<8x32xf32>, vector<2x32xf32> -> vector<2x32xf32>
    %16 = arith.addf %14, %15 : vector<2x32xf32>
    %17 = arith.negf %16 : vector<2x32xf32>
    %18 = math.exp %17 : vector<2x32xf32>
    %cst_13 = arith.constant 1.000000e+00 : f32
    %19 = vector.broadcast %cst_13 : f32 to vector<2x32xf32>
    %20 = arith.addf %19, %18 : vector<2x32xf32>
    %21 = arith.divf %19, %20 : vector<2x32xf32>
    %22 = math.tanh %16 : vector<2x32xf32>
    %23 = vector.extract_strided_slice %21 {offsets = [0, 0], sizes = [2, 8], strides = [1, 1]} : vector<2x32xf32> to vector<2x8xf32>
    %24 = vector.extract_strided_slice %21 {offsets = [0, 8], sizes = [2, 8], strides = [1, 1]} : vector<2x32xf32> to vector<2x8xf32>
    %25 = vector.extract_strided_slice %22 {offsets = [0, 16], sizes = [2, 8], strides = [1, 1]} : vector<2x32xf32> to vector<2x8xf32>
    %26 = vector.extract_strided_slice %21 {offsets = [0, 24], sizes = [2, 8], strides = [1, 1]} : vector<2x32xf32> to vector<2x8xf32>
    %27 = arith.mulf %24, %7 : vector<2x8xf32>
    %28 = arith.mulf %23, %25 : vector<2x8xf32>
    %29 = arith.addf %27, %28 : vector<2x8xf32>
    %30 = math.tanh %29 : vector<2x8xf32>
    %31 = arith.mulf %26, %30 : vector<2x8xf32>
    %c0_14 = arith.constant 0 : index
    %c0_15 = arith.constant 0 : index
    %32 = vector.load %arg3[%c0_14, %c0_15] : memref<16x8xf32, #tpu.memory_space<vmem>>, vector<2x8xf32>
    tpu.vector_store %arg3[%c0_14, %c0_15], %31 {strides = array<i32>} : memref<16x8xf32, #tpu.memory_space<vmem>>, vector<2x8xf32>,
    %33 = vector.extract_strided_slice %13 {offsets = [2, 0], sizes = [2, 32], strides = [1, 1]} : vector<16x32xf32> to vector<2x32xf32>
    %cst_16 = arith.constant dense<0.000000e+00> : vector<2x32xf32>
    %34 = tpu.matmul %31, %0, %cst_16 {dimension_numbers = #tpu.dot_dimension_numbers<[1], [0], [0], [1], [0, 0, 1, 1], [], []>} : vector<2x8xf32>, vector<8x32xf32>, vector<2x32xf32> -> vector<2x32xf32>
    %35 = arith.addf %33, %34 : vector<2x32xf32>
    %36 = arith.negf %35 : vector<2x32xf32>
    %37 = math.exp %36 : vector<2x32xf32>
    %cst_17 = arith.constant 1.000000e+00 : f32
    %38 = vector.broadcast %cst_17 : f32 to vector<2x32xf32>
    %39 = arith.addf %38, %37 : vector<2x32xf32>
    %40 = arith.divf %38, %39 : vector<2x32xf32>
    %41 = math.tanh %35 : vector<2x32xf32>
    %42 = vector.extract_strided_slice %40 {offsets = [0, 0], sizes = [2, 8], strides = [1, 1]} : vector<2x32xf32> to vector<2x8xf32>
    %43 = vector.extract_strided_slice %40 {offsets = [0, 8], sizes = [2, 8], strides = [1, 1]} : vector<2x32xf32> to vector<2x8xf32>
    %44 = vector.extract_strided_slice %41 {offsets = [0, 16], sizes = [2, 8], strides = [1, 1]} : vector<2x32xf32> to vector<2x8xf32>
    %45 = vector.extract_strided_slice %40 {offsets = [0, 24], sizes = [2, 8], strides = [1, 1]} : vector<2x32xf32> to vector<2x8xf32>
    %46 = arith.mulf %43, %29 : vector<2x8xf32>
    %47 = arith.mulf %42, %44 : vector<2x8xf32>
    %48 = arith.addf %46, %47 : vector<2x8xf32>
    %49 = math.tanh %48 : vector<2x8xf32>
    %50 = arith.mulf %45, %49 : vector<2x8xf32>
    %c2 = arith.constant 2 : index
    %c0_18 = arith.constant 0 : index
    %51 = vector.load %arg3[%c2, %c0_18] : memref<16x8xf32, #tpu.memory_space<vmem>>, vector<2x8xf32>
    tpu.vector_store %arg3[%c2, %c0_18], %50 {strides = array<i32>} : memref<16x8xf32, #tpu.memory_space<vmem>>, vector<2x8xf32>,
    %52 = vector.extract_strided_slice %13 {offsets = [4, 0], sizes = [2, 32], strides = [1, 1]} : vector<16x32xf32> to vector<2x32xf32>
    %cst_19 = arith.constant dense<0.000000e+00> : vector<2x32xf32>
    %53 = tpu.matmul %50, %0, %cst_19 {dimension_numbers = #tpu.dot_dimension_numbers<[1], [0], [0], [1], [0, 0, 1, 1], [], []>} : vector<2x8xf32>, vector<8x32xf32>, vector<2x32xf32> -> vector<2x32xf32>
    %54 = arith.addf %52, %53 : vector<2x32xf32>
    %55 = arith.negf %54 : vector<2x32xf32>
    %56 = math.exp %55 : vector<2x32xf32>
    %cst_20 = arith.constant 1.000000e+00 : f32
    %57 = vector.broadcast %cst_20 : f32 to vector<2x32xf32>
    %58 = arith.addf %57, %56 : vector<2x32xf32>
    %59 = arith.divf %57, %58 : vector<2x32xf32>
    %60 = math.tanh %54 : vector<2x32xf32>
    %61 = vector.extract_strided_slice %59 {offsets = [0, 0], sizes = [2, 8], strides = [1, 1]} : vector<2x32xf32> to vector<2x8xf32>
    %62 = vector.extract_strided_slice %59 {offsets = [0, 8], sizes = [2, 8], strides = [1, 1]} : vector<2x32xf32> to vector<2x8xf32>
    %63 = vector.extract_strided_slice %60 {offsets = [0, 16], sizes = [2, 8], strides = [1, 1]} : vector<2x32xf32> to vector<2x8xf32>
    %64 = vector.extract_strided_slice %59 {offsets = [0, 24], sizes = [2, 8], strides = [1, 1]} : vector<2x32xf32> to vector<2x8xf32>
    %65 = arith.mulf %62, %48 : vector<2x8xf32>
    %66 = arith.mulf %61, %63 : vector<2x8xf32>
    %67 = arith.addf %65, %66 : vector<2x8xf32>
    %68 = math.tanh %67 : vector<2x8xf32>
    %69 = arith.mulf %64, %68 : vector<2x8xf32>
    %c4 = arith.constant 4 : index
    %c0_21 = arith.constant 0 : index
    %70 = vector.load %arg3[%c4, %c0_21] : memref<16x8xf32, #tpu.memory_space<vmem>>, vector<2x8xf32>
    tpu.vector_store %arg3[%c4, %c0_21], %69 {strides = array<i32>} : memref<16x8xf32, #tpu.memory_space<vmem>>, vector<2x8xf32>,
    %71 = vector.extract_strided_slice %13 {offsets = [6, 0], sizes = [2, 32], strides = [1, 1]} : vector<16x32xf32> to vector<2x32xf32>
    %cst_22 = arith.constant dense<0.000000e+00> : vector<2x32xf32>
    %72 = tpu.matmul %69, %0, %cst_22 {dimension_numbers = #tpu.dot_dimension_numbers<[1], [0], [0], [1], [0, 0, 1, 1], [], []>} : vector<2x8xf32>, vector<8x32xf32>, vector<2x32xf32> -> vector<2x32xf32>
    %73 = arith.addf %71, %72 : vector<2x32xf32>
    %74 = arith.negf %73 : vector<2x32xf32>
    %75 = math.exp %74 : vector<2x32xf32>
    %cst_23 = arith.constant 1.000000e+00 : f32
    %76 = vector.broadcast %cst_23 : f32 to vector<2x32xf32>
    %77 = arith.addf %76, %75 : vector<2x32xf32>
    %78 = arith.divf %76, %77 : vector<2x32xf32>
    %79 = math.tanh %73 : vector<2x32xf32>
    %80 = vector.extract_strided_slice %78 {offsets = [0, 0], sizes = [2, 8], strides = [1, 1]} : vector<2x32xf32> to vector<2x8xf32>
    %81 = vector.extract_strided_slice %78 {offsets = [0, 8], sizes = [2, 8], strides = [1, 1]} : vector<2x32xf32> to vector<2x8xf32>
    %82 = vector.extract_strided_slice %79 {offsets = [0, 16], sizes = [2, 8], strides = [1, 1]} : vector<2x32xf32> to vector<2x8xf32>
    %83 = vector.extract_strided_slice %78 {offsets = [0, 24], sizes = [2, 8], strides = [1, 1]} : vector<2x32xf32> to vector<2x8xf32>
    %84 = arith.mulf %81, %67 : vector<2x8xf32>
    %85 = arith.mulf %80, %82 : vector<2x8xf32>
    %86 = arith.addf %84, %85 : vector<2x8xf32>
    %87 = math.tanh %86 : vector<2x8xf32>
    %88 = arith.mulf %83, %87 : vector<2x8xf32>
    %c6 = arith.constant 6 : index
    %c0_24 = arith.constant 0 : index
    %89 = vector.load %arg3[%c6, %c0_24] : memref<16x8xf32, #tpu.memory_space<vmem>>, vector<2x8xf32>
    tpu.vector_store %arg3[%c6, %c0_24], %88 {strides = array<i32>} : memref<16x8xf32, #tpu.memory_space<vmem>>, vector<2x8xf32>,
    %90 = vector.extract_strided_slice %13 {offsets = [8, 0], sizes = [2, 32], strides = [1, 1]} : vector<16x32xf32> to vector<2x32xf32>
    %cst_25 = arith.constant dense<0.000000e+00> : vector<2x32xf32>
    %91 = tpu.matmul %88, %0, %cst_25 {dimension_numbers = #tpu.dot_dimension_numbers<[1], [0], [0], [1], [0, 0, 1, 1], [], []>} : vector<2x8xf32>, vector<8x32xf32>, vector<2x32xf32> -> vector<2x32xf32>
    %92 = arith.addf %90, %91 : vector<2x32xf32>
    %93 = arith.negf %92 : vector<2x32xf32>
    %94 = math.exp %93 : vector<2x32xf32>
    %cst_26 = arith.constant 1.000000e+00 : f32
    %95 = vector.broadcast %cst_26 : f32 to vector<2x32xf32>
    %96 = arith.addf %95, %94 : vector<2x32xf32>
    %97 = arith.divf %95, %96 : vector<2x32xf32>
    %98 = math.tanh %92 : vector<2x32xf32>
    %99 = vector.extract_strided_slice %97 {offsets = [0, 0], sizes = [2, 8], strides = [1, 1]} : vector<2x32xf32> to vector<2x8xf32>
    %100 = vector.extract_strided_slice %97 {offsets = [0, 8], sizes = [2, 8], strides = [1, 1]} : vector<2x32xf32> to vector<2x8xf32>
    %101 = vector.extract_strided_slice %98 {offsets = [0, 16], sizes = [2, 8], strides = [1, 1]} : vector<2x32xf32> to vector<2x8xf32>
    %102 = vector.extract_strided_slice %97 {offsets = [0, 24], sizes = [2, 8], strides = [1, 1]} : vector<2x32xf32> to vector<2x8xf32>
    %103 = arith.mulf %100, %86 : vector<2x8xf32>
    %104 = arith.mulf %99, %101 : vector<2x8xf32>
    %105 = arith.addf %103, %104 : vector<2x8xf32>
    %106 = math.tanh %105 : vector<2x8xf32>
    %107 = arith.mulf %102, %106 : vector<2x8xf32>
    %c8_27 = arith.constant 8 : index
    %c0_28 = arith.constant 0 : index
    %108 = vector.load %arg3[%c8_27, %c0_28] : memref<16x8xf32, #tpu.memory_space<vmem>>, vector<2x8xf32>
    tpu.vector_store %arg3[%c8_27, %c0_28], %107 {strides = array<i32>} : memref<16x8xf32, #tpu.memory_space<vmem>>, vector<2x8xf32>,
    %109 = vector.extract_strided_slice %13 {offsets = [10, 0], sizes = [2, 32], strides = [1, 1]} : vector<16x32xf32> to vector<2x32xf32>
    %cst_29 = arith.constant dense<0.000000e+00> : vector<2x32xf32>
    %110 = tpu.matmul %107, %0, %cst_29 {dimension_numbers = #tpu.dot_dimension_numbers<[1], [0], [0], [1], [0, 0, 1, 1], [], []>} : vector<2x8xf32>, vector<8x32xf32>, vector<2x32xf32> -> vector<2x32xf32>
    %111 = arith.addf %109, %110 : vector<2x32xf32>
    %112 = arith.negf %111 : vector<2x32xf32>
    %113 = math.exp %112 : vector<2x32xf32>
    %cst_30 = arith.constant 1.000000e+00 : f32
    %114 = vector.broadcast %cst_30 : f32 to vector<2x32xf32>
    %115 = arith.addf %114, %113 : vector<2x32xf32>
    %116 = arith.divf %114, %115 : vector<2x32xf32>
    %117 = math.tanh %111 : vector<2x32xf32>
    %118 = vector.extract_strided_slice %116 {offsets = [0, 0], sizes = [2, 8], strides = [1, 1]} : vector<2x32xf32> to vector<2x8xf32>
    %119 = vector.extract_strided_slice %116 {offsets = [0, 8], sizes = [2, 8], strides = [1, 1]} : vector<2x32xf32> to vector<2x8xf32>
    %120 = vector.extract_strided_slice %117 {offsets = [0, 16], sizes = [2, 8], strides = [1, 1]} : vector<2x32xf32> to vector<2x8xf32>
    %121 = vector.extract_strided_slice %116 {offsets = [0, 24], sizes = [2, 8], strides = [1, 1]} : vector<2x32xf32> to vector<2x8xf32>
    %122 = arith.mulf %119, %105 : vector<2x8xf32>
    %123 = arith.mulf %118, %120 : vector<2x8xf32>
    %124 = arith.addf %122, %123 : vector<2x8xf32>
    %125 = math.tanh %124 : vector<2x8xf32>
    %126 = arith.mulf %121, %125 : vector<2x8xf32>
    %c10 = arith.constant 10 : index
    %c0_31 = arith.constant 0 : index
    %127 = vector.load %arg3[%c10, %c0_31] : memref<16x8xf32, #tpu.memory_space<vmem>>, vector<2x8xf32>
    tpu.vector_store %arg3[%c10, %c0_31], %126 {strides = array<i32>} : memref<16x8xf32, #tpu.memory_space<vmem>>, vector<2x8xf32>,
    %128 = vector.extract_strided_slice %13 {offsets = [12, 0], sizes = [2, 32], strides = [1, 1]} : vector<16x32xf32> to vector<2x32xf32>
    %cst_32 = arith.constant dense<0.000000e+00> : vector<2x32xf32>
    %129 = tpu.matmul %126, %0, %cst_32 {dimension_numbers = #tpu.dot_dimension_numbers<[1], [0], [0], [1], [0, 0, 1, 1], [], []>} : vector<2x8xf32>, vector<8x32xf32>, vector<2x32xf32> -> vector<2x32xf32>
    %130 = arith.addf %128, %129 : vector<2x32xf32>
    %131 = arith.negf %130 : vector<2x32xf32>
    %132 = math.exp %131 : vector<2x32xf32>
    %cst_33 = arith.constant 1.000000e+00 : f32
    %133 = vector.broadcast %cst_33 : f32 to vector<2x32xf32>
    %134 = arith.addf %133, %132 : vector<2x32xf32>
    %135 = arith.divf %133, %134 : vector<2x32xf32>
    %136 = math.tanh %130 : vector<2x32xf32>
    %137 = vector.extract_strided_slice %135 {offsets = [0, 0], sizes = [2, 8], strides = [1, 1]} : vector<2x32xf32> to vector<2x8xf32>
    %138 = vector.extract_strided_slice %135 {offsets = [0, 8], sizes = [2, 8], strides = [1, 1]} : vector<2x32xf32> to vector<2x8xf32>
    %139 = vector.extract_strided_slice %136 {offsets = [0, 16], sizes = [2, 8], strides = [1, 1]} : vector<2x32xf32> to vector<2x8xf32>
    %140 = vector.extract_strided_slice %135 {offsets = [0, 24], sizes = [2, 8], strides = [1, 1]} : vector<2x32xf32> to vector<2x8xf32>
    %141 = arith.mulf %138, %124 : vector<2x8xf32>
    %142 = arith.mulf %137, %139 : vector<2x8xf32>
    %143 = arith.addf %141, %142 : vector<2x8xf32>
    %144 = math.tanh %143 : vector<2x8xf32>
    %145 = arith.mulf %140, %144 : vector<2x8xf32>
    %c12 = arith.constant 12 : index
    %c0_34 = arith.constant 0 : index
    %146 = vector.load %arg3[%c12, %c0_34] : memref<16x8xf32, #tpu.memory_space<vmem>>, vector<2x8xf32>
    tpu.vector_store %arg3[%c12, %c0_34], %145 {strides = array<i32>} : memref<16x8xf32, #tpu.memory_space<vmem>>, vector<2x8xf32>,
    %147 = vector.extract_strided_slice %13 {offsets = [14, 0], sizes = [2, 32], strides = [1, 1]} : vector<16x32xf32> to vector<2x32xf32>
    %cst_35 = arith.constant dense<0.000000e+00> : vector<2x32xf32>
    %148 = tpu.matmul %145, %0, %cst_35 {dimension_numbers = #tpu.dot_dimension_numbers<[1], [0], [0], [1], [0, 0, 1, 1], [], []>} : vector<2x8xf32>, vector<8x32xf32>, vector<2x32xf32> -> vector<2x32xf32>
    %149 = arith.addf %147, %148 : vector<2x32xf32>
    %150 = arith.negf %149 : vector<2x32xf32>
    %151 = math.exp %150 : vector<2x32xf32>
    %cst_36 = arith.constant 1.000000e+00 : f32
    %152 = vector.broadcast %cst_36 : f32 to vector<2x32xf32>
    %153 = arith.addf %152, %151 : vector<2x32xf32>
    %154 = arith.divf %152, %153 : vector<2x32xf32>
    %155 = math.tanh %149 : vector<2x32xf32>
    %156 = vector.extract_strided_slice %154 {offsets = [0, 0], sizes = [2, 8], strides = [1, 1]} : vector<2x32xf32> to vector<2x8xf32>
    %157 = vector.extract_strided_slice %154 {offsets = [0, 8], sizes = [2, 8], strides = [1, 1]} : vector<2x32xf32> to vector<2x8xf32>
    %158 = vector.extract_strided_slice %155 {offsets = [0, 16], sizes = [2, 8], strides = [1, 1]} : vector<2x32xf32> to vector<2x8xf32>
    %159 = vector.extract_strided_slice %154 {offsets = [0, 24], sizes = [2, 8], strides = [1, 1]} : vector<2x32xf32> to vector<2x8xf32>
    %160 = arith.mulf %157, %143 : vector<2x8xf32>
    %161 = arith.mulf %156, %158 : vector<2x8xf32>
    %162 = arith.addf %160, %161 : vector<2x8xf32>
    %163 = math.tanh %162 : vector<2x8xf32>
    %164 = arith.mulf %159, %163 : vector<2x8xf32>
    %c14 = arith.constant 14 : index
    %c0_37 = arith.constant 0 : index
    %165 = vector.load %arg3[%c14, %c0_37] : memref<16x8xf32, #tpu.memory_space<vmem>>, vector<2x8xf32>
    tpu.vector_store %arg3[%c14, %c0_37], %164 {strides = array<i32>} : memref<16x8xf32, #tpu.memory_space<vmem>>, vector<2x8xf32>,
    %c0_38 = arith.constant 0 : index
    %c0_39 = arith.constant 0 : index
    %166 = vector.load %arg3[%c0_38, %c0_39] : memref<16x8xf32, #tpu.memory_space<vmem>>, vector<16x8xf32>
    %c16_40 = arith.constant 16 : index
    %c0_41 = arith.constant 0 : index
    %167 = vector.load %arg1[%c16_40, %c0_41] : memref<80x32xf32, #tpu.memory_space<vmem>>, vector<8x32xf32>
    %c73 = arith.constant 73 : index
    %c0_42 = arith.constant 0 : index
    %168 = vector.load %arg1[%c73, %c0_42] : memref<80x32xf32, #tpu.memory_space<vmem>>, vector<1x32xf32>
    %cst_43 = arith.constant dense<0.000000e+00> : vector<16x32xf32>
    %169 = tpu.matmul %166, %167, %cst_43 {dimension_numbers = #tpu.dot_dimension_numbers<[1], [0], [0], [1], [0, 0, 1, 1], [], []>} : vector<16x8xf32>, vector<8x32xf32>, vector<16x32xf32> -> vector<16x32xf32>
    %170 = vector.broadcast %168 : vector<1x32xf32> to vector<16x32xf32>
    %171 = arith.addf %169, %170 : vector<16x32xf32>
    %172 = vector.extract_strided_slice %171 {offsets = [0, 0], sizes = [2, 32], strides = [1, 1]} : vector<16x32xf32> to vector<2x32xf32>
    %cst_44 = arith.constant dense<0.000000e+00> : vector<2x32xf32>
    %173 = tpu.matmul %6, %1, %cst_44 {dimension_numbers = #tpu.dot_dimension_numbers<[1], [0], [0], [1], [0, 0, 1, 1], [], []>} : vector<2x8xf32>, vector<8x32xf32>, vector<2x32xf32> -> vector<2x32xf32>
    %174 = arith.addf %172, %173 : vector<2x32xf32>
    %175 = arith.negf %174 : vector<2x32xf32>
    %176 = math.exp %175 : vector<2x32xf32>
    %cst_45 = arith.constant 1.000000e+00 : f32
    %177 = vector.broadcast %cst_45 : f32 to vector<2x32xf32>
    %178 = arith.addf %177, %176 : vector<2x32xf32>
    %179 = arith.divf %177, %178 : vector<2x32xf32>
    %180 = math.tanh %174 : vector<2x32xf32>
    %181 = vector.extract_strided_slice %179 {offsets = [0, 0], sizes = [2, 8], strides = [1, 1]} : vector<2x32xf32> to vector<2x8xf32>
    %182 = vector.extract_strided_slice %179 {offsets = [0, 8], sizes = [2, 8], strides = [1, 1]} : vector<2x32xf32> to vector<2x8xf32>
    %183 = vector.extract_strided_slice %180 {offsets = [0, 16], sizes = [2, 8], strides = [1, 1]} : vector<2x32xf32> to vector<2x8xf32>
    %184 = vector.extract_strided_slice %179 {offsets = [0, 24], sizes = [2, 8], strides = [1, 1]} : vector<2x32xf32> to vector<2x8xf32>
    %185 = arith.mulf %182, %8 : vector<2x8xf32>
    %186 = arith.mulf %181, %183 : vector<2x8xf32>
    %187 = arith.addf %185, %186 : vector<2x8xf32>
    %188 = math.tanh %187 : vector<2x8xf32>
    %189 = arith.mulf %184, %188 : vector<2x8xf32>
    %c0_46 = arith.constant 0 : index
    %c0_47 = arith.constant 0 : index
    %190 = vector.load %arg3[%c0_46, %c0_47] : memref<16x8xf32, #tpu.memory_space<vmem>>, vector<2x8xf32>
    tpu.vector_store %arg3[%c0_46, %c0_47], %189 {strides = array<i32>} : memref<16x8xf32, #tpu.memory_space<vmem>>, vector<2x8xf32>,
    %191 = vector.extract_strided_slice %171 {offsets = [2, 0], sizes = [2, 32], strides = [1, 1]} : vector<16x32xf32> to vector<2x32xf32>
    %cst_48 = arith.constant dense<0.000000e+00> : vector<2x32xf32>
    %192 = tpu.matmul %189, %1, %cst_48 {dimension_numbers = #tpu.dot_dimension_numbers<[1], [0], [0], [1], [0, 0, 1, 1], [], []>} : vector<2x8xf32>, vector<8x32xf32>, vector<2x32xf32> -> vector<2x32xf32>
    %193 = arith.addf %191, %192 : vector<2x32xf32>
    %194 = arith.negf %193 : vector<2x32xf32>
    %195 = math.exp %194 : vector<2x32xf32>
    %cst_49 = arith.constant 1.000000e+00 : f32
    %196 = vector.broadcast %cst_49 : f32 to vector<2x32xf32>
    %197 = arith.addf %196, %195 : vector<2x32xf32>
    %198 = arith.divf %196, %197 : vector<2x32xf32>
    %199 = math.tanh %193 : vector<2x32xf32>
    %200 = vector.extract_strided_slice %198 {offsets = [0, 0], sizes = [2, 8], strides = [1, 1]} : vector<2x32xf32> to vector<2x8xf32>
    %201 = vector.extract_strided_slice %198 {offsets = [0, 8], sizes = [2, 8], strides = [1, 1]} : vector<2x32xf32> to vector<2x8xf32>
    %202 = vector.extract_strided_slice %199 {offsets = [0, 16], sizes = [2, 8], strides = [1, 1]} : vector<2x32xf32> to vector<2x8xf32>
    %203 = vector.extract_strided_slice %198 {offsets = [0, 24], sizes = [2, 8], strides = [1, 1]} : vector<2x32xf32> to vector<2x8xf32>
    %204 = arith.mulf %201, %187 : vector<2x8xf32>
    %205 = arith.mulf %200, %202 : vector<2x8xf32>
    %206 = arith.addf %204, %205 : vector<2x8xf32>
    %207 = math.tanh %206 : vector<2x8xf32>
    %208 = arith.mulf %203, %207 : vector<2x8xf32>
    %c2_50 = arith.constant 2 : index
    %c0_51 = arith.constant 0 : index
    %209 = vector.load %arg3[%c2_50, %c0_51] : memref<16x8xf32, #tpu.memory_space<vmem>>, vector<2x8xf32>
    tpu.vector_store %arg3[%c2_50, %c0_51], %208 {strides = array<i32>} : memref<16x8xf32, #tpu.memory_space<vmem>>, vector<2x8xf32>,
    %210 = vector.extract_strided_slice %171 {offsets = [4, 0], sizes = [2, 32], strides = [1, 1]} : vector<16x32xf32> to vector<2x32xf32>
    %cst_52 = arith.constant dense<0.000000e+00> : vector<2x32xf32>
    %211 = tpu.matmul %208, %1, %cst_52 {dimension_numbers = #tpu.dot_dimension_numbers<[1], [0], [0], [1], [0, 0, 1, 1], [], []>} : vector<2x8xf32>, vector<8x32xf32>, vector<2x32xf32> -> vector<2x32xf32>
    %212 = arith.addf %210, %211 : vector<2x32xf32>
    %213 = arith.negf %212 : vector<2x32xf32>
    %214 = math.exp %213 : vector<2x32xf32>
    %cst_53 = arith.constant 1.000000e+00 : f32
    %215 = vector.broadcast %cst_53 : f32 to vector<2x32xf32>
    %216 = arith.addf %215, %214 : vector<2x32xf32>
    %217 = arith.divf %215, %216 : vector<2x32xf32>
    %218 = math.tanh %212 : vector<2x32xf32>
    %219 = vector.extract_strided_slice %217 {offsets = [0, 0], sizes = [2, 8], strides = [1, 1]} : vector<2x32xf32> to vector<2x8xf32>
    %220 = vector.extract_strided_slice %217 {offsets = [0, 8], sizes = [2, 8], strides = [1, 1]} : vector<2x32xf32> to vector<2x8xf32>
    %221 = vector.extract_strided_slice %218 {offsets = [0, 16], sizes = [2, 8], strides = [1, 1]} : vector<2x32xf32> to vector<2x8xf32>
    %222 = vector.extract_strided_slice %217 {offsets = [0, 24], sizes = [2, 8], strides = [1, 1]} : vector<2x32xf32> to vector<2x8xf32>
    %223 = arith.mulf %220, %206 : vector<2x8xf32>
    %224 = arith.mulf %219, %221 : vector<2x8xf32>
    %225 = arith.addf %223, %224 : vector<2x8xf32>
    %226 = math.tanh %225 : vector<2x8xf32>
    %227 = arith.mulf %222, %226 : vector<2x8xf32>
    %c4_54 = arith.constant 4 : index
    %c0_55 = arith.constant 0 : index
    %228 = vector.load %arg3[%c4_54, %c0_55] : memref<16x8xf32, #tpu.memory_space<vmem>>, vector<2x8xf32>
    tpu.vector_store %arg3[%c4_54, %c0_55], %227 {strides = array<i32>} : memref<16x8xf32, #tpu.memory_space<vmem>>, vector<2x8xf32>,
    %229 = vector.extract_strided_slice %171 {offsets = [6, 0], sizes = [2, 32], strides = [1, 1]} : vector<16x32xf32> to vector<2x32xf32>
    %cst_56 = arith.constant dense<0.000000e+00> : vector<2x32xf32>
    %230 = tpu.matmul %227, %1, %cst_56 {dimension_numbers = #tpu.dot_dimension_numbers<[1], [0], [0], [1], [0, 0, 1, 1], [], []>} : vector<2x8xf32>, vector<8x32xf32>, vector<2x32xf32> -> vector<2x32xf32>
    %231 = arith.addf %229, %230 : vector<2x32xf32>
    %232 = arith.negf %231 : vector<2x32xf32>
    %233 = math.exp %232 : vector<2x32xf32>
    %cst_57 = arith.constant 1.000000e+00 : f32
    %234 = vector.broadcast %cst_57 : f32 to vector<2x32xf32>
    %235 = arith.addf %234, %233 : vector<2x32xf32>
    %236 = arith.divf %234, %235 : vector<2x32xf32>
    %237 = math.tanh %231 : vector<2x32xf32>
    %238 = vector.extract_strided_slice %236 {offsets = [0, 0], sizes = [2, 8], strides = [1, 1]} : vector<2x32xf32> to vector<2x8xf32>
    %239 = vector.extract_strided_slice %236 {offsets = [0, 8], sizes = [2, 8], strides = [1, 1]} : vector<2x32xf32> to vector<2x8xf32>
    %240 = vector.extract_strided_slice %237 {offsets = [0, 16], sizes = [2, 8], strides = [1, 1]} : vector<2x32xf32> to vector<2x8xf32>
    %241 = vector.extract_strided_slice %236 {offsets = [0, 24], sizes = [2, 8], strides = [1, 1]} : vector<2x32xf32> to vector<2x8xf32>
    %242 = arith.mulf %239, %225 : vector<2x8xf32>
    %243 = arith.mulf %238, %240 : vector<2x8xf32>
    %244 = arith.addf %242, %243 : vector<2x8xf32>
    %245 = math.tanh %244 : vector<2x8xf32>
    %246 = arith.mulf %241, %245 : vector<2x8xf32>
    %c6_58 = arith.constant 6 : index
    %c0_59 = arith.constant 0 : index
    %247 = vector.load %arg3[%c6_58, %c0_59] : memref<16x8xf32, #tpu.memory_space<vmem>>, vector<2x8xf32>
    tpu.vector_store %arg3[%c6_58, %c0_59], %246 {strides = array<i32>} : memref<16x8xf32, #tpu.memory_space<vmem>>, vector<2x8xf32>,
    %248 = vector.extract_strided_slice %171 {offsets = [8, 0], sizes = [2, 32], strides = [1, 1]} : vector<16x32xf32> to vector<2x32xf32>
    %cst_60 = arith.constant dense<0.000000e+00> : vector<2x32xf32>
    %249 = tpu.matmul %246, %1, %cst_60 {dimension_numbers = #tpu.dot_dimension_numbers<[1], [0], [0], [1], [0, 0, 1, 1], [], []>} : vector<2x8xf32>, vector<8x32xf32>, vector<2x32xf32> -> vector<2x32xf32>
    %250 = arith.addf %248, %249 : vector<2x32xf32>
    %251 = arith.negf %250 : vector<2x32xf32>
    %252 = math.exp %251 : vector<2x32xf32>
    %cst_61 = arith.constant 1.000000e+00 : f32
    %253 = vector.broadcast %cst_61 : f32 to vector<2x32xf32>
    %254 = arith.addf %253, %252 : vector<2x32xf32>
    %255 = arith.divf %253, %254 : vector<2x32xf32>
    %256 = math.tanh %250 : vector<2x32xf32>
    %257 = vector.extract_strided_slice %255 {offsets = [0, 0], sizes = [2, 8], strides = [1, 1]} : vector<2x32xf32> to vector<2x8xf32>
    %258 = vector.extract_strided_slice %255 {offsets = [0, 8], sizes = [2, 8], strides = [1, 1]} : vector<2x32xf32> to vector<2x8xf32>
    %259 = vector.extract_strided_slice %256 {offsets = [0, 16], sizes = [2, 8], strides = [1, 1]} : vector<2x32xf32> to vector<2x8xf32>
    %260 = vector.extract_strided_slice %255 {offsets = [0, 24], sizes = [2, 8], strides = [1, 1]} : vector<2x32xf32> to vector<2x8xf32>
    %261 = arith.mulf %258, %244 : vector<2x8xf32>
    %262 = arith.mulf %257, %259 : vector<2x8xf32>
    %263 = arith.addf %261, %262 : vector<2x8xf32>
    %264 = math.tanh %263 : vector<2x8xf32>
    %265 = arith.mulf %260, %264 : vector<2x8xf32>
    %c8_62 = arith.constant 8 : index
    %c0_63 = arith.constant 0 : index
    %266 = vector.load %arg3[%c8_62, %c0_63] : memref<16x8xf32, #tpu.memory_space<vmem>>, vector<2x8xf32>
    tpu.vector_store %arg3[%c8_62, %c0_63], %265 {strides = array<i32>} : memref<16x8xf32, #tpu.memory_space<vmem>>, vector<2x8xf32>,
    %267 = vector.extract_strided_slice %171 {offsets = [10, 0], sizes = [2, 32], strides = [1, 1]} : vector<16x32xf32> to vector<2x32xf32>
    %cst_64 = arith.constant dense<0.000000e+00> : vector<2x32xf32>
    %268 = tpu.matmul %265, %1, %cst_64 {dimension_numbers = #tpu.dot_dimension_numbers<[1], [0], [0], [1], [0, 0, 1, 1], [], []>} : vector<2x8xf32>, vector<8x32xf32>, vector<2x32xf32> -> vector<2x32xf32>
    %269 = arith.addf %267, %268 : vector<2x32xf32>
    %270 = arith.negf %269 : vector<2x32xf32>
    %271 = math.exp %270 : vector<2x32xf32>
    %cst_65 = arith.constant 1.000000e+00 : f32
    %272 = vector.broadcast %cst_65 : f32 to vector<2x32xf32>
    %273 = arith.addf %272, %271 : vector<2x32xf32>
    %274 = arith.divf %272, %273 : vector<2x32xf32>
    %275 = math.tanh %269 : vector<2x32xf32>
    %276 = vector.extract_strided_slice %274 {offsets = [0, 0], sizes = [2, 8], strides = [1, 1]} : vector<2x32xf32> to vector<2x8xf32>
    %277 = vector.extract_strided_slice %274 {offsets = [0, 8], sizes = [2, 8], strides = [1, 1]} : vector<2x32xf32> to vector<2x8xf32>
    %278 = vector.extract_strided_slice %275 {offsets = [0, 16], sizes = [2, 8], strides = [1, 1]} : vector<2x32xf32> to vector<2x8xf32>
    %279 = vector.extract_strided_slice %274 {offsets = [0, 24], sizes = [2, 8], strides = [1, 1]} : vector<2x32xf32> to vector<2x8xf32>
    %280 = arith.mulf %277, %263 : vector<2x8xf32>
    %281 = arith.mulf %276, %278 : vector<2x8xf32>
    %282 = arith.addf %280, %281 : vector<2x8xf32>
    %283 = math.tanh %282 : vector<2x8xf32>
    %284 = arith.mulf %279, %283 : vector<2x8xf32>
    %c10_66 = arith.constant 10 : index
    %c0_67 = arith.constant 0 : index
    %285 = vector.load %arg3[%c10_66, %c0_67] : memref<16x8xf32, #tpu.memory_space<vmem>>, vector<2x8xf32>
    tpu.vector_store %arg3[%c10_66, %c0_67], %284 {strides = array<i32>} : memref<16x8xf32, #tpu.memory_space<vmem>>, vector<2x8xf32>,
    %286 = vector.extract_strided_slice %171 {offsets = [12, 0], sizes = [2, 32], strides = [1, 1]} : vector<16x32xf32> to vector<2x32xf32>
    %cst_68 = arith.constant dense<0.000000e+00> : vector<2x32xf32>
    %287 = tpu.matmul %284, %1, %cst_68 {dimension_numbers = #tpu.dot_dimension_numbers<[1], [0], [0], [1], [0, 0, 1, 1], [], []>} : vector<2x8xf32>, vector<8x32xf32>, vector<2x32xf32> -> vector<2x32xf32>
    %288 = arith.addf %286, %287 : vector<2x32xf32>
    %289 = arith.negf %288 : vector<2x32xf32>
    %290 = math.exp %289 : vector<2x32xf32>
    %cst_69 = arith.constant 1.000000e+00 : f32
    %291 = vector.broadcast %cst_69 : f32 to vector<2x32xf32>
    %292 = arith.addf %291, %290 : vector<2x32xf32>
    %293 = arith.divf %291, %292 : vector<2x32xf32>
    %294 = math.tanh %288 : vector<2x32xf32>
    %295 = vector.extract_strided_slice %293 {offsets = [0, 0], sizes = [2, 8], strides = [1, 1]} : vector<2x32xf32> to vector<2x8xf32>
    %296 = vector.extract_strided_slice %293 {offsets = [0, 8], sizes = [2, 8], strides = [1, 1]} : vector<2x32xf32> to vector<2x8xf32>
    %297 = vector.extract_strided_slice %294 {offsets = [0, 16], sizes = [2, 8], strides = [1, 1]} : vector<2x32xf32> to vector<2x8xf32>
    %298 = vector.extract_strided_slice %293 {offsets = [0, 24], sizes = [2, 8], strides = [1, 1]} : vector<2x32xf32> to vector<2x8xf32>
    %299 = arith.mulf %296, %282 : vector<2x8xf32>
    %300 = arith.mulf %295, %297 : vector<2x8xf32>
    %301 = arith.addf %299, %300 : vector<2x8xf32>
    %302 = math.tanh %301 : vector<2x8xf32>
    %303 = arith.mulf %298, %302 : vector<2x8xf32>
    %c12_70 = arith.constant 12 : index
    %c0_71 = arith.constant 0 : index
    %304 = vector.load %arg3[%c12_70, %c0_71] : memref<16x8xf32, #tpu.memory_space<vmem>>, vector<2x8xf32>
    tpu.vector_store %arg3[%c12_70, %c0_71], %303 {strides = array<i32>} : memref<16x8xf32, #tpu.memory_space<vmem>>, vector<2x8xf32>,
    %305 = vector.extract_strided_slice %171 {offsets = [14, 0], sizes = [2, 32], strides = [1, 1]} : vector<16x32xf32> to vector<2x32xf32>
    %cst_72 = arith.constant dense<0.000000e+00> : vector<2x32xf32>
    %306 = tpu.matmul %303, %1, %cst_72 {dimension_numbers = #tpu.dot_dimension_numbers<[1], [0], [0], [1], [0, 0, 1, 1], [], []>} : vector<2x8xf32>, vector<8x32xf32>, vector<2x32xf32> -> vector<2x32xf32>
    %307 = arith.addf %305, %306 : vector<2x32xf32>
    %308 = arith.negf %307 : vector<2x32xf32>
    %309 = math.exp %308 : vector<2x32xf32>
    %cst_73 = arith.constant 1.000000e+00 : f32
    %310 = vector.broadcast %cst_73 : f32 to vector<2x32xf32>
    %311 = arith.addf %310, %309 : vector<2x32xf32>
    %312 = arith.divf %310, %311 : vector<2x32xf32>
    %313 = math.tanh %307 : vector<2x32xf32>
    %314 = vector.extract_strided_slice %312 {offsets = [0, 0], sizes = [2, 8], strides = [1, 1]} : vector<2x32xf32> to vector<2x8xf32>
    %315 = vector.extract_strided_slice %312 {offsets = [0, 8], sizes = [2, 8], strides = [1, 1]} : vector<2x32xf32> to vector<2x8xf32>
    %316 = vector.extract_strided_slice %313 {offsets = [0, 16], sizes = [2, 8], strides = [1, 1]} : vector<2x32xf32> to vector<2x8xf32>
    %317 = vector.extract_strided_slice %312 {offsets = [0, 24], sizes = [2, 8], strides = [1, 1]} : vector<2x32xf32> to vector<2x8xf32>
    %318 = arith.mulf %315, %301 : vector<2x8xf32>
    %319 = arith.mulf %314, %316 : vector<2x8xf32>
    %320 = arith.addf %318, %319 : vector<2x8xf32>
    %321 = math.tanh %320 : vector<2x8xf32>
    %322 = arith.mulf %317, %321 : vector<2x8xf32>
    %c14_74 = arith.constant 14 : index
    %c0_75 = arith.constant 0 : index
    %323 = vector.load %arg3[%c14_74, %c0_75] : memref<16x8xf32, #tpu.memory_space<vmem>>, vector<2x8xf32>
    tpu.vector_store %arg3[%c14_74, %c0_75], %322 {strides = array<i32>} : memref<16x8xf32, #tpu.memory_space<vmem>>, vector<2x8xf32>,
    %c0_76 = arith.constant 0 : index
    %c0_77 = arith.constant 0 : index
    %324 = vector.load %arg3[%c0_76, %c0_77] : memref<16x8xf32, #tpu.memory_space<vmem>>, vector<16x8xf32>
    %c32 = arith.constant 32 : index
    %c0_78 = arith.constant 0 : index
    %325 = vector.load %arg1[%c32, %c0_78] : memref<80x32xf32, #tpu.memory_space<vmem>>, vector<8x32xf32>
    %c74 = arith.constant 74 : index
    %c0_79 = arith.constant 0 : index
    %326 = vector.load %arg1[%c74, %c0_79] : memref<80x32xf32, #tpu.memory_space<vmem>>, vector<1x32xf32>
    %cst_80 = arith.constant dense<0.000000e+00> : vector<16x32xf32>
    %327 = tpu.matmul %324, %325, %cst_80 {dimension_numbers = #tpu.dot_dimension_numbers<[1], [0], [0], [1], [0, 0, 1, 1], [], []>} : vector<16x8xf32>, vector<8x32xf32>, vector<16x32xf32> -> vector<16x32xf32>
    %328 = vector.broadcast %326 : vector<1x32xf32> to vector<16x32xf32>
    %329 = arith.addf %327, %328 : vector<16x32xf32>
    %330 = vector.extract_strided_slice %329 {offsets = [0, 0], sizes = [2, 32], strides = [1, 1]} : vector<16x32xf32> to vector<2x32xf32>
    %cst_81 = arith.constant dense<0.000000e+00> : vector<2x32xf32>
    %331 = tpu.matmul %164, %2, %cst_81 {dimension_numbers = #tpu.dot_dimension_numbers<[1], [0], [0], [1], [0, 0, 1, 1], [], []>} : vector<2x8xf32>, vector<8x32xf32>, vector<2x32xf32> -> vector<2x32xf32>
    %332 = arith.addf %330, %331 : vector<2x32xf32>
    %333 = arith.negf %332 : vector<2x32xf32>
    %334 = math.exp %333 : vector<2x32xf32>
    %cst_82 = arith.constant 1.000000e+00 : f32
    %335 = vector.broadcast %cst_82 : f32 to vector<2x32xf32>
    %336 = arith.addf %335, %334 : vector<2x32xf32>
    %337 = arith.divf %335, %336 : vector<2x32xf32>
    %338 = math.tanh %332 : vector<2x32xf32>
    %339 = vector.extract_strided_slice %337 {offsets = [0, 0], sizes = [2, 8], strides = [1, 1]} : vector<2x32xf32> to vector<2x8xf32>
    %340 = vector.extract_strided_slice %337 {offsets = [0, 8], sizes = [2, 8], strides = [1, 1]} : vector<2x32xf32> to vector<2x8xf32>
    %341 = vector.extract_strided_slice %338 {offsets = [0, 16], sizes = [2, 8], strides = [1, 1]} : vector<2x32xf32> to vector<2x8xf32>
    %342 = vector.extract_strided_slice %337 {offsets = [0, 24], sizes = [2, 8], strides = [1, 1]} : vector<2x32xf32> to vector<2x8xf32>
    %343 = arith.mulf %340, %162 : vector<2x8xf32>
    %344 = arith.mulf %339, %341 : vector<2x8xf32>
    %345 = arith.addf %343, %344 : vector<2x8xf32>
    %346 = math.tanh %345 : vector<2x8xf32>
    %347 = arith.mulf %342, %346 : vector<2x8xf32>
    %c0_83 = arith.constant 0 : index
    %c0_84 = arith.constant 0 : index
    %348 = vector.load %arg3[%c0_83, %c0_84] : memref<16x8xf32, #tpu.memory_space<vmem>>, vector<2x8xf32>
    tpu.vector_store %arg3[%c0_83, %c0_84], %347 {strides = array<i32>} : memref<16x8xf32, #tpu.memory_space<vmem>>, vector<2x8xf32>,
    %349 = vector.extract_strided_slice %329 {offsets = [2, 0], sizes = [2, 32], strides = [1, 1]} : vector<16x32xf32> to vector<2x32xf32>
    %cst_85 = arith.constant dense<0.000000e+00> : vector<2x32xf32>
    %350 = tpu.matmul %347, %2, %cst_85 {dimension_numbers = #tpu.dot_dimension_numbers<[1], [0], [0], [1], [0, 0, 1, 1], [], []>} : vector<2x8xf32>, vector<8x32xf32>, vector<2x32xf32> -> vector<2x32xf32>
    %351 = arith.addf %349, %350 : vector<2x32xf32>
    %352 = arith.negf %351 : vector<2x32xf32>
    %353 = math.exp %352 : vector<2x32xf32>
    %cst_86 = arith.constant 1.000000e+00 : f32
    %354 = vector.broadcast %cst_86 : f32 to vector<2x32xf32>
    %355 = arith.addf %354, %353 : vector<2x32xf32>
    %356 = arith.divf %354, %355 : vector<2x32xf32>
    %357 = math.tanh %351 : vector<2x32xf32>
    %358 = vector.extract_strided_slice %356 {offsets = [0, 0], sizes = [2, 8], strides = [1, 1]} : vector<2x32xf32> to vector<2x8xf32>
    %359 = vector.extract_strided_slice %356 {offsets = [0, 8], sizes = [2, 8], strides = [1, 1]} : vector<2x32xf32> to vector<2x8xf32>
    %360 = vector.extract_strided_slice %357 {offsets = [0, 16], sizes = [2, 8], strides = [1, 1]} : vector<2x32xf32> to vector<2x8xf32>
    %361 = vector.extract_strided_slice %356 {offsets = [0, 24], sizes = [2, 8], strides = [1, 1]} : vector<2x32xf32> to vector<2x8xf32>
    %362 = arith.mulf %359, %345 : vector<2x8xf32>
    %363 = arith.mulf %358, %360 : vector<2x8xf32>
    %364 = arith.addf %362, %363 : vector<2x8xf32>
    %365 = math.tanh %364 : vector<2x8xf32>
    %366 = arith.mulf %361, %365 : vector<2x8xf32>
    %c2_87 = arith.constant 2 : index
    %c0_88 = arith.constant 0 : index
    %367 = vector.load %arg3[%c2_87, %c0_88] : memref<16x8xf32, #tpu.memory_space<vmem>>, vector<2x8xf32>
    tpu.vector_store %arg3[%c2_87, %c0_88], %366 {strides = array<i32>} : memref<16x8xf32, #tpu.memory_space<vmem>>, vector<2x8xf32>,
    %368 = vector.extract_strided_slice %329 {offsets = [4, 0], sizes = [2, 32], strides = [1, 1]} : vector<16x32xf32> to vector<2x32xf32>
    %cst_89 = arith.constant dense<0.000000e+00> : vector<2x32xf32>
    %369 = tpu.matmul %366, %2, %cst_89 {dimension_numbers = #tpu.dot_dimension_numbers<[1], [0], [0], [1], [0, 0, 1, 1], [], []>} : vector<2x8xf32>, vector<8x32xf32>, vector<2x32xf32> -> vector<2x32xf32>
    %370 = arith.addf %368, %369 : vector<2x32xf32>
    %371 = arith.negf %370 : vector<2x32xf32>
    %372 = math.exp %371 : vector<2x32xf32>
    %cst_90 = arith.constant 1.000000e+00 : f32
    %373 = vector.broadcast %cst_90 : f32 to vector<2x32xf32>
    %374 = arith.addf %373, %372 : vector<2x32xf32>
    %375 = arith.divf %373, %374 : vector<2x32xf32>
    %376 = math.tanh %370 : vector<2x32xf32>
    %377 = vector.extract_strided_slice %375 {offsets = [0, 0], sizes = [2, 8], strides = [1, 1]} : vector<2x32xf32> to vector<2x8xf32>
    %378 = vector.extract_strided_slice %375 {offsets = [0, 8], sizes = [2, 8], strides = [1, 1]} : vector<2x32xf32> to vector<2x8xf32>
    %379 = vector.extract_strided_slice %376 {offsets = [0, 16], sizes = [2, 8], strides = [1, 1]} : vector<2x32xf32> to vector<2x8xf32>
    %380 = vector.extract_strided_slice %375 {offsets = [0, 24], sizes = [2, 8], strides = [1, 1]} : vector<2x32xf32> to vector<2x8xf32>
    %381 = arith.mulf %378, %364 : vector<2x8xf32>
    %382 = arith.mulf %377, %379 : vector<2x8xf32>
    %383 = arith.addf %381, %382 : vector<2x8xf32>
    %384 = math.tanh %383 : vector<2x8xf32>
    %385 = arith.mulf %380, %384 : vector<2x8xf32>
    %c4_91 = arith.constant 4 : index
    %c0_92 = arith.constant 0 : index
    %386 = vector.load %arg3[%c4_91, %c0_92] : memref<16x8xf32, #tpu.memory_space<vmem>>, vector<2x8xf32>
    tpu.vector_store %arg3[%c4_91, %c0_92], %385 {strides = array<i32>} : memref<16x8xf32, #tpu.memory_space<vmem>>, vector<2x8xf32>,
    %387 = vector.extract_strided_slice %329 {offsets = [6, 0], sizes = [2, 32], strides = [1, 1]} : vector<16x32xf32> to vector<2x32xf32>
    %cst_93 = arith.constant dense<0.000000e+00> : vector<2x32xf32>
    %388 = tpu.matmul %385, %2, %cst_93 {dimension_numbers = #tpu.dot_dimension_numbers<[1], [0], [0], [1], [0, 0, 1, 1], [], []>} : vector<2x8xf32>, vector<8x32xf32>, vector<2x32xf32> -> vector<2x32xf32>
    %389 = arith.addf %387, %388 : vector<2x32xf32>
    %390 = arith.negf %389 : vector<2x32xf32>
    %391 = math.exp %390 : vector<2x32xf32>
    %cst_94 = arith.constant 1.000000e+00 : f32
    %392 = vector.broadcast %cst_94 : f32 to vector<2x32xf32>
    %393 = arith.addf %392, %391 : vector<2x32xf32>
    %394 = arith.divf %392, %393 : vector<2x32xf32>
    %395 = math.tanh %389 : vector<2x32xf32>
    %396 = vector.extract_strided_slice %394 {offsets = [0, 0], sizes = [2, 8], strides = [1, 1]} : vector<2x32xf32> to vector<2x8xf32>
    %397 = vector.extract_strided_slice %394 {offsets = [0, 8], sizes = [2, 8], strides = [1, 1]} : vector<2x32xf32> to vector<2x8xf32>
    %398 = vector.extract_strided_slice %395 {offsets = [0, 16], sizes = [2, 8], strides = [1, 1]} : vector<2x32xf32> to vector<2x8xf32>
    %399 = vector.extract_strided_slice %394 {offsets = [0, 24], sizes = [2, 8], strides = [1, 1]} : vector<2x32xf32> to vector<2x8xf32>
    %400 = arith.mulf %397, %383 : vector<2x8xf32>
    %401 = arith.mulf %396, %398 : vector<2x8xf32>
    %402 = arith.addf %400, %401 : vector<2x8xf32>
    %403 = math.tanh %402 : vector<2x8xf32>
    %404 = arith.mulf %399, %403 : vector<2x8xf32>
    %c6_95 = arith.constant 6 : index
    %c0_96 = arith.constant 0 : index
    %405 = vector.load %arg3[%c6_95, %c0_96] : memref<16x8xf32, #tpu.memory_space<vmem>>, vector<2x8xf32>
    tpu.vector_store %arg3[%c6_95, %c0_96], %404 {strides = array<i32>} : memref<16x8xf32, #tpu.memory_space<vmem>>, vector<2x8xf32>,
    %406 = vector.extract_strided_slice %329 {offsets = [8, 0], sizes = [2, 32], strides = [1, 1]} : vector<16x32xf32> to vector<2x32xf32>
    %cst_97 = arith.constant dense<0.000000e+00> : vector<2x32xf32>
    %407 = tpu.matmul %404, %2, %cst_97 {dimension_numbers = #tpu.dot_dimension_numbers<[1], [0], [0], [1], [0, 0, 1, 1], [], []>} : vector<2x8xf32>, vector<8x32xf32>, vector<2x32xf32> -> vector<2x32xf32>
    %408 = arith.addf %406, %407 : vector<2x32xf32>
    %409 = arith.negf %408 : vector<2x32xf32>
    %410 = math.exp %409 : vector<2x32xf32>
    %cst_98 = arith.constant 1.000000e+00 : f32
    %411 = vector.broadcast %cst_98 : f32 to vector<2x32xf32>
    %412 = arith.addf %411, %410 : vector<2x32xf32>
    %413 = arith.divf %411, %412 : vector<2x32xf32>
    %414 = math.tanh %408 : vector<2x32xf32>
    %415 = vector.extract_strided_slice %413 {offsets = [0, 0], sizes = [2, 8], strides = [1, 1]} : vector<2x32xf32> to vector<2x8xf32>
    %416 = vector.extract_strided_slice %413 {offsets = [0, 8], sizes = [2, 8], strides = [1, 1]} : vector<2x32xf32> to vector<2x8xf32>
    %417 = vector.extract_strided_slice %414 {offsets = [0, 16], sizes = [2, 8], strides = [1, 1]} : vector<2x32xf32> to vector<2x8xf32>
    %418 = vector.extract_strided_slice %413 {offsets = [0, 24], sizes = [2, 8], strides = [1, 1]} : vector<2x32xf32> to vector<2x8xf32>
    %419 = arith.mulf %416, %402 : vector<2x8xf32>
    %420 = arith.mulf %415, %417 : vector<2x8xf32>
    %421 = arith.addf %419, %420 : vector<2x8xf32>
    %422 = math.tanh %421 : vector<2x8xf32>
    %423 = arith.mulf %418, %422 : vector<2x8xf32>
    %c8_99 = arith.constant 8 : index
    %c0_100 = arith.constant 0 : index
    %424 = vector.load %arg3[%c8_99, %c0_100] : memref<16x8xf32, #tpu.memory_space<vmem>>, vector<2x8xf32>
    tpu.vector_store %arg3[%c8_99, %c0_100], %423 {strides = array<i32>} : memref<16x8xf32, #tpu.memory_space<vmem>>, vector<2x8xf32>,
    %425 = vector.extract_strided_slice %329 {offsets = [10, 0], sizes = [2, 32], strides = [1, 1]} : vector<16x32xf32> to vector<2x32xf32>
    %cst_101 = arith.constant dense<0.000000e+00> : vector<2x32xf32>
    %426 = tpu.matmul %423, %2, %cst_101 {dimension_numbers = #tpu.dot_dimension_numbers<[1], [0], [0], [1], [0, 0, 1, 1], [], []>} : vector<2x8xf32>, vector<8x32xf32>, vector<2x32xf32> -> vector<2x32xf32>
    %427 = arith.addf %425, %426 : vector<2x32xf32>
    %428 = arith.negf %427 : vector<2x32xf32>
    %429 = math.exp %428 : vector<2x32xf32>
    %cst_102 = arith.constant 1.000000e+00 : f32
    %430 = vector.broadcast %cst_102 : f32 to vector<2x32xf32>
    %431 = arith.addf %430, %429 : vector<2x32xf32>
    %432 = arith.divf %430, %431 : vector<2x32xf32>
    %433 = math.tanh %427 : vector<2x32xf32>
    %434 = vector.extract_strided_slice %432 {offsets = [0, 0], sizes = [2, 8], strides = [1, 1]} : vector<2x32xf32> to vector<2x8xf32>
    %435 = vector.extract_strided_slice %432 {offsets = [0, 8], sizes = [2, 8], strides = [1, 1]} : vector<2x32xf32> to vector<2x8xf32>
    %436 = vector.extract_strided_slice %433 {offsets = [0, 16], sizes = [2, 8], strides = [1, 1]} : vector<2x32xf32> to vector<2x8xf32>
    %437 = vector.extract_strided_slice %432 {offsets = [0, 24], sizes = [2, 8], strides = [1, 1]} : vector<2x32xf32> to vector<2x8xf32>
    %438 = arith.mulf %435, %421 : vector<2x8xf32>
    %439 = arith.mulf %434, %436 : vector<2x8xf32>
    %440 = arith.addf %438, %439 : vector<2x8xf32>
    %441 = math.tanh %440 : vector<2x8xf32>
    %442 = arith.mulf %437, %441 : vector<2x8xf32>
    %c10_103 = arith.constant 10 : index
    %c0_104 = arith.constant 0 : index
    %443 = vector.load %arg3[%c10_103, %c0_104] : memref<16x8xf32, #tpu.memory_space<vmem>>, vector<2x8xf32>
    tpu.vector_store %arg3[%c10_103, %c0_104], %442 {strides = array<i32>} : memref<16x8xf32, #tpu.memory_space<vmem>>, vector<2x8xf32>,
    %444 = vector.extract_strided_slice %329 {offsets = [12, 0], sizes = [2, 32], strides = [1, 1]} : vector<16x32xf32> to vector<2x32xf32>
    %cst_105 = arith.constant dense<0.000000e+00> : vector<2x32xf32>
    %445 = tpu.matmul %442, %2, %cst_105 {dimension_numbers = #tpu.dot_dimension_numbers<[1], [0], [0], [1], [0, 0, 1, 1], [], []>} : vector<2x8xf32>, vector<8x32xf32>, vector<2x32xf32> -> vector<2x32xf32>
    %446 = arith.addf %444, %445 : vector<2x32xf32>
    %447 = arith.negf %446 : vector<2x32xf32>
    %448 = math.exp %447 : vector<2x32xf32>
    %cst_106 = arith.constant 1.000000e+00 : f32
    %449 = vector.broadcast %cst_106 : f32 to vector<2x32xf32>
    %450 = arith.addf %449, %448 : vector<2x32xf32>
    %451 = arith.divf %449, %450 : vector<2x32xf32>
    %452 = math.tanh %446 : vector<2x32xf32>
    %453 = vector.extract_strided_slice %451 {offsets = [0, 0], sizes = [2, 8], strides = [1, 1]} : vector<2x32xf32> to vector<2x8xf32>
    %454 = vector.extract_strided_slice %451 {offsets = [0, 8], sizes = [2, 8], strides = [1, 1]} : vector<2x32xf32> to vector<2x8xf32>
    %455 = vector.extract_strided_slice %452 {offsets = [0, 16], sizes = [2, 8], strides = [1, 1]} : vector<2x32xf32> to vector<2x8xf32>
    %456 = vector.extract_strided_slice %451 {offsets = [0, 24], sizes = [2, 8], strides = [1, 1]} : vector<2x32xf32> to vector<2x8xf32>
    %457 = arith.mulf %454, %440 : vector<2x8xf32>
    %458 = arith.mulf %453, %455 : vector<2x8xf32>
    %459 = arith.addf %457, %458 : vector<2x8xf32>
    %460 = math.tanh %459 : vector<2x8xf32>
    %461 = arith.mulf %456, %460 : vector<2x8xf32>
    %c12_107 = arith.constant 12 : index
    %c0_108 = arith.constant 0 : index
    %462 = vector.load %arg3[%c12_107, %c0_108] : memref<16x8xf32, #tpu.memory_space<vmem>>, vector<2x8xf32>
    tpu.vector_store %arg3[%c12_107, %c0_108], %461 {strides = array<i32>} : memref<16x8xf32, #tpu.memory_space<vmem>>, vector<2x8xf32>,
    %463 = vector.extract_strided_slice %329 {offsets = [14, 0], sizes = [2, 32], strides = [1, 1]} : vector<16x32xf32> to vector<2x32xf32>
    %cst_109 = arith.constant dense<0.000000e+00> : vector<2x32xf32>
    %464 = tpu.matmul %461, %2, %cst_109 {dimension_numbers = #tpu.dot_dimension_numbers<[1], [0], [0], [1], [0, 0, 1, 1], [], []>} : vector<2x8xf32>, vector<8x32xf32>, vector<2x32xf32> -> vector<2x32xf32>
    %465 = arith.addf %463, %464 : vector<2x32xf32>
    %466 = arith.negf %465 : vector<2x32xf32>
    %467 = math.exp %466 : vector<2x32xf32>
    %cst_110 = arith.constant 1.000000e+00 : f32
    %468 = vector.broadcast %cst_110 : f32 to vector<2x32xf32>
    %469 = arith.addf %468, %467 : vector<2x32xf32>
    %470 = arith.divf %468, %469 : vector<2x32xf32>
    %471 = math.tanh %465 : vector<2x32xf32>
    %472 = vector.extract_strided_slice %470 {offsets = [0, 0], sizes = [2, 8], strides = [1, 1]} : vector<2x32xf32> to vector<2x8xf32>
    %473 = vector.extract_strided_slice %470 {offsets = [0, 8], sizes = [2, 8], strides = [1, 1]} : vector<2x32xf32> to vector<2x8xf32>
    %474 = vector.extract_strided_slice %471 {offsets = [0, 16], sizes = [2, 8], strides = [1, 1]} : vector<2x32xf32> to vector<2x8xf32>
    %475 = vector.extract_strided_slice %470 {offsets = [0, 24], sizes = [2, 8], strides = [1, 1]} : vector<2x32xf32> to vector<2x8xf32>
    %476 = arith.mulf %473, %459 : vector<2x8xf32>
    %477 = arith.mulf %472, %474 : vector<2x8xf32>
    %478 = arith.addf %476, %477 : vector<2x8xf32>
    %479 = math.tanh %478 : vector<2x8xf32>
    %480 = arith.mulf %475, %479 : vector<2x8xf32>
    %c14_111 = arith.constant 14 : index
    %c0_112 = arith.constant 0 : index
    %481 = vector.load %arg3[%c14_111, %c0_112] : memref<16x8xf32, #tpu.memory_space<vmem>>, vector<2x8xf32>
    tpu.vector_store %arg3[%c14_111, %c0_112], %480 {strides = array<i32>} : memref<16x8xf32, #tpu.memory_space<vmem>>, vector<2x8xf32>,
    %c0_113 = arith.constant 0 : index
    %c0_114 = arith.constant 0 : index
    %482 = vector.load %arg3[%c0_113, %c0_114] : memref<16x8xf32, #tpu.memory_space<vmem>>, vector<16x8xf32>
    %c48 = arith.constant 48 : index
    %c0_115 = arith.constant 0 : index
    %483 = vector.load %arg1[%c48, %c0_115] : memref<80x32xf32, #tpu.memory_space<vmem>>, vector<8x32xf32>
    %c75 = arith.constant 75 : index
    %c0_116 = arith.constant 0 : index
    %484 = vector.load %arg1[%c75, %c0_116] : memref<80x32xf32, #tpu.memory_space<vmem>>, vector<1x32xf32>
    %cst_117 = arith.constant dense<0.000000e+00> : vector<16x32xf32>
    %485 = tpu.matmul %482, %483, %cst_117 {dimension_numbers = #tpu.dot_dimension_numbers<[1], [0], [0], [1], [0, 0, 1, 1], [], []>} : vector<16x8xf32>, vector<8x32xf32>, vector<16x32xf32> -> vector<16x32xf32>
    %486 = vector.broadcast %484 : vector<1x32xf32> to vector<16x32xf32>
    %487 = arith.addf %485, %486 : vector<16x32xf32>
    %488 = vector.extract_strided_slice %487 {offsets = [0, 0], sizes = [2, 32], strides = [1, 1]} : vector<16x32xf32> to vector<2x32xf32>
    %cst_118 = arith.constant dense<0.000000e+00> : vector<2x32xf32>
    %489 = tpu.matmul %322, %3, %cst_118 {dimension_numbers = #tpu.dot_dimension_numbers<[1], [0], [0], [1], [0, 0, 1, 1], [], []>} : vector<2x8xf32>, vector<8x32xf32>, vector<2x32xf32> -> vector<2x32xf32>
    %490 = arith.addf %488, %489 : vector<2x32xf32>
    %491 = arith.negf %490 : vector<2x32xf32>
    %492 = math.exp %491 : vector<2x32xf32>
    %cst_119 = arith.constant 1.000000e+00 : f32
    %493 = vector.broadcast %cst_119 : f32 to vector<2x32xf32>
    %494 = arith.addf %493, %492 : vector<2x32xf32>
    %495 = arith.divf %493, %494 : vector<2x32xf32>
    %496 = math.tanh %490 : vector<2x32xf32>
    %497 = vector.extract_strided_slice %495 {offsets = [0, 0], sizes = [2, 8], strides = [1, 1]} : vector<2x32xf32> to vector<2x8xf32>
    %498 = vector.extract_strided_slice %495 {offsets = [0, 8], sizes = [2, 8], strides = [1, 1]} : vector<2x32xf32> to vector<2x8xf32>
    %499 = vector.extract_strided_slice %496 {offsets = [0, 16], sizes = [2, 8], strides = [1, 1]} : vector<2x32xf32> to vector<2x8xf32>
    %500 = vector.extract_strided_slice %495 {offsets = [0, 24], sizes = [2, 8], strides = [1, 1]} : vector<2x32xf32> to vector<2x8xf32>
    %501 = arith.mulf %498, %320 : vector<2x8xf32>
    %502 = arith.mulf %497, %499 : vector<2x8xf32>
    %503 = arith.addf %501, %502 : vector<2x8xf32>
    %504 = math.tanh %503 : vector<2x8xf32>
    %505 = arith.mulf %500, %504 : vector<2x8xf32>
    %c0_120 = arith.constant 0 : index
    %c0_121 = arith.constant 0 : index
    %506 = vector.load %arg3[%c0_120, %c0_121] : memref<16x8xf32, #tpu.memory_space<vmem>>, vector<2x8xf32>
    tpu.vector_store %arg3[%c0_120, %c0_121], %505 {strides = array<i32>} : memref<16x8xf32, #tpu.memory_space<vmem>>, vector<2x8xf32>,
    %507 = vector.extract_strided_slice %487 {offsets = [2, 0], sizes = [2, 32], strides = [1, 1]} : vector<16x32xf32> to vector<2x32xf32>
    %cst_122 = arith.constant dense<0.000000e+00> : vector<2x32xf32>
    %508 = tpu.matmul %505, %3, %cst_122 {dimension_numbers = #tpu.dot_dimension_numbers<[1], [0], [0], [1], [0, 0, 1, 1], [], []>} : vector<2x8xf32>, vector<8x32xf32>, vector<2x32xf32> -> vector<2x32xf32>
    %509 = arith.addf %507, %508 : vector<2x32xf32>
    %510 = arith.negf %509 : vector<2x32xf32>
    %511 = math.exp %510 : vector<2x32xf32>
    %cst_123 = arith.constant 1.000000e+00 : f32
    %512 = vector.broadcast %cst_123 : f32 to vector<2x32xf32>
    %513 = arith.addf %512, %511 : vector<2x32xf32>
    %514 = arith.divf %512, %513 : vector<2x32xf32>
    %515 = math.tanh %509 : vector<2x32xf32>
    %516 = vector.extract_strided_slice %514 {offsets = [0, 0], sizes = [2, 8], strides = [1, 1]} : vector<2x32xf32> to vector<2x8xf32>
    %517 = vector.extract_strided_slice %514 {offsets = [0, 8], sizes = [2, 8], strides = [1, 1]} : vector<2x32xf32> to vector<2x8xf32>
    %518 = vector.extract_strided_slice %515 {offsets = [0, 16], sizes = [2, 8], strides = [1, 1]} : vector<2x32xf32> to vector<2x8xf32>
    %519 = vector.extract_strided_slice %514 {offsets = [0, 24], sizes = [2, 8], strides = [1, 1]} : vector<2x32xf32> to vector<2x8xf32>
    %520 = arith.mulf %517, %503 : vector<2x8xf32>
    %521 = arith.mulf %516, %518 : vector<2x8xf32>
    %522 = arith.addf %520, %521 : vector<2x8xf32>
    %523 = math.tanh %522 : vector<2x8xf32>
    %524 = arith.mulf %519, %523 : vector<2x8xf32>
    %c2_124 = arith.constant 2 : index
    %c0_125 = arith.constant 0 : index
    %525 = vector.load %arg3[%c2_124, %c0_125] : memref<16x8xf32, #tpu.memory_space<vmem>>, vector<2x8xf32>
    tpu.vector_store %arg3[%c2_124, %c0_125], %524 {strides = array<i32>} : memref<16x8xf32, #tpu.memory_space<vmem>>, vector<2x8xf32>,
    %526 = vector.extract_strided_slice %487 {offsets = [4, 0], sizes = [2, 32], strides = [1, 1]} : vector<16x32xf32> to vector<2x32xf32>
    %cst_126 = arith.constant dense<0.000000e+00> : vector<2x32xf32>
    %527 = tpu.matmul %524, %3, %cst_126 {dimension_numbers = #tpu.dot_dimension_numbers<[1], [0], [0], [1], [0, 0, 1, 1], [], []>} : vector<2x8xf32>, vector<8x32xf32>, vector<2x32xf32> -> vector<2x32xf32>
    %528 = arith.addf %526, %527 : vector<2x32xf32>
    %529 = arith.negf %528 : vector<2x32xf32>
    %530 = math.exp %529 : vector<2x32xf32>
    %cst_127 = arith.constant 1.000000e+00 : f32
    %531 = vector.broadcast %cst_127 : f32 to vector<2x32xf32>
    %532 = arith.addf %531, %530 : vector<2x32xf32>
    %533 = arith.divf %531, %532 : vector<2x32xf32>
    %534 = math.tanh %528 : vector<2x32xf32>
    %535 = vector.extract_strided_slice %533 {offsets = [0, 0], sizes = [2, 8], strides = [1, 1]} : vector<2x32xf32> to vector<2x8xf32>
    %536 = vector.extract_strided_slice %533 {offsets = [0, 8], sizes = [2, 8], strides = [1, 1]} : vector<2x32xf32> to vector<2x8xf32>
    %537 = vector.extract_strided_slice %534 {offsets = [0, 16], sizes = [2, 8], strides = [1, 1]} : vector<2x32xf32> to vector<2x8xf32>
    %538 = vector.extract_strided_slice %533 {offsets = [0, 24], sizes = [2, 8], strides = [1, 1]} : vector<2x32xf32> to vector<2x8xf32>
    %539 = arith.mulf %536, %522 : vector<2x8xf32>
    %540 = arith.mulf %535, %537 : vector<2x8xf32>
    %541 = arith.addf %539, %540 : vector<2x8xf32>
    %542 = math.tanh %541 : vector<2x8xf32>
    %543 = arith.mulf %538, %542 : vector<2x8xf32>
    %c4_128 = arith.constant 4 : index
    %c0_129 = arith.constant 0 : index
    %544 = vector.load %arg3[%c4_128, %c0_129] : memref<16x8xf32, #tpu.memory_space<vmem>>, vector<2x8xf32>
    tpu.vector_store %arg3[%c4_128, %c0_129], %543 {strides = array<i32>} : memref<16x8xf32, #tpu.memory_space<vmem>>, vector<2x8xf32>,
    %545 = vector.extract_strided_slice %487 {offsets = [6, 0], sizes = [2, 32], strides = [1, 1]} : vector<16x32xf32> to vector<2x32xf32>
    %cst_130 = arith.constant dense<0.000000e+00> : vector<2x32xf32>
    %546 = tpu.matmul %543, %3, %cst_130 {dimension_numbers = #tpu.dot_dimension_numbers<[1], [0], [0], [1], [0, 0, 1, 1], [], []>} : vector<2x8xf32>, vector<8x32xf32>, vector<2x32xf32> -> vector<2x32xf32>
    %547 = arith.addf %545, %546 : vector<2x32xf32>
    %548 = arith.negf %547 : vector<2x32xf32>
    %549 = math.exp %548 : vector<2x32xf32>
    %cst_131 = arith.constant 1.000000e+00 : f32
    %550 = vector.broadcast %cst_131 : f32 to vector<2x32xf32>
    %551 = arith.addf %550, %549 : vector<2x32xf32>
    %552 = arith.divf %550, %551 : vector<2x32xf32>
    %553 = math.tanh %547 : vector<2x32xf32>
    %554 = vector.extract_strided_slice %552 {offsets = [0, 0], sizes = [2, 8], strides = [1, 1]} : vector<2x32xf32> to vector<2x8xf32>
    %555 = vector.extract_strided_slice %552 {offsets = [0, 8], sizes = [2, 8], strides = [1, 1]} : vector<2x32xf32> to vector<2x8xf32>
    %556 = vector.extract_strided_slice %553 {offsets = [0, 16], sizes = [2, 8], strides = [1, 1]} : vector<2x32xf32> to vector<2x8xf32>
    %557 = vector.extract_strided_slice %552 {offsets = [0, 24], sizes = [2, 8], strides = [1, 1]} : vector<2x32xf32> to vector<2x8xf32>
    %558 = arith.mulf %555, %541 : vector<2x8xf32>
    %559 = arith.mulf %554, %556 : vector<2x8xf32>
    %560 = arith.addf %558, %559 : vector<2x8xf32>
    %561 = math.tanh %560 : vector<2x8xf32>
    %562 = arith.mulf %557, %561 : vector<2x8xf32>
    %c6_132 = arith.constant 6 : index
    %c0_133 = arith.constant 0 : index
    %563 = vector.load %arg3[%c6_132, %c0_133] : memref<16x8xf32, #tpu.memory_space<vmem>>, vector<2x8xf32>
    tpu.vector_store %arg3[%c6_132, %c0_133], %562 {strides = array<i32>} : memref<16x8xf32, #tpu.memory_space<vmem>>, vector<2x8xf32>,
    %564 = vector.extract_strided_slice %487 {offsets = [8, 0], sizes = [2, 32], strides = [1, 1]} : vector<16x32xf32> to vector<2x32xf32>
    %cst_134 = arith.constant dense<0.000000e+00> : vector<2x32xf32>
    %565 = tpu.matmul %562, %3, %cst_134 {dimension_numbers = #tpu.dot_dimension_numbers<[1], [0], [0], [1], [0, 0, 1, 1], [], []>} : vector<2x8xf32>, vector<8x32xf32>, vector<2x32xf32> -> vector<2x32xf32>
    %566 = arith.addf %564, %565 : vector<2x32xf32>
    %567 = arith.negf %566 : vector<2x32xf32>
    %568 = math.exp %567 : vector<2x32xf32>
    %cst_135 = arith.constant 1.000000e+00 : f32
    %569 = vector.broadcast %cst_135 : f32 to vector<2x32xf32>
    %570 = arith.addf %569, %568 : vector<2x32xf32>
    %571 = arith.divf %569, %570 : vector<2x32xf32>
    %572 = math.tanh %566 : vector<2x32xf32>
    %573 = vector.extract_strided_slice %571 {offsets = [0, 0], sizes = [2, 8], strides = [1, 1]} : vector<2x32xf32> to vector<2x8xf32>
    %574 = vector.extract_strided_slice %571 {offsets = [0, 8], sizes = [2, 8], strides = [1, 1]} : vector<2x32xf32> to vector<2x8xf32>
    %575 = vector.extract_strided_slice %572 {offsets = [0, 16], sizes = [2, 8], strides = [1, 1]} : vector<2x32xf32> to vector<2x8xf32>
    %576 = vector.extract_strided_slice %571 {offsets = [0, 24], sizes = [2, 8], strides = [1, 1]} : vector<2x32xf32> to vector<2x8xf32>
    %577 = arith.mulf %574, %560 : vector<2x8xf32>
    %578 = arith.mulf %573, %575 : vector<2x8xf32>
    %579 = arith.addf %577, %578 : vector<2x8xf32>
    %580 = math.tanh %579 : vector<2x8xf32>
    %581 = arith.mulf %576, %580 : vector<2x8xf32>
    %c8_136 = arith.constant 8 : index
    %c0_137 = arith.constant 0 : index
    %582 = vector.load %arg3[%c8_136, %c0_137] : memref<16x8xf32, #tpu.memory_space<vmem>>, vector<2x8xf32>
    tpu.vector_store %arg3[%c8_136, %c0_137], %581 {strides = array<i32>} : memref<16x8xf32, #tpu.memory_space<vmem>>, vector<2x8xf32>,
    %583 = vector.extract_strided_slice %487 {offsets = [10, 0], sizes = [2, 32], strides = [1, 1]} : vector<16x32xf32> to vector<2x32xf32>
    %cst_138 = arith.constant dense<0.000000e+00> : vector<2x32xf32>
    %584 = tpu.matmul %581, %3, %cst_138 {dimension_numbers = #tpu.dot_dimension_numbers<[1], [0], [0], [1], [0, 0, 1, 1], [], []>} : vector<2x8xf32>, vector<8x32xf32>, vector<2x32xf32> -> vector<2x32xf32>
    %585 = arith.addf %583, %584 : vector<2x32xf32>
    %586 = arith.negf %585 : vector<2x32xf32>
    %587 = math.exp %586 : vector<2x32xf32>
    %cst_139 = arith.constant 1.000000e+00 : f32
    %588 = vector.broadcast %cst_139 : f32 to vector<2x32xf32>
    %589 = arith.addf %588, %587 : vector<2x32xf32>
    %590 = arith.divf %588, %589 : vector<2x32xf32>
    %591 = math.tanh %585 : vector<2x32xf32>
    %592 = vector.extract_strided_slice %590 {offsets = [0, 0], sizes = [2, 8], strides = [1, 1]} : vector<2x32xf32> to vector<2x8xf32>
    %593 = vector.extract_strided_slice %590 {offsets = [0, 8], sizes = [2, 8], strides = [1, 1]} : vector<2x32xf32> to vector<2x8xf32>
    %594 = vector.extract_strided_slice %591 {offsets = [0, 16], sizes = [2, 8], strides = [1, 1]} : vector<2x32xf32> to vector<2x8xf32>
    %595 = vector.extract_strided_slice %590 {offsets = [0, 24], sizes = [2, 8], strides = [1, 1]} : vector<2x32xf32> to vector<2x8xf32>
    %596 = arith.mulf %593, %579 : vector<2x8xf32>
    %597 = arith.mulf %592, %594 : vector<2x8xf32>
    %598 = arith.addf %596, %597 : vector<2x8xf32>
    %599 = math.tanh %598 : vector<2x8xf32>
    %600 = arith.mulf %595, %599 : vector<2x8xf32>
    %c10_140 = arith.constant 10 : index
    %c0_141 = arith.constant 0 : index
    %601 = vector.load %arg3[%c10_140, %c0_141] : memref<16x8xf32, #tpu.memory_space<vmem>>, vector<2x8xf32>
    tpu.vector_store %arg3[%c10_140, %c0_141], %600 {strides = array<i32>} : memref<16x8xf32, #tpu.memory_space<vmem>>, vector<2x8xf32>,
    %602 = vector.extract_strided_slice %487 {offsets = [12, 0], sizes = [2, 32], strides = [1, 1]} : vector<16x32xf32> to vector<2x32xf32>
    %cst_142 = arith.constant dense<0.000000e+00> : vector<2x32xf32>
    %603 = tpu.matmul %600, %3, %cst_142 {dimension_numbers = #tpu.dot_dimension_numbers<[1], [0], [0], [1], [0, 0, 1, 1], [], []>} : vector<2x8xf32>, vector<8x32xf32>, vector<2x32xf32> -> vector<2x32xf32>
    %604 = arith.addf %602, %603 : vector<2x32xf32>
    %605 = arith.negf %604 : vector<2x32xf32>
    %606 = math.exp %605 : vector<2x32xf32>
    %cst_143 = arith.constant 1.000000e+00 : f32
    %607 = vector.broadcast %cst_143 : f32 to vector<2x32xf32>
    %608 = arith.addf %607, %606 : vector<2x32xf32>
    %609 = arith.divf %607, %608 : vector<2x32xf32>
    %610 = math.tanh %604 : vector<2x32xf32>
    %611 = vector.extract_strided_slice %609 {offsets = [0, 0], sizes = [2, 8], strides = [1, 1]} : vector<2x32xf32> to vector<2x8xf32>
    %612 = vector.extract_strided_slice %609 {offsets = [0, 8], sizes = [2, 8], strides = [1, 1]} : vector<2x32xf32> to vector<2x8xf32>
    %613 = vector.extract_strided_slice %610 {offsets = [0, 16], sizes = [2, 8], strides = [1, 1]} : vector<2x32xf32> to vector<2x8xf32>
    %614 = vector.extract_strided_slice %609 {offsets = [0, 24], sizes = [2, 8], strides = [1, 1]} : vector<2x32xf32> to vector<2x8xf32>
    %615 = arith.mulf %612, %598 : vector<2x8xf32>
    %616 = arith.mulf %611, %613 : vector<2x8xf32>
    %617 = arith.addf %615, %616 : vector<2x8xf32>
    %618 = math.tanh %617 : vector<2x8xf32>
    %619 = arith.mulf %614, %618 : vector<2x8xf32>
    %c12_144 = arith.constant 12 : index
    %c0_145 = arith.constant 0 : index
    %620 = vector.load %arg3[%c12_144, %c0_145] : memref<16x8xf32, #tpu.memory_space<vmem>>, vector<2x8xf32>
    tpu.vector_store %arg3[%c12_144, %c0_145], %619 {strides = array<i32>} : memref<16x8xf32, #tpu.memory_space<vmem>>, vector<2x8xf32>,
    %621 = vector.extract_strided_slice %487 {offsets = [14, 0], sizes = [2, 32], strides = [1, 1]} : vector<16x32xf32> to vector<2x32xf32>
    %cst_146 = arith.constant dense<0.000000e+00> : vector<2x32xf32>
    %622 = tpu.matmul %619, %3, %cst_146 {dimension_numbers = #tpu.dot_dimension_numbers<[1], [0], [0], [1], [0, 0, 1, 1], [], []>} : vector<2x8xf32>, vector<8x32xf32>, vector<2x32xf32> -> vector<2x32xf32>
    %623 = arith.addf %621, %622 : vector<2x32xf32>
    %624 = arith.negf %623 : vector<2x32xf32>
    %625 = math.exp %624 : vector<2x32xf32>
    %cst_147 = arith.constant 1.000000e+00 : f32
    %626 = vector.broadcast %cst_147 : f32 to vector<2x32xf32>
    %627 = arith.addf %626, %625 : vector<2x32xf32>
    %628 = arith.divf %626, %627 : vector<2x32xf32>
    %629 = math.tanh %623 : vector<2x32xf32>
    %630 = vector.extract_strided_slice %628 {offsets = [0, 0], sizes = [2, 8], strides = [1, 1]} : vector<2x32xf32> to vector<2x8xf32>
    %631 = vector.extract_strided_slice %628 {offsets = [0, 8], sizes = [2, 8], strides = [1, 1]} : vector<2x32xf32> to vector<2x8xf32>
    %632 = vector.extract_strided_slice %629 {offsets = [0, 16], sizes = [2, 8], strides = [1, 1]} : vector<2x32xf32> to vector<2x8xf32>
    %633 = vector.extract_strided_slice %628 {offsets = [0, 24], sizes = [2, 8], strides = [1, 1]} : vector<2x32xf32> to vector<2x8xf32>
    %634 = arith.mulf %631, %617 : vector<2x8xf32>
    %635 = arith.mulf %630, %632 : vector<2x8xf32>
    %636 = arith.addf %634, %635 : vector<2x8xf32>
    %637 = math.tanh %636 : vector<2x8xf32>
    %638 = arith.mulf %633, %637 : vector<2x8xf32>
    %c14_148 = arith.constant 14 : index
    %c0_149 = arith.constant 0 : index
    %639 = vector.load %arg3[%c14_148, %c0_149] : memref<16x8xf32, #tpu.memory_space<vmem>>, vector<2x8xf32>
    tpu.vector_store %arg3[%c14_148, %c0_149], %638 {strides = array<i32>} : memref<16x8xf32, #tpu.memory_space<vmem>>, vector<2x8xf32>,
    %c0_150 = arith.constant 0 : index
    %c0_151 = arith.constant 0 : index
    %640 = vector.load %arg3[%c0_150, %c0_151] : memref<16x8xf32, #tpu.memory_space<vmem>>, vector<16x8xf32>
    %cst_152 = arith.constant -1.000000e+00 : f32
    %cst_153 = arith.constant 1.000000e+00 : f32
    %641 = vector.broadcast %cst_152 : f32 to vector<16x8xf32>
    %642 = arith.maximumf %641, %640 : vector<16x8xf32>
    %643 = vector.broadcast %cst_153 : f32 to vector<16x8xf32>
    %644 = arith.minimumf %643, %642 : vector<16x8xf32>
    %645 = arith.negf %644 : vector<16x8xf32>
    %646 = math.exp %645 : vector<16x8xf32>
    %cst_154 = arith.constant 1.000000e+00 : f32
    %647 = vector.broadcast %cst_154 : f32 to vector<16x8xf32>
    %648 = arith.addf %647, %646 : vector<16x8xf32>
    %649 = arith.divf %647, %648 : vector<16x8xf32>
    %c64 = arith.constant 64 : index
    %c0_155 = arith.constant 0 : index
    %650 = vector.load %arg1[%c64, %c0_155] : memref<80x32xf32, #tpu.memory_space<vmem>>, vector<8x32xf32>
    %cst_156 = arith.constant dense<0.000000e+00> : vector<16x32xf32>
    %651 = tpu.matmul %649, %650, %cst_156 {dimension_numbers = #tpu.dot_dimension_numbers<[1], [0], [0], [1], [0, 0, 1, 1], [], []>} : vector<16x8xf32>, vector<8x32xf32>, vector<16x32xf32> -> vector<16x32xf32>
    %c76 = arith.constant 76 : index
    %c0_157 = arith.constant 0 : index
    %652 = vector.load %arg1[%c76, %c0_157] : memref<80x32xf32, #tpu.memory_space<vmem>>, vector<1x32xf32>
    %653 = vector.broadcast %652 : vector<1x32xf32> to vector<16x32xf32>
    %654 = arith.addf %651, %653 : vector<16x32xf32>
    %655 = tpu.concatenate %480, %638, %478, %636 in 0 : vector<2x8xf32>, vector<2x8xf32>, vector<2x8xf32>, vector<2x8xf32> -> vector<8x8xf32>
    %cst_158 = arith.constant 0.000000e+00 : f32
    %656 = vector.broadcast %cst_158 : f32 to vector<8x24xf32>
    %657 = tpu.concatenate %655, %656 in 1 : vector<8x8xf32>, vector<8x24xf32> -> vector<8x32xf32>
    %658 = tpu.concatenate %654, %657 in 0 : vector<16x32xf32>, vector<8x32xf32> -> vector<24x32xf32>
    %c0_159 = arith.constant 0 : index
    %c0_160 = arith.constant 0 : index
    %659 = vector.load %arg2[%c0_159, %c0_160] : memref<24x32xf32, #tpu.memory_space<vmem>>, vector<24x32xf32>
    tpu.vector_store %arg2[%c0_159, %c0_160], %658 {strides = array<i32>} : memref<24x32xf32, #tpu.memory_space<vmem>>, vector<24x32xf32>,
    return
  }
}

</mosaic_0001>

<llo_original>
// kernel: model_forward.1
$region0: #{model_forward.1}
  #allocation0 [shape = 'u32[]', space=smem, size = 0x4, offset = 0x4, fixed_abs, tag = 'smem constant byte address 0x4 - core index']
  #allocation1 [shape = 'u32[144,128]{1,0:T(1,128)}', space=vmem, size = 0x12000, scoped, tag = 'internal scratch']
  #allocation2 [shape = 'f32[16,8]{1,0:T(8,128)}', space=vmem, size = 0x2000, scoped, tag = 'scratch operand']
  %s0 = inlined_call_operand.vmem [shape: f32[24,8], index: 0, kind: input, shape index: {}]
  %s1 = inlined_call_operand.vmem [shape: f32[80,32], index: 1, kind: input, shape index: {}]
  %s2 = inlined_call_operand.vmem [shape: f32[24,32], index: 2, kind: output, shape index: {}]
  %s3 = sld [smem:[#allocation0]]
  $region18: #{model_forward.1} parent=0
    _
  %s5 = ssub.s32 1, %s3
  %s6 = scalar_select 0, %s5, %s3
  // Predicated region
  $region2: #{model_forward.1} parent=0 // pred_check
    _
  $region3: #{model_forward.1} parent=0 // pred_check_branch
    %8 = sbr.rel (0) target = $region5
  $region4: #{model_forward.1} parent=0 // pred_region
    _
  $region5: #{model_forward.1} parent=0 // pred_fallthru
    _
  // Predicated region
  $region6: #{model_forward.1} parent=0 // pred_check
    _
  $region7: #{model_forward.1} parent=0 // pred_check_branch
    %10 = sbr.rel (0) target = $region9
  $region8: #{model_forward.1} parent=0 // pred_region
    _
  $region9: #{model_forward.1} parent=0 // pred_fallthru
    _
  %v11 = vld [vmem:[%s1 + $0x8] sm:$0xff]
  %v12 = vld [vmem:[%s1 + $0x18] sm:$0xff]
  %v13 = vld [vmem:[%s1 + $0x28] sm:$0xff]
  %v14 = vld [vmem:[%s1 + $0x38] sm:$0xff]
  %v15 = vld [vmem:[%s0] sm:$0xff]
  %v16 = vld [vmem:[%s0 + $0x8] sm:$0xff]
  %v17 = vld [vmem:[%s0 + $0x10] sm:$0x3]
  %v18 = vld [vmem:[%s0 + $0x12] sm:$0x3]
  %v19 = vld [vmem:[%s0 + $0x14] sm:$0x3]
  %v20 = vld [vmem:[%s0 + $0x16] sm:$0x3]
  %v21 = vld [vmem:[%s1] sm:$0xff]
  %v22 = vld [vmem:[%s1 + $0x48] sm:$0x1]
  %v23 = vlaneseq
  %v24 = vshrl.u32 %v23, 7
  %v25 = vsub.s32 0, %v24
  %v26 = vrot.slane %v22, %v25
  %vm27 = vcmask 64512
  %v29 = vsel %vm27, %v15, 0
  %v32 = vsel %vm27, %v16, 0
  %34 = vmatprep.subr.mxu0 0.0
  %35 = vmatpush1.msra.mxu0 %v21
  %36 = vmatprep.subr.mxu0 0.0
  %37 = vmatpush1.msra.mxu0 0.0
  %38 = vmatprep.subr.mxu0 0.0
  %39 = vmatpush1.msra.mxu0 0.0
  %40 = vmatprep.subr.mxu0 0.0
  %41 = vmatpush1.msra.mxu0 0.0
  %42 = vmatprep.subr.mxu0 0.0
  %43 = vmatpush1.msra.mxu0 0.0
  %44 = vmatprep.subr.mxu0 0.0
  %45 = vmatpush1.msra.mxu0 0.0
  %46 = vmatprep.subr.mxu0 0.0
  %47 = vmatpush1.msra.mxu0 0.0
  %48 = vmatprep.subr.mxu0 0.0
  %49 = vmatpush1.msra.mxu0 0.0
  %50 = vmatprep.subr.mxu0 0.0
  %51 = vmatpush1.msra.mxu0 0.0
  %52 = vmatprep.subr.mxu0 0.0
  %53 = vmatpush1.msra.mxu0 0.0
  %54 = vmatprep.subr.mxu0 0.0
  %55 = vmatpush1.msra.mxu0 0.0
  %56 = vmatprep.subr.mxu0 0.0
  %57 = vmatpush1.msra.mxu0 0.0
  %58 = vmatprep.subr.mxu0 0.0
  %59 = vmatpush1.msra.mxu0 0.0
  %60 = vmatprep.subr.mxu0 0.0
  %61 = vmatpush1.msra.mxu0 0.0
  %62 = vmatprep.subr.mxu0 0.0
  %63 = vmatpush1.msra.mxu0 0.0
  %64 = vmatprep.subr.mxu0 0.0
  %65 = vmatpush1.msra.mxu0 0.0
  %66 = vmatprep.subr.mxu0 0.0
  %67 = vmatpush1.msra.mxu0 0.0
  %68 = vmatprep.subr.mxu0 0.0
  %69 = vmatpush1.msra.mxu0 0.0
  %70 = vmatprep.subr.mxu0 0.0
  %71 = vmatpush1.msra.mxu0 0.0
  %72 = vmatprep.subr.mxu0 0.0
  %73 = vmatpush1.msra.mxu0 0.0
  %74 = vmatprep.subr.mxu0 0.0
  %75 = vmatpush1.msra.mxu0 0.0
  %76 = vmatprep.subr.mxu0 0.0
  %77 = vmatpush1.msra.mxu0 0.0
  %78 = vmatprep.subr.mxu0 0.0
  %79 = vmatpush1.msra.mxu0 0.0
  %80 = vmatprep.subr.mxu0 0.0
  %81 = vmatpush1.msra.mxu0 0.0
  %82 = vmatprep.subr.mxu0 0.0
  %83 = vmatpush1.msra.mxu0 0.0
  %84 = vmatprep.subr.mxu0 0.0
  %85 = vmatpush1.msra.mxu0 0.0
  %86 = vmatprep.subr.mxu0 0.0
  %87 = vmatpush1.msra.mxu0 0.0
  %88 = vmatprep.subr.mxu0 0.0
  %89 = vmatpush1.msra.mxu0 0.0
  %90 = vmatprep.subr.mxu0 0.0
  %91 = vmatpush1.msra.mxu0 0.0
  %92 = vmatprep.subr.mxu0 0.0
  %93 = vmatpush1.msra.mxu0 0.0
  %94 = vmatprep.subr.mxu0 0.0
  %95 = vmatpush1.msra.mxu0 0.0
  %96 = vmatprep.subr.mxu0 0.0
  %97 = vmatpush1.msra.mxu0 0.0
  %98 = vmatprep.mubr.f32.mxu0 0.0
  %99 = vmatmul.mubr.f32.gmra.mrb[0].mxu0 %v29
  %v100 = vpop.f32.mrb[0].mxu0
  %v101 = vadd.f32 %v26, %v100
  %v102 = vpop.f32.mrb[0].mxu0
  %103 = vmatprep.mubr.f32.mxu0 0.0
  %104 = vmatmul.mubr.f32.gmra.mrb[0].mxu0 %v32
  %v105 = vpop.f32.mrb[0].mxu0
  %v106 = vadd.f32 %v26, %v105
  %v107 = vpop.f32.mrb[0].mxu0
  %108 = vdwg.mxu0
  %v110 = vsel %vm27, %v17, 0
  %112 = vmatprep.subr.mxu0 0.0
  %113 = vmatpush1.msra.mxu0 %v11
  %114 = vmatprep.subr.mxu0 0.0
  %115 = vmatpush1.msra.mxu0 0.0
  %116 = vmatprep.subr.mxu0 0.0
  %117 = vmatpush1.msra.mxu0 0.0
  %118 = vmatprep.subr.mxu0 0.0
  %119 = vmatpush1.msra.mxu0 0.0
  %120 = vmatprep.subr.mxu0 0.0
  %121 = vmatpush1.msra.mxu0 0.0
  %122 = vmatprep.subr.mxu0 0.0
  %123 = vmatpush1.msra.mxu0 0.0
  %124 = vmatprep.subr.mxu0 0.0
  %125 = vmatpush1.msra.mxu0 0.0
  %126 = vmatprep.subr.mxu0 0.0
  %127 = vmatpush1.msra.mxu0 0.0
  %128 = vmatprep.subr.mxu0 0.0
  %129 = vmatpush1.msra.mxu0 0.0
  %130 = vmatprep.subr.mxu0 0.0
  %131 = vmatpush1.msra.mxu0 0.0
  %132 = vmatprep.subr.mxu0 0.0
  %133 = vmatpush1.msra.mxu0 0.0
  %134 = vmatprep.subr.mxu0 0.0
  %135 = vmatpush1.msra.mxu0 0.0
  %136 = vmatprep.subr.mxu0 0.0
  %137 = vmatpush1.msra.mxu0 0.0
  %138 = vmatprep.subr.mxu0 0.0
  %139 = vmatpush1.msra.mxu0 0.0
  %140 = vmatprep.subr.mxu0 0.0
  %141 = vmatpush1.msra.mxu0 0.0
  %142 = vmatprep.subr.mxu0 0.0
  %143 = vmatpush1.msra.mxu0 0.0
  %144 = vmatprep.subr.mxu0 0.0
  %145 = vmatpush1.msra.mxu0 0.0
  %146 = vmatprep.subr.mxu0 0.0
  %147 = vmatpush1.msra.mxu0 0.0
  %148 = vmatprep.subr.mxu0 0.0
  %149 = vmatpush1.msra.mxu0 0.0
  %150 = vmatprep.subr.mxu0 0.0
  %151 = vmatpush1.msra.mxu0 0.0
  %152 = vmatprep.subr.mxu0 0.0
  %153 = vmatpush1.msra.mxu0 0.0
  %154 = vmatprep.subr.mxu0 0.0
  %155 = vmatpush1.msra.mxu0 0.0
  %156 = vmatprep.subr.mxu0 0.0
  %157 = vmatpush1.msra.mxu0 0.0
  %158 = vmatprep.subr.mxu0 0.0
  %159 = vmatpush1.msra.mxu0 0.0
  %160 = vmatprep.subr.mxu0 0.0
  %161 = vmatpush1.msra.mxu0 0.0
  %162 = vmatprep.subr.mxu0 0.0
  %163 = vmatpush1.msra.mxu0 0.0
  %164 = vmatprep.subr.mxu0 0.0
  %165 = vmatpush1.msra.mxu0 0.0
  %166 = vmatprep.subr.mxu0 0.0
  %167 = vmatpush1.msra.mxu0 0.0
  %168 = vmatprep.subr.mxu0 0.0
  %169 = vmatpush1.msra.mxu0 0.0
  %170 = vmatprep.subr.mxu0 0.0
  %171 = vmatpush1.msra.mxu0 0.0
  %172 = vmatprep.subr.mxu0 0.0
  %173 = vmatpush1.msra.mxu0 0.0
  %174 = vmatprep.subr.mxu0 0.0
  %175 = vmatpush1.msra.mxu0 0.0
  %176 = vmatprep.mubr.f32.mxu0 0.0
  %177 = vmatmul.mubr.f32.gmra.mrb[0].mxu0 %v110
  %v178 = vpop.f32.mrb[0].mxu0
  %v179 = vadd.f32 0.0, %v178
  %v180 = vpop.f32.mrb[0].mxu0
  %181 = vdwg.mxu0
  %v182 = vadd.f32 %v101, %v179
  %v183 = vxor.u32 %v182, 2147483648
  %v184 = vmul.f32 %v183, 1.442695
  %v185 = vpow.pop %v184
  %v186 = vadd.f32 %v185, 1.0
  %v187 = vrcp.pop %v186
  %v188 = vmul.f32 1.0, %v187
  %v189 = vtanh.pop %v182
  %191 = vrot.lane.b32.xlu0 %v19, 8
  %v192 = vpop.permute.xlu0 %191
  %v194 = vmul.f32 %v188, %v192
  %196 = vrot.lane.b32.xlu0 %v189, 112
  %v197 = vpop.permute.xlu0 %196
  %v199 = vmul.f32 %v188, %v197
  %201 = vrot.lane.b32.xlu0 %v199, 8
  %v202 = vpop.permute.xlu0 %201
  %v204 = vadd.f32 %v194, %v202
  %v205 = vtanh.pop %v204
  %207 = vrot.lane.b32.xlu0 %v205, 16
  %v208 = vpop.permute.xlu0 %207
  %v210 = vmul.f32 %v188, %v208
  %212 = vrot.lane.b32.xlu0 %v210, 104
  %v213 = vpop.permute.xlu0 %212
  %vm215 = vcmask 58368
  %216 = vst.msk [vmem:[#allocation2] sm:$0x3] %vm215, %v213
  %v217 = vsel %vm27, %v213, 0
  %219 = vmatprep.subr.mxu0 0.0
  %220 = vmatpush1.msra.mxu0 %v11
  %221 = vmatprep.subr.mxu0 0.0
  %222 = vmatpush1.msra.mxu0 0.0
  %223 = vmatprep.subr.mxu0 0.0
  %224 = vmatpush1.msra.mxu0 0.0
  %225 = vmatprep.subr.mxu0 0.0
  %226 = vmatpush1.msra.mxu0 0.0
  %227 = vmatprep.subr.mxu0 0.0
  %228 = vmatpush1.msra.mxu0 0.0
  %229 = vmatprep.subr.mxu0 0.0
  %230 = vmatpush1.msra.mxu0 0.0
  %231 = vmatprep.subr.mxu0 0.0
  %232 = vmatpush1.msra.mxu0 0.0
  %233 = vmatprep.subr.mxu0 0.0
  %234 = vmatpush1.msra.mxu0 0.0
  %235 = vmatprep.subr.mxu0 0.0
  %236 = vmatpush1.msra.mxu0 0.0
  %237 = vmatprep.subr.mxu0 0.0
  %238 = vmatpush1.msra.mxu0 0.0
  %239 = vmatprep.subr.mxu0 0.0
  %240 = vmatpush1.msra.mxu0 0.0
  %241 = vmatprep.subr.mxu0 0.0
  %242 = vmatpush1.msra.mxu0 0.0
  %243 = vmatprep.subr.mxu0 0.0
  %244 = vmatpush1.msra.mxu0 0.0
  %245 = vmatprep.subr.mxu0 0.0
  %246 = vmatpush1.msra.mxu0 0.0
  %247 = vmatprep.subr.mxu0 0.0
  %248 = vmatpush1.msra.mxu0 0.0
  %249 = vmatprep.subr.mxu0 0.0
  %250 = vmatpush1.msra.mxu0 0.0
  %251 = vmatprep.subr.mxu0 0.0
  %252 = vmatpush1.msra.mxu0 0.0
  %253 = vmatprep.subr.mxu0 0.0
  %254 = vmatpush1.msra.mxu0 0.0
  %255 = vmatprep.subr.mxu0 0.0
  %256 = vmatpush1.msra.mxu0 0.0
  %257 = vmatprep.subr.mxu0 0.0
  %258 = vmatpush1.msra.mxu0 0.0
  %259 = vmatprep.subr.mxu0 0.0
  %260 = vmatpush1.msra.mxu0 0.0
  %261 = vmatprep.subr.mxu0 0.0
  %262 = vmatpush1.msra.mxu0 0.0
  %263 = vmatprep.subr.mxu0 0.0
  %264 = vmatpush1.msra.mxu0 0.0
  %265 = vmatprep.subr.mxu0 0.0
  %266 = vmatpush1.msra.mxu0 0.0
  %267 = vmatprep.subr.mxu0 0.0
  %268 = vmatpush1.msra.mxu0 0.0
  %269 = vmatprep.subr.mxu0 0.0
  %270 = vmatpush1.msra.mxu0 0.0
  %271 = vmatprep.subr.mxu0 0.0
  %272 = vmatpush1.msra.mxu0 0.0
  %273 = vmatprep.subr.mxu0 0.0
  %274 = vmatpush1.msra.mxu0 0.0
  %275 = vmatprep.subr.mxu0 0.0
  %276 = vmatpush1.msra.mxu0 0.0
  %277 = vmatprep.subr.mxu0 0.0
  %278 = vmatpush1.msra.mxu0 0.0
  %279 = vmatprep.subr.mxu0 0.0
  %280 = vmatpush1.msra.mxu0 0.0
  %281 = vmatprep.subr.mxu0 0.0
  %282 = vmatpush1.msra.mxu0 0.0
  %283 = vmatprep.mubr.f32.mxu0 0.0
  %284 = vmatmul.mubr.f32.gmra.mrb[0].mxu0 %v217
  %v285 = vpop.f32.mrb[0].mxu0
  %v286 = vadd.f32 0.0, %v285
  %v287 = vpop.f32.mrb[0].mxu0
  %288 = vdwg.mxu0
  %v290 = vrot.slane %v286, 6
  %v292 = vadd.f32 %v101, %v290
  %v293 = vxor.u32 %v292, 2147483648
  %v294 = vmul.f32 %v293, 1.442695
  %v295 = vpow.pop %v294
  %v296 = vadd.f32 %v295, 1.0
  %v297 = vrcp.pop %v296
  %v298 = vmul.f32 1.0, %v297
  %v299 = vtanh.pop %v292
  %v301 = vrot.slane %v204, 6
  %v303 = vmul.f32 %v298, %v301
  %305 = vrot.lane.b32.xlu0 %v299, 112
  %v306 = vpop.permute.xlu0 %305
  %v308 = vmul.f32 %v298, %v306
  %310 = vrot.lane.b32.xlu0 %v308, 8
  %v311 = vpop.permute.xlu0 %310
  %v313 = vadd.f32 %v303, %v311
  %v314 = vtanh.pop %v313
  %316 = vrot.lane.b32.xlu0 %v314, 16
  %v317 = vpop.permute.xlu0 %316
  %v319 = vmul.f32 %v298, %v317
  %321 = vrot.lane.b32.xlu0 %v319, 104
  %v322 = vpop.permute.xlu0 %321
  %vm324 = vcmask 60418
  %325 = vst.msk [vmem:[#allocation2] sm:$0xc] %vm324, %v322
  %v326 = vrot.slane %v319, 2
  %327 = vrot.lane.b32.xlu0 %v326, 104
  %v328 = vpop.permute.xlu0 %327
  %v329 = vsel %vm27, %v328, 0
  %331 = vmatprep.subr.mxu0 0.0
  %332 = vmatpush1.msra.mxu0 %v11
  %333 = vmatprep.subr.mxu0 0.0
  %334 = vmatpush1.msra.mxu0 0.0
  %335 = vmatprep.subr.mxu0 0.0
  %336 = vmatpush1.msra.mxu0 0.0
  %337 = vmatprep.subr.mxu0 0.0
  %338 = vmatpush1.msra.mxu0 0.0
  %339 = vmatprep.subr.mxu0 0.0
  %340 = vmatpush1.msra.mxu0 0.0
  %341 = vmatprep.subr.mxu0 0.0
  %342 = vmatpush1.msra.mxu0 0.0
  %343 = vmatprep.subr.mxu0 0.0
  %344 = vmatpush1.msra.mxu0 0.0
  %345 = vmatprep.subr.mxu0 0.0
  %346 = vmatpush1.msra.mxu0 0.0
  %347 = vmatprep.subr.mxu0 0.0
  %348 = vmatpush1.msra.mxu0 0.0
  %349 = vmatprep.subr.mxu0 0.0
  %350 = vmatpush1.msra.mxu0 0.0
  %351 = vmatprep.subr.mxu0 0.0
  %352 = vmatpush1.msra.mxu0 0.0
  %353 = vmatprep.subr.mxu0 0.0
  %354 = vmatpush1.msra.mxu0 0.0
  %355 = vmatprep.subr.mxu0 0.0
  %356 = vmatpush1.msra.mxu0 0.0
  %357 = vmatprep.subr.mxu0 0.0
  %358 = vmatpush1.msra.mxu0 0.0
  %359 = vmatprep.subr.mxu0 0.0
  %360 = vmatpush1.msra.mxu0 0.0
  %361 = vmatprep.subr.mxu0 0.0
  %362 = vmatpush1.msra.mxu0 0.0
  %363 = vmatprep.subr.mxu0 0.0
  %364 = vmatpush1.msra.mxu0 0.0
  %365 = vmatprep.subr.mxu0 0.0
  %366 = vmatpush1.msra.mxu0 0.0
  %367 = vmatprep.subr.mxu0 0.0
  %368 = vmatpush1.msra.mxu0 0.0
  %369 = vmatprep.subr.mxu0 0.0
  %370 = vmatpush1.msra.mxu0 0.0
  %371 = vmatprep.subr.mxu0 0.0
  %372 = vmatpush1.msra.mxu0 0.0
  %373 = vmatprep.subr.mxu0 0.0
  %374 = vmatpush1.msra.mxu0 0.0
  %375 = vmatprep.subr.mxu0 0.0
  %376 = vmatpush1.msra.mxu0 0.0
  %377 = vmatprep.subr.mxu0 0.0
  %378 = vmatpush1.msra.mxu0 0.0
  %379 = vmatprep.subr.mxu0 0.0
  %380 = vmatpush1.msra.mxu0 0.0
  %381 = vmatprep.subr.mxu0 0.0
  %382 = vmatpush1.msra.mxu0 0.0
  %383 = vmatprep.subr.mxu0 0.0
  %384 = vmatpush1.msra.mxu0 0.0
  %385 = vmatprep.subr.mxu0 0.0
  %386 = vmatpush1.msra.mxu0 0.0
  %387 = vmatprep.subr.mxu0 0.0
  %388 = vmatpush1.msra.mxu0 0.0
  %389 = vmatprep.subr.mxu0 0.0
  %390 = vmatpush1.msra.mxu0 0.0
  %391 = vmatprep.subr.mxu0 0.0
  %392 = vmatpush1.msra.mxu0 0.0
  %393 = vmatprep.subr.mxu0 0.0
  %394 = vmatpush1.msra.mxu0 0.0
  %395 = vmatprep.mubr.f32.mxu0 0.0
  %396 = vmatmul.mubr.f32.gmra.mrb[0].mxu0 %v329
  %v397 = vpop.f32.mrb[0].mxu0
  %v398 = vadd.f32 0.0, %v397
  %v399 = vpop.f32.mrb[0].mxu0
  %400 = vdwg.mxu0
  %v402 = vrot.slane %v398, 4
  %v404 = vadd.f32 %v101, %v402
  %v405 = vxor.u32 %v404, 2147483648
  %v406 = vmul.f32 %v405, 1.442695
  %v407 = vpow.pop %v406
  %v408 = vadd.f32 %v407, 1.0
  %v409 = vrcp.pop %v408
  %v410 = vmul.f32 1.0, %v409
  %v411 = vtanh.pop %v404
  %v413 = vrot.slane %v313, 6
  %v415 = vmul.f32 %v410, %v413
  %417 = vrot.lane.b32.xlu0 %v411, 112
  %v418 = vpop.permute.xlu0 %417
  %v420 = vmul.f32 %v410, %v418
  %422 = vrot.lane.b32.xlu0 %v420, 8
  %v423 = vpop.permute.xlu0 %422
  %v425 = vadd.f32 %v415, %v423
  %v426 = vtanh.pop %v425
  %428 = vrot.lane.b32.xlu0 %v426, 16
  %v429 = vpop.permute.xlu0 %428
  %v431 = vmul.f32 %v410, %v429
  %433 = vrot.lane.b32.xlu0 %v431, 104
  %v434 = vpop.permute.xlu0 %433
  %vm436 = vcmask 62468
  %437 = vst.msk [vmem:[#allocation2] sm:$0x30] %vm436, %v434
  %v438 = vrot.slane %v431, 4
  %439 = vrot.lane.b32.xlu0 %v438, 104
  %v440 = vpop.permute.xlu0 %439
  %v441 = vsel %vm27, %v440, 0
  %443 = vmatprep.subr.mxu0 0.0
  %444 = vmatpush1.msra.mxu0 %v11
  %445 = vmatprep.subr.mxu0 0.0
  %446 = vmatpush1.msra.mxu0 0.0
  %447 = vmatprep.subr.mxu0 0.0
  %448 = vmatpush1.msra.mxu0 0.0
  %449 = vmatprep.subr.mxu0 0.0
  %450 = vmatpush1.msra.mxu0 0.0
  %451 = vmatprep.subr.mxu0 0.0
  %452 = vmatpush1.msra.mxu0 0.0
  %453 = vmatprep.subr.mxu0 0.0
  %454 = vmatpush1.msra.mxu0 0.0
  %455 = vmatprep.subr.mxu0 0.0
  %456 = vmatpush1.msra.mxu0 0.0
  %457 = vmatprep.subr.mxu0 0.0
  %458 = vmatpush1.msra.mxu0 0.0
  %459 = vmatprep.subr.mxu0 0.0
  %460 = vmatpush1.msra.mxu0 0.0
  %461 = vmatprep.subr.mxu0 0.0
  %462 = vmatpush1.msra.mxu0 0.0
  %463 = vmatprep.subr.mxu0 0.0
  %464 = vmatpush1.msra.mxu0 0.0
  %465 = vmatprep.subr.mxu0 0.0
  %466 = vmatpush1.msra.mxu0 0.0
  %467 = vmatprep.subr.mxu0 0.0
  %468 = vmatpush1.msra.mxu0 0.0
  %469 = vmatprep.subr.mxu0 0.0
  %470 = vmatpush1.msra.mxu0 0.0
  %471 = vmatprep.subr.mxu0 0.0
  %472 = vmatpush1.msra.mxu0 0.0
  %473 = vmatprep.subr.mxu0 0.0
  %474 = vmatpush1.msra.mxu0 0.0
  %475 = vmatprep.subr.mxu0 0.0
  %476 = vmatpush1.msra.mxu0 0.0
  %477 = vmatprep.subr.mxu0 0.0
  %478 = vmatpush1.msra.mxu0 0.0
  %479 = vmatprep.subr.mxu0 0.0
  %480 = vmatpush1.msra.mxu0 0.0
  %481 = vmatprep.subr.mxu0 0.0
  %482 = vmatpush1.msra.mxu0 0.0
  %483 = vmatprep.subr.mxu0 0.0
  %484 = vmatpush1.msra.mxu0 0.0
  %485 = vmatprep.subr.mxu0 0.0
  %486 = vmatpush1.msra.mxu0 0.0
  %487 = vmatprep.subr.mxu0 0.0
  %488 = vmatpush1.msra.mxu0 0.0
  %489 = vmatprep.subr.mxu0 0.0
  %490 = vmatpush1.msra.mxu0 0.0
  %491 = vmatprep.subr.mxu0 0.0
  %492 = vmatpush1.msra.mxu0 0.0
  %493 = vmatprep.subr.mxu0 0.0
  %494 = vmatpush1.msra.mxu0 0.0
  %495 = vmatprep.subr.mxu0 0.0
  %496 = vmatpush1.msra.mxu0 0.0
  %497 = vmatprep.subr.mxu0 0.0
  %498 = vmatpush1.msra.mxu0 0.0
  %499 = vmatprep.subr.mxu0 0.0
  %500 = vmatpush1.msra.mxu0 0.0
  %501 = vmatprep.subr.mxu0 0.0
  %502 = vmatpush1.msra.mxu0 0.0
  %503 = vmatprep.subr.mxu0 0.0
  %504 = vmatpush1.msra.mxu0 0.0
  %505 = vmatprep.subr.mxu0 0.0
  %506 = vmatpush1.msra.mxu0 0.0
  %507 = vmatprep.mubr.f32.mxu0 0.0
  %508 = vmatmul.mubr.f32.gmra.mrb[0].mxu0 %v441
  %v509 = vpop.f32.mrb[0].mxu0
  %v510 = vadd.f32 0.0, %v509
  %v511 = vpop.f32.mrb[0].mxu0
  %512 = vdwg.mxu0
  %v514 = vrot.slane %v510, 2
  %v516 = vadd.f32 %v101, %v514
  %v517 = vxor.u32 %v516, 2147483648
  %v518 = vmul.f32 %v517, 1.442695
  %v519 = vpow.pop %v518
  %v520 = vadd.f32 %v519, 1.0
  %v521 = vrcp.pop %v520
  %v522 = vmul.f32 1.0, %v521
  %v523 = vtanh.pop %v516
  %v525 = vrot.slane %v425, 6
  %v527 = vmul.f32 %v522, %v525
  %529 = vrot.lane.b32.xlu0 %v523, 112
  %v530 = vpop.permute.xlu0 %529
  %v532 = vmul.f32 %v522, %v530
  %534 = vrot.lane.b32.xlu0 %v532, 8
  %v535 = vpop.permute.xlu0 %534
  %v537 = vadd.f32 %v527, %v535
  %v538 = vtanh.pop %v537
  %540 = vrot.lane.b32.xlu0 %v538, 16
  %v541 = vpop.permute.xlu0 %540
  %v543 = vmul.f32 %v522, %v541
  %545 = vrot.lane.b32.xlu0 %v543, 104
  %v546 = vpop.permute.xlu0 %545
  %vm548 = vcmask 64518
  %549 = vst.msk [vmem:[#allocation2] sm:$0xc0] %vm548, %v546
  %v550 = vrot.slane %v543, 6
  %551 = vrot.lane.b32.xlu0 %v550, 104
  %v552 = vpop.permute.xlu0 %551
  %v553 = vsel %vm27, %v552, 0
  %555 = vmatprep.subr.mxu0 0.0
  %556 = vmatpush1.msra.mxu0 %v11
  %557 = vmatprep.subr.mxu0 0.0
  %558 = vmatpush1.msra.mxu0 0.0
  %559 = vmatprep.subr.mxu0 0.0
  %560 = vmatpush1.msra.mxu0 0.0
  %561 = vmatprep.subr.mxu0 0.0
  %562 = vmatpush1.msra.mxu0 0.0
  %563 = vmatprep.subr.mxu0 0.0
  %564 = vmatpush1.msra.mxu0 0.0
  %565 = vmatprep.subr.mxu0 0.0
  %566 = vmatpush1.msra.mxu0 0.0
  %567 = vmatprep.subr.mxu0 0.0
  %568 = vmatpush1.msra.mxu0 0.0
  %569 = vmatprep.subr.mxu0 0.0
  %570 = vmatpush1.msra.mxu0 0.0
  %571 = vmatprep.subr.mxu0 0.0
  %572 = vmatpush1.msra.mxu0 0.0
  %573 = vmatprep.subr.mxu0 0.0
  %574 = vmatpush1.msra.mxu0 0.0
  %575 = vmatprep.subr.mxu0 0.0
  %576 = vmatpush1.msra.mxu0 0.0
  %577 = vmatprep.subr.mxu0 0.0
  %578 = vmatpush1.msra.mxu0 0.0
  %579 = vmatprep.subr.mxu0 0.0
  %580 = vmatpush1.msra.mxu0 0.0
  %581 = vmatprep.subr.mxu0 0.0
  %582 = vmatpush1.msra.mxu0 0.0
  %583 = vmatprep.subr.mxu0 0.0
  %584 = vmatpush1.msra.mxu0 0.0
  %585 = vmatprep.subr.mxu0 0.0
  %586 = vmatpush1.msra.mxu0 0.0
  %587 = vmatprep.subr.mxu0 0.0
  %588 = vmatpush1.msra.mxu0 0.0
  %589 = vmatprep.subr.mxu0 0.0
  %590 = vmatpush1.msra.mxu0 0.0
  %591 = vmatprep.subr.mxu0 0.0
  %592 = vmatpush1.msra.mxu0 0.0
  %593 = vmatprep.subr.mxu0 0.0
  %594 = vmatpush1.msra.mxu0 0.0
  %595 = vmatprep.subr.mxu0 0.0
  %596 = vmatpush1.msra.mxu0 0.0
  %597 = vmatprep.subr.mxu0 0.0
  %598 = vmatpush1.msra.mxu0 0.0
  %599 = vmatprep.subr.mxu0 0.0
  %600 = vmatpush1.msra.mxu0 0.0
  %601 = vmatprep.subr.mxu0 0.0
  %602 = vmatpush1.msra.mxu0 0.0
  %603 = vmatprep.subr.mxu0 0.0
  %604 = vmatpush1.msra.mxu0 0.0
  %605 = vmatprep.subr.mxu0 0.0
  %606 = vmatpush1.msra.mxu0 0.0
  %607 = vmatprep.subr.mxu0 0.0
  %608 = vmatpush1.msra.mxu0 0.0
  %609 = vmatprep.subr.mxu0 0.0
  %610 = vmatpush1.msra.mxu0 0.0
  %611 = vmatprep.subr.mxu0 0.0
  %612 = vmatpush1.msra.mxu0 0.0
  %613 = vmatprep.subr.mxu0 0.0
  %614 = vmatpush1.msra.mxu0 0.0
  %615 = vmatprep.subr.mxu0 0.0
  %616 = vmatpush1.msra.mxu0 0.0
  %617 = vmatprep.subr.mxu0 0.0
  %618 = vmatpush1.msra.mxu0 0.0
  %619 = vmatprep.mubr.f32.mxu0 0.0
  %620 = vmatmul.mubr.f32.gmra.mrb[0].mxu0 %v553
  %v621 = vpop.f32.mrb[0].mxu0
  %v622 = vadd.f32 0.0, %v621
  %v623 = vpop.f32.mrb[0].mxu0
  %624 = vdwg.mxu0
  %v625 = vadd.f32 %v106, %v622
  %v626 = vxor.u32 %v625, 2147483648
  %v627 = vmul.f32 %v626, 1.442695
  %v628 = vpow.pop %v627
  %v629 = vadd.f32 %v628, 1.0
  %v630 = vrcp.pop %v629
  %v631 = vmul.f32 1.0, %v630
  %v632 = vtanh.pop %v625
  %v634 = vrot.slane %v537, 6
  %v636 = vmul.f32 %v631, %v634
  %638 = vrot.lane.b32.xlu0 %v632, 112
  %v639 = vpop.permute.xlu0 %638
  %v641 = vmul.f32 %v631, %v639
  %643 = vrot.lane.b32.xlu0 %v641, 8
  %v644 = vpop.permute.xlu0 %643
  %v646 = vadd.f32 %v636, %v644
  %v647 = vtanh.pop %v646
  %649 = vrot.lane.b32.xlu0 %v647, 16
  %v650 = vpop.permute.xlu0 %649
  %v652 = vmul.f32 %v631, %v650
  %654 = vrot.lane.b32.xlu0 %v652, 104
  %v655 = vpop.permute.xlu0 %654
  %657 = vst.msk [vmem:[#allocation2 + $0x8] sm:$0x3] %vm215, %v655
  %v658 = vsel %vm27, %v655, 0
  %660 = vmatprep.subr.mxu0 0.0
  %661 = vmatpush1.msra.mxu0 %v11
  %662 = vmatprep.subr.mxu0 0.0
  %663 = vmatpush1.msra.mxu0 0.0
  %664 = vmatprep.subr.mxu0 0.0
  %665 = vmatpush1.msra.mxu0 0.0
  %666 = vmatprep.subr.mxu0 0.0
  %667 = vmatpush1.msra.mxu0 0.0
  %668 = vmatprep.subr.mxu0 0.0
  %669 = vmatpush1.msra.mxu0 0.0
  %670 = vmatprep.subr.mxu0 0.0
  %671 = vmatpush1.msra.mxu0 0.0
  %672 = vmatprep.subr.mxu0 0.0
  %673 = vmatpush1.msra.mxu0 0.0
  %674 = vmatprep.subr.mxu0 0.0
  %675 = vmatpush1.msra.mxu0 0.0
  %676 = vmatprep.subr.mxu0 0.0
  %677 = vmatpush1.msra.mxu0 0.0
  %678 = vmatprep.subr.mxu0 0.0
  %679 = vmatpush1.msra.mxu0 0.0
  %680 = vmatprep.subr.mxu0 0.0
  %681 = vmatpush1.msra.mxu0 0.0
  %682 = vmatprep.subr.mxu0 0.0
  %683 = vmatpush1.msra.mxu0 0.0
  %684 = vmatprep.subr.mxu0 0.0
  %685 = vmatpush1.msra.mxu0 0.0
  %686 = vmatprep.subr.mxu0 0.0
  %687 = vmatpush1.msra.mxu0 0.0
  %688 = vmatprep.subr.mxu0 0.0
  %689 = vmatpush1.msra.mxu0 0.0
  %690 = vmatprep.subr.mxu0 0.0
  %691 = vmatpush1.msra.mxu0 0.0
  %692 = vmatprep.subr.mxu0 0.0
  %693 = vmatpush1.msra.mxu0 0.0
  %694 = vmatprep.subr.mxu0 0.0
  %695 = vmatpush1.msra.mxu0 0.0
  %696 = vmatprep.subr.mxu0 0.0
  %697 = vmatpush1.msra.mxu0 0.0
  %698 = vmatprep.subr.mxu0 0.0
  %699 = vmatpush1.msra.mxu0 0.0
  %700 = vmatprep.subr.mxu0 0.0
  %701 = vmatpush1.msra.mxu0 0.0
  %702 = vmatprep.subr.mxu0 0.0
  %703 = vmatpush1.msra.mxu0 0.0
  %704 = vmatprep.subr.mxu0 0.0
  %705 = vmatpush1.msra.mxu0 0.0
  %706 = vmatprep.subr.mxu0 0.0
  %707 = vmatpush1.msra.mxu0 0.0
  %708 = vmatprep.subr.mxu0 0.0
  %709 = vmatpush1.msra.mxu0 0.0
  %710 = vmatprep.subr.mxu0 0.0
  %711 = vmatpush1.msra.mxu0 0.0
  %712 = vmatprep.subr.mxu0 0.0
  %713 = vmatpush1.msra.mxu0 0.0
  %714 = vmatprep.subr.mxu0 0.0
  %715 = vmatpush1.msra.mxu0 0.0
  %716 = vmatprep.subr.mxu0 0.0
  %717 = vmatpush1.msra.mxu0 0.0
  %718 = vmatprep.subr.mxu0 0.0
  %719 = vmatpush1.msra.mxu0 0.0
  %720 = vmatprep.subr.mxu0 0.0
  %721 = vmatpush1.msra.mxu0 0.0
  %722 = vmatprep.subr.mxu0 0.0
  %723 = vmatpush1.msra.mxu0 0.0
  %724 = vmatprep.mubr.f32.mxu0 0.0
  %725 = vmatmul.mubr.f32.gmra.mrb[0].mxu0 %v658
  %v726 = vpop.f32.mrb[0].mxu0
  %v727 = vadd.f32 0.0, %v726
  %v728 = vpop.f32.mrb[0].mxu0
  %729 = vdwg.mxu0
  %v731 = vrot.slane %v727, 6
  %v733 = vadd.f32 %v106, %v731
  %v734 = vxor.u32 %v733, 2147483648
  %v735 = vmul.f32 %v734, 1.442695
  %v736 = vpow.pop %v735
  %v737 = vadd.f32 %v736, 1.0
  %v738 = vrcp.pop %v737
  %v739 = vmul.f32 1.0, %v738
  %v740 = vtanh.pop %v733
  %v742 = vrot.slane %v646, 6
  %v744 = vmul.f32 %v739, %v742
  %746 = vrot.lane.b32.xlu0 %v740, 112
  %v747 = vpop.permute.xlu0 %746
  %v749 = vmul.f32 %v739, %v747
  %751 = vrot.lane.b32.xlu0 %v749, 8
  %v752 = vpop.permute.xlu0 %751
  %v754 = vadd.f32 %v744, %v752
  %v755 = vtanh.pop %v754
  %757 = vrot.lane.b32.xlu0 %v755, 16
  %v758 = vpop.permute.xlu0 %757
  %v760 = vmul.f32 %v739, %v758
  %762 = vrot.lane.b32.xlu0 %v760, 104
  %v763 = vpop.permute.xlu0 %762
  %765 = vst.msk [vmem:[#allocation2 + $0x8] sm:$0xc] %vm324, %v763
  %v766 = vrot.slane %v760, 2
  %767 = vrot.lane.b32.xlu0 %v766, 104
  %v768 = vpop.permute.xlu0 %767
  %v769 = vsel %vm27, %v768, 0
  %771 = vmatprep.subr.mxu0 0.0
  %772 = vmatpush1.msra.mxu0 %v11
  %773 = vmatprep.subr.mxu0 0.0
  %774 = vmatpush1.msra.mxu0 0.0
  %775 = vmatprep.subr.mxu0 0.0
  %776 = vmatpush1.msra.mxu0 0.0
  %777 = vmatprep.subr.mxu0 0.0
  %778 = vmatpush1.msra.mxu0 0.0
  %779 = vmatprep.subr.mxu0 0.0
  %780 = vmatpush1.msra.mxu0 0.0
  %781 = vmatprep.subr.mxu0 0.0
  %782 = vmatpush1.msra.mxu0 0.0
  %783 = vmatprep.subr.mxu0 0.0
  %784 = vmatpush1.msra.mxu0 0.0
  %785 = vmatprep.subr.mxu0 0.0
  %786 = vmatpush1.msra.mxu0 0.0
  %787 = vmatprep.subr.mxu0 0.0
  %788 = vmatpush1.msra.mxu0 0.0
  %789 = vmatprep.subr.mxu0 0.0
  %790 = vmatpush1.msra.mxu0 0.0
  %791 = vmatprep.subr.mxu0 0.0
  %792 = vmatpush1.msra.mxu0 0.0
  %793 = vmatprep.subr.mxu0 0.0
  %794 = vmatpush1.msra.mxu0 0.0
  %795 = vmatprep.subr.mxu0 0.0
  %796 = vmatpush1.msra.mxu0 0.0
  %797 = vmatprep.subr.mxu0 0.0
  %798 = vmatpush1.msra.mxu0 0.0
  %799 = vmatprep.subr.mxu0 0.0
  %800 = vmatpush1.msra.mxu0 0.0
  %801 = vmatprep.subr.mxu0 0.0
  %802 = vmatpush1.msra.mxu0 0.0
  %803 = vmatprep.subr.mxu0 0.0
  %804 = vmatpush1.msra.mxu0 0.0
  %805 = vmatprep.subr.mxu0 0.0
  %806 = vmatpush1.msra.mxu0 0.0
  %807 = vmatprep.subr.mxu0 0.0
  %808 = vmatpush1.msra.mxu0 0.0
  %809 = vmatprep.subr.mxu0 0.0
  %810 = vmatpush1.msra.mxu0 0.0
  %811 = vmatprep.subr.mxu0 0.0
  %812 = vmatpush1.msra.mxu0 0.0
  %813 = vmatprep.subr.mxu0 0.0
  %814 = vmatpush1.msra.mxu0 0.0
  %815 = vmatprep.subr.mxu0 0.0
  %816 = vmatpush1.msra.mxu0 0.0
  %817 = vmatprep.subr.mxu0 0.0
  %818 = vmatpush1.msra.mxu0 0.0
  %819 = vmatprep.subr.mxu0 0.0
  %820 = vmatpush1.msra.mxu0 0.0
  %821 = vmatprep.subr.mxu0 0.0
  %822 = vmatpush1.msra.mxu0 0.0
  %823 = vmatprep.subr.mxu0 0.0
  %824 = vmatpush1.msra.mxu0 0.0
  %825 = vmatprep.subr.mxu0 0.0
  %826 = vmatpush1.msra.mxu0 0.0
  %827 = vmatprep.subr.mxu0 0.0
  %828 = vmatpush1.msra.mxu0 0.0
  %829 = vmatprep.subr.mxu0 0.0
  %830 = vmatpush1.msra.mxu0 0.0
  %831 = vmatprep.subr.mxu0 0.0
  %832 = vmatpush1.msra.mxu0 0.0
  %833 = vmatprep.subr.mxu0 0.0
  %834 = vmatpush1.msra.mxu0 0.0
  %835 = vmatprep.mubr.f32.mxu0 0.0
  %836 = vmatmul.mubr.f32.gmra.mrb[0].mxu0 %v769
  %v837 = vpop.f32.mrb[0].mxu0
  %v838 = vadd.f32 0.0, %v837
  %v839 = vpop.f32.mrb[0].mxu0
  %840 = vdwg.mxu0
  %v842 = vrot.slane %v838, 4
  %v844 = vadd.f32 %v106, %v842
  %v845 = vxor.u32 %v844, 2147483648
  %v846 = vmul.f32 %v845, 1.442695
  %v847 = vpow.pop %v846
  %v848 = vadd.f32 %v847, 1.0
  %v849 = vrcp.pop %v848
  %v850 = vmul.f32 1.0, %v849
  %v851 = vtanh.pop %v844
  %v853 = vrot.slane %v754, 6
  %v855 = vmul.f32 %v850, %v853
  %857 = vrot.lane.b32.xlu0 %v851, 112
  %v858 = vpop.permute.xlu0 %857
  %v860 = vmul.f32 %v850, %v858
  %862 = vrot.lane.b32.xlu0 %v860, 8
  %v863 = vpop.permute.xlu0 %862
  %v865 = vadd.f32 %v855, %v863
  %v866 = vtanh.pop %v865
  %868 = vrot.lane.b32.xlu0 %v866, 16
  %v869 = vpop.permute.xlu0 %868
  %v871 = vmul.f32 %v850, %v869
  %873 = vrot.lane.b32.xlu0 %v871, 104
  %v874 = vpop.permute.xlu0 %873
  %876 = vst.msk [vmem:[#allocation2 + $0x8] sm:$0x30] %vm436, %v874
  %v877 = vrot.slane %v871, 4
  %878 = vrot.lane.b32.xlu0 %v877, 104
  %v879 = vpop.permute.xlu0 %878
  %v880 = vsel %vm27, %v879, 0
  %882 = vmatprep.subr.mxu0 0.0
  %883 = vmatpush1.msra.mxu0 %v11
  %884 = vmatprep.subr.mxu0 0.0
  %885 = vmatpush1.msra.mxu0 0.0
  %886 = vmatprep.subr.mxu0 0.0
  %887 = vmatpush1.msra.mxu0 0.0
  %888 = vmatprep.subr.mxu0 0.0
  %889 = vmatpush1.msra.mxu0 0.0
  %890 = vmatprep.subr.mxu0 0.0
  %891 = vmatpush1.msra.mxu0 0.0
  %892 = vmatprep.subr.mxu0 0.0
  %893 = vmatpush1.msra.mxu0 0.0
  %894 = vmatprep.subr.mxu0 0.0
  %895 = vmatpush1.msra.mxu0 0.0
  %896 = vmatprep.subr.mxu0 0.0
  %897 = vmatpush1.msra.mxu0 0.0
  %898 = vmatprep.subr.mxu0 0.0
  %899 = vmatpush1.msra.mxu0 0.0
  %900 = vmatprep.subr.mxu0 0.0
  %901 = vmatpush1.msra.mxu0 0.0
  %902 = vmatprep.subr.mxu0 0.0
  %903 = vmatpush1.msra.mxu0 0.0
  %904 = vmatprep.subr.mxu0 0.0
  %905 = vmatpush1.msra.mxu0 0.0
  %906 = vmatprep.subr.mxu0 0.0
  %907 = vmatpush1.msra.mxu0 0.0
  %908 = vmatprep.subr.mxu0 0.0
  %909 = vmatpush1.msra.mxu0 0.0
  %910 = vmatprep.subr.mxu0 0.0
  %911 = vmatpush1.msra.mxu0 0.0
  %912 = vmatprep.subr.mxu0 0.0
  %913 = vmatpush1.msra.mxu0 0.0
  %914 = vmatprep.subr.mxu0 0.0
  %915 = vmatpush1.msra.mxu0 0.0
  %916 = vmatprep.subr.mxu0 0.0
  %917 = vmatpush1.msra.mxu0 0.0
  %918 = vmatprep.subr.mxu0 0.0
  %919 = vmatpush1.msra.mxu0 0.0
  %920 = vmatprep.subr.mxu0 0.0
  %921 = vmatpush1.msra.mxu0 0.0
  %922 = vmatprep.subr.mxu0 0.0
  %923 = vmatpush1.msra.mxu0 0.0
  %924 = vmatprep.subr.mxu0 0.0
  %925 = vmatpush1.msra.mxu0 0.0
  %926 = vmatprep.subr.mxu0 0.0
  %927 = vmatpush1.msra.mxu0 0.0
  %928 = vmatprep.subr.mxu0 0.0
  %929 = vmatpush1.msra.mxu0 0.0
  %930 = vmatprep.subr.mxu0 0.0
  %931 = vmatpush1.msra.mxu0 0.0
  %932 = vmatprep.subr.mxu0 0.0
  %933 = vmatpush1.msra.mxu0 0.0
  %934 = vmatprep.subr.mxu0 0.0
  %935 = vmatpush1.msra.mxu0 0.0
  %936 = vmatprep.subr.mxu0 0.0
  %937 = vmatpush1.msra.mxu0 0.0
  %938 = vmatprep.subr.mxu0 0.0
  %939 = vmatpush1.msra.mxu0 0.0
  %940 = vmatprep.subr.mxu0 0.0
  %941 = vmatpush1.msra.mxu0 0.0
  %942 = vmatprep.subr.mxu0 0.0
  %943 = vmatpush1.msra.mxu0 0.0
  %944 = vmatprep.subr.mxu0 0.0
  %945 = vmatpush1.msra.mxu0 0.0
  %946 = vmatprep.mubr.f32.mxu0 0.0
  %947 = vmatmul.mubr.f32.gmra.mrb[0].mxu0 %v880
  %v948 = vpop.f32.mrb[0].mxu0
  %v949 = vadd.f32 0.0, %v948
  %v950 = vpop.f32.mrb[0].mxu0
  %951 = vdwg.mxu0
  %v953 = vrot.slane %v949, 2
  %v955 = vadd.f32 %v106, %v953
  %v956 = vxor.u32 %v955, 2147483648
  %v957 = vmul.f32 %v956, 1.442695
  %v958 = vpow.pop %v957
  %v959 = vadd.f32 %v958, 1.0
  %v960 = vrcp.pop %v959
  %v961 = vmul.f32 1.0, %v960
  %v962 = vtanh.pop %v955
  %v964 = vrot.slane %v865, 6
  %v966 = vmul.f32 %v961, %v964
  %968 = vrot.lane.b32.xlu0 %v962, 112
  %v969 = vpop.permute.xlu0 %968
  %v971 = vmul.f32 %v961, %v969
  %973 = vrot.lane.b32.xlu0 %v971, 8
  %v974 = vpop.permute.xlu0 %973
  %v976 = vadd.f32 %v966, %v974
  %v977 = vtanh.pop %v976
  %979 = vrot.lane.b32.xlu0 %v977, 16
  %v980 = vpop.permute.xlu0 %979
  %v982 = vmul.f32 %v961, %v980
  %984 = vrot.lane.b32.xlu0 %v982, 104
  %v985 = vpop.permute.xlu0 %984
  %987 = vst.msk [vmem:[#allocation2 + $0x8] sm:$0xc0] %vm548, %v985
  %v988 = vld [vmem:[#allocation2] sm:$0xff]
  %v989 = vld [vmem:[#allocation2 + $0x8] sm:$0xff]
  %v990 = vld [vmem:[%s1 + $0x10] sm:$0xff]
  %v991 = vld [vmem:[%s1 + $0x49] sm:$0x1]
  %v992 = vlaneseq
  %v993 = vshrl.u32 %v992, 7
  %v994 = vsub.s32 0, %v993
  %v995 = vrot.slane %v991, %v994
  %v997 = vsel %vm27, %v988, 0
  %v1000 = vsel %vm27, %v989, 0
  %1002 = vmatprep.subr.mxu0 0.0
  %1003 = vmatpush1.msra.mxu0 %v990
  %1004 = vmatprep.subr.mxu0 0.0
  %1005 = vmatpush1.msra.mxu0 0.0
  %1006 = vmatprep.subr.mxu0 0.0
  %1007 = vmatpush1.msra.mxu0 0.0
  %1008 = vmatprep.subr.mxu0 0.0
  %1009 = vmatpush1.msra.mxu0 0.0
  %1010 = vmatprep.subr.mxu0 0.0
  %1011 = vmatpush1.msra.mxu0 0.0
  %1012 = vmatprep.subr.mxu0 0.0
  %1013 = vmatpush1.msra.mxu0 0.0
  %1014 = vmatprep.subr.mxu0 0.0
  %1015 = vmatpush1.msra.mxu0 0.0
  %1016 = vmatprep.subr.mxu0 0.0
  %1017 = vmatpush1.msra.mxu0 0.0
  %1018 = vmatprep.subr.mxu0 0.0
  %1019 = vmatpush1.msra.mxu0 0.0
  %1020 = vmatprep.subr.mxu0 0.0
  %1021 = vmatpush1.msra.mxu0 0.0
  %1022 = vmatprep.subr.mxu0 0.0
  %1023 = vmatpush1.msra.mxu0 0.0
  %1024 = vmatprep.subr.mxu0 0.0
  %1025 = vmatpush1.msra.mxu0 0.0
  %1026 = vmatprep.subr.mxu0 0.0
  %1027 = vmatpush1.msra.mxu0 0.0
  %1028 = vmatprep.subr.mxu0 0.0
  %1029 = vmatpush1.msra.mxu0 0.0
  %1030 = vmatprep.subr.mxu0 0.0
  %1031 = vmatpush1.msra.mxu0 0.0
  %1032 = vmatprep.subr.mxu0 0.0
  %1033 = vmatpush1.msra.mxu0 0.0
  %1034 = vmatprep.subr.mxu0 0.0
  %1035 = vmatpush1.msra.mxu0 0.0
  %1036 = vmatprep.subr.mxu0 0.0
  %1037 = vmatpush1.msra.mxu0 0.0
  %1038 = vmatprep.subr.mxu0 0.0
  %1039 = vmatpush1.msra.mxu0 0.0
  %1040 = vmatprep.subr.mxu0 0.0
  %1041 = vmatpush1.msra.mxu0 0.0
  %1042 = vmatprep.subr.mxu0 0.0
  %1043 = vmatpush1.msra.mxu0 0.0
  %1044 = vmatprep.subr.mxu0 0.0
  %1045 = vmatpush1.msra.mxu0 0.0
  %1046 = vmatprep.subr.mxu0 0.0
  %1047 = vmatpush1.msra.mxu0 0.0
  %1048 = vmatprep.subr.mxu0 0.0
  %1049 = vmatpush1.msra.mxu0 0.0
  %1050 = vmatprep.subr.mxu0 0.0
  %1051 = vmatpush1.msra.mxu0 0.0
  %1052 = vmatprep.subr.mxu0 0.0
  %1053 = vmatpush1.msra.mxu0 0.0
  %1054 = vmatprep.subr.mxu0 0.0
  %1055 = vmatpush1.msra.mxu0 0.0
  %1056 = vmatprep.subr.mxu0 0.0
  %1057 = vmatpush1.msra.mxu0 0.0
  %1058 = vmatprep.subr.mxu0 0.0
  %1059 = vmatpush1.msra.mxu0 0.0
  %1060 = vmatprep.subr.mxu0 0.0
  %1061 = vmatpush1.msra.mxu0 0.0
  %1062 = vmatprep.subr.mxu0 0.0
  %1063 = vmatpush1.msra.mxu0 0.0
  %1064 = vmatprep.subr.mxu0 0.0
  %1065 = vmatpush1.msra.mxu0 0.0
  %1066 = vmatprep.mubr.f32.mxu0 0.0
  %1067 = vmatmul.mubr.f32.gmra.mrb[0].mxu0 %v997
  %v1068 = vpop.f32.mrb[0].mxu0
  %v1069 = vadd.f32 %v995, %v1068
  %v1070 = vpop.f32.mrb[0].mxu0
  %1071 = vmatprep.mubr.f32.mxu0 0.0
  %1072 = vmatmul.mubr.f32.gmra.mrb[0].mxu0 %v1000
  %v1073 = vpop.f32.mrb[0].mxu0
  %v1074 = vadd.f32 %v995, %v1073
  %v1075 = vpop.f32.mrb[0].mxu0
  %1076 = vdwg.mxu0
  %v1078 = vsel %vm27, %v18, 0
  %1080 = vmatprep.subr.mxu0 0.0
  %1081 = vmatpush1.msra.mxu0 %v12
  %1082 = vmatprep.subr.mxu0 0.0
  %1083 = vmatpush1.msra.mxu0 0.0
  %1084 = vmatprep.subr.mxu0 0.0
  %1085 = vmatpush1.msra.mxu0 0.0
  %1086 = vmatprep.subr.mxu0 0.0
  %1087 = vmatpush1.msra.mxu0 0.0
  %1088 = vmatprep.subr.mxu0 0.0
  %1089 = vmatpush1.msra.mxu0 0.0
  %1090 = vmatprep.subr.mxu0 0.0
  %1091 = vmatpush1.msra.mxu0 0.0
  %1092 = vmatprep.subr.mxu0 0.0
  %1093 = vmatpush1.msra.mxu0 0.0
  %1094 = vmatprep.subr.mxu0 0.0
  %1095 = vmatpush1.msra.mxu0 0.0
  %1096 = vmatprep.subr.mxu0 0.0
  %1097 = vmatpush1.msra.mxu0 0.0
  %1098 = vmatprep.subr.mxu0 0.0
  %1099 = vmatpush1.msra.mxu0 0.0
  %1100 = vmatprep.subr.mxu0 0.0
  %1101 = vmatpush1.msra.mxu0 0.0
  %1102 = vmatprep.subr.mxu0 0.0
  %1103 = vmatpush1.msra.mxu0 0.0
  %1104 = vmatprep.subr.mxu0 0.0
  %1105 = vmatpush1.msra.mxu0 0.0
  %1106 = vmatprep.subr.mxu0 0.0
  %1107 = vmatpush1.msra.mxu0 0.0
  %1108 = vmatprep.subr.mxu0 0.0
  %1109 = vmatpush1.msra.mxu0 0.0
  %1110 = vmatprep.subr.mxu0 0.0
  %1111 = vmatpush1.msra.mxu0 0.0
  %1112 = vmatprep.subr.mxu0 0.0
  %1113 = vmatpush1.msra.mxu0 0.0
  %1114 = vmatprep.subr.mxu0 0.0
  %1115 = vmatpush1.msra.mxu0 0.0
  %1116 = vmatprep.subr.mxu0 0.0
  %1117 = vmatpush1.msra.mxu0 0.0
  %1118 = vmatprep.subr.mxu0 0.0
  %1119 = vmatpush1.msra.mxu0 0.0
  %1120 = vmatprep.subr.mxu0 0.0
  %1121 = vmatpush1.msra.mxu0 0.0
  %1122 = vmatprep.subr.mxu0 0.0
  %1123 = vmatpush1.msra.mxu0 0.0
  %1124 = vmatprep.subr.mxu0 0.0
  %1125 = vmatpush1.msra.mxu0 0.0
  %1126 = vmatprep.subr.mxu0 0.0
  %1127 = vmatpush1.msra.mxu0 0.0
  %1128 = vmatprep.subr.mxu0 0.0
  %1129 = vmatpush1.msra.mxu0 0.0
  %1130 = vmatprep.subr.mxu0 0.0
  %1131 = vmatpush1.msra.mxu0 0.0
  %1132 = vmatprep.subr.mxu0 0.0
  %1133 = vmatpush1.msra.mxu0 0.0
  %1134 = vmatprep.subr.mxu0 0.0
  %1135 = vmatpush1.msra.mxu0 0.0
  %1136 = vmatprep.subr.mxu0 0.0
  %1137 = vmatpush1.msra.mxu0 0.0
  %1138 = vmatprep.subr.mxu0 0.0
  %1139 = vmatpush1.msra.mxu0 0.0
  %1140 = vmatprep.subr.mxu0 0.0
  %1141 = vmatpush1.msra.mxu0 0.0
  %1142 = vmatprep.subr.mxu0 0.0
  %1143 = vmatpush1.msra.mxu0 0.0
  %1144 = vmatprep.mubr.f32.mxu0 0.0
  %1145 = vmatmul.mubr.f32.gmra.mrb[0].mxu0 %v1078
  %v1146 = vpop.f32.mrb[0].mxu0
  %v1147 = vadd.f32 0.0, %v1146
  %v1148 = vpop.f32.mrb[0].mxu0
  %1149 = vdwg.mxu0
  %v1150 = vadd.f32 %v1069, %v1147
  %v1151 = vxor.u32 %v1150, 2147483648
  %v1152 = vmul.f32 %v1151, 1.442695
  %v1153 = vpow.pop %v1152
  %v1154 = vadd.f32 %v1153, 1.0
  %v1155 = vrcp.pop %v1154
  %v1156 = vmul.f32 1.0, %v1155
  %v1157 = vtanh.pop %v1150
  %1159 = vrot.lane.b32.xlu0 %v20, 8
  %v1160 = vpop.permute.xlu0 %1159
  %v1162 = vmul.f32 %v1156, %v1160
  %1164 = vrot.lane.b32.xlu0 %v1157, 112
  %v1165 = vpop.permute.xlu0 %1164
  %v1167 = vmul.f32 %v1156, %v1165
  %1169 = vrot.lane.b32.xlu0 %v1167, 8
  %v1170 = vpop.permute.xlu0 %1169
  %v1172 = vadd.f32 %v1162, %v1170
  %v1173 = vtanh.pop %v1172
  %1175 = vrot.lane.b32.xlu0 %v1173, 16
  %v1176 = vpop.permute.xlu0 %1175
  %v1178 = vmul.f32 %v1156, %v1176
  %1180 = vrot.lane.b32.xlu0 %v1178, 104
  %v1181 = vpop.permute.xlu0 %1180
  %1183 = vst.msk [vmem:[#allocation2] sm:$0x3] %vm215, %v1181
  %v1184 = vsel %vm27, %v1181, 0
  %1186 = vmatprep.subr.mxu0 0.0
  %1187 = vmatpush1.msra.mxu0 %v12
  %1188 = vmatprep.subr.mxu0 0.0
  %1189 = vmatpush1.msra.mxu0 0.0
  %1190 = vmatprep.subr.mxu0 0.0
  %1191 = vmatpush1.msra.mxu0 0.0
  %1192 = vmatprep.subr.mxu0 0.0
  %1193 = vmatpush1.msra.mxu0 0.0
  %1194 = vmatprep.subr.mxu0 0.0
  %1195 = vmatpush1.msra.mxu0 0.0
  %1196 = vmatprep.subr.mxu0 0.0
  %1197 = vmatpush1.msra.mxu0 0.0
  %1198 = vmatprep.subr.mxu0 0.0
  %1199 = vmatpush1.msra.mxu0 0.0
  %1200 = vmatprep.subr.mxu0 0.0
  %1201 = vmatpush1.msra.mxu0 0.0
  %1202 = vmatprep.subr.mxu0 0.0
  %1203 = vmatpush1.msra.mxu0 0.0
  %1204 = vmatprep.subr.mxu0 0.0
  %1205 = vmatpush1.msra.mxu0 0.0
  %1206 = vmatprep.subr.mxu0 0.0
  %1207 = vmatpush1.msra.mxu0 0.0
  %1208 = vmatprep.subr.mxu0 0.0
  %1209 = vmatpush1.msra.mxu0 0.0
  %1210 = vmatprep.subr.mxu0 0.0
  %1211 = vmatpush1.msra.mxu0 0.0
  %1212 = vmatprep.subr.mxu0 0.0
  %1213 = vmatpush1.msra.mxu0 0.0
  %1214 = vmatprep.subr.mxu0 0.0
  %1215 = vmatpush1.msra.mxu0 0.0
  %1216 = vmatprep.subr.mxu0 0.0
  %1217 = vmatpush1.msra.mxu0 0.0
  %1218 = vmatprep.subr.mxu0 0.0
  %1219 = vmatpush1.msra.mxu0 0.0
  %1220 = vmatprep.subr.mxu0 0.0
  %1221 = vmatpush1.msra.mxu0 0.0
  %1222 = vmatprep.subr.mxu0 0.0
  %1223 = vmatpush1.msra.mxu0 0.0
  %1224 = vmatprep.subr.mxu0 0.0
  %1225 = vmatpush1.msra.mxu0 0.0
  %1226 = vmatprep.subr.mxu0 0.0
  %1227 = vmatpush1.msra.mxu0 0.0
  %1228 = vmatprep.subr.mxu0 0.0
  %1229 = vmatpush1.msra.mxu0 0.0
  %1230 = vmatprep.subr.mxu0 0.0
  %1231 = vmatpush1.msra.mxu0 0.0
  %1232 = vmatprep.subr.mxu0 0.0
  %1233 = vmatpush1.msra.mxu0 0.0
  %1234 = vmatprep.subr.mxu0 0.0
  %1235 = vmatpush1.msra.mxu0 0.0
  %1236 = vmatprep.subr.mxu0 0.0
  %1237 = vmatpush1.msra.mxu0 0.0
  %1238 = vmatprep.subr.mxu0 0.0
  %1239 = vmatpush1.msra.mxu0 0.0
  %1240 = vmatprep.subr.mxu0 0.0
  %1241 = vmatpush1.msra.mxu0 0.0
  %1242 = vmatprep.subr.mxu0 0.0
  %1243 = vmatpush1.msra.mxu0 0.0
  %1244 = vmatprep.subr.mxu0 0.0
  %1245 = vmatpush1.msra.mxu0 0.0
  %1246 = vmatprep.subr.mxu0 0.0
  %1247 = vmatpush1.msra.mxu0 0.0
  %1248 = vmatprep.subr.mxu0 0.0
  %1249 = vmatpush1.msra.mxu0 0.0
  %1250 = vmatprep.mubr.f32.mxu0 0.0
  %1251 = vmatmul.mubr.f32.gmra.mrb[0].mxu0 %v1184
  %v1252 = vpop.f32.mrb[0].mxu0
  %v1253 = vadd.f32 0.0, %v1252
  %v1254 = vpop.f32.mrb[0].mxu0
  %1255 = vdwg.mxu0
  %v1257 = vrot.slane %v1253, 6
  %v1259 = vadd.f32 %v1069, %v1257
  %v1260 = vxor.u32 %v1259, 2147483648
  %v1261 = vmul.f32 %v1260, 1.442695
  %v1262 = vpow.pop %v1261
  %v1263 = vadd.f32 %v1262, 1.0
  %v1264 = vrcp.pop %v1263
  %v1265 = vmul.f32 1.0, %v1264
  %v1266 = vtanh.pop %v1259
  %v1268 = vrot.slane %v1172, 6
  %v1270 = vmul.f32 %v1265, %v1268
  %1272 = vrot.lane.b32.xlu0 %v1266, 112
  %v1273 = vpop.permute.xlu0 %1272
  %v1275 = vmul.f32 %v1265, %v1273
  %1277 = vrot.lane.b32.xlu0 %v1275, 8
  %v1278 = vpop.permute.xlu0 %1277
  %v1280 = vadd.f32 %v1270, %v1278
  %v1281 = vtanh.pop %v1280
  %1283 = vrot.lane.b32.xlu0 %v1281, 16
  %v1284 = vpop.permute.xlu0 %1283
  %v1286 = vmul.f32 %v1265, %v1284
  %1288 = vrot.lane.b32.xlu0 %v1286, 104
  %v1289 = vpop.permute.xlu0 %1288
  %1291 = vst.msk [vmem:[#allocation2] sm:$0xc] %vm324, %v1289
  %v1292 = vrot.slane %v1286, 2
  %1293 = vrot.lane.b32.xlu0 %v1292, 104
  %v1294 = vpop.permute.xlu0 %1293
  %v1295 = vsel %vm27, %v1294, 0
  %1297 = vmatprep.subr.mxu0 0.0
  %1298 = vmatpush1.msra.mxu0 %v12
  %1299 = vmatprep.subr.mxu0 0.0
  %1300 = vmatpush1.msra.mxu0 0.0
  %1301 = vmatprep.subr.mxu0 0.0
  %1302 = vmatpush1.msra.mxu0 0.0
  %1303 = vmatprep.subr.mxu0 0.0
  %1304 = vmatpush1.msra.mxu0 0.0
  %1305 = vmatprep.subr.mxu0 0.0
  %1306 = vmatpush1.msra.mxu0 0.0
  %1307 = vmatprep.subr.mxu0 0.0
  %1308 = vmatpush1.msra.mxu0 0.0
  %1309 = vmatprep.subr.mxu0 0.0
  %1310 = vmatpush1.msra.mxu0 0.0
  %1311 = vmatprep.subr.mxu0 0.0
  %1312 = vmatpush1.msra.mxu0 0.0
  %1313 = vmatprep.subr.mxu0 0.0
  %1314 = vmatpush1.msra.mxu0 0.0
  %1315 = vmatprep.subr.mxu0 0.0
  %1316 = vmatpush1.msra.mxu0 0.0
  %1317 = vmatprep.subr.mxu0 0.0
  %1318 = vmatpush1.msra.mxu0 0.0
  %1319 = vmatprep.subr.mxu0 0.0
  %1320 = vmatpush1.msra.mxu0 0.0
  %1321 = vmatprep.subr.mxu0 0.0
  %1322 = vmatpush1.msra.mxu0 0.0
  %1323 = vmatprep.subr.mxu0 0.0
  %1324 = vmatpush1.msra.mxu0 0.0
  %1325 = vmatprep.subr.mxu0 0.0
  %1326 = vmatpush1.msra.mxu0 0.0
  %1327 = vmatprep.subr.mxu0 0.0
  %1328 = vmatpush1.msra.mxu0 0.0
  %1329 = vmatprep.subr.mxu0 0.0
  %1330 = vmatpush1.msra.mxu0 0.0
  %1331 = vmatprep.subr.mxu0 0.0
  %1332 = vmatpush1.msra.mxu0 0.0
  %1333 = vmatprep.subr.mxu0 0.0
  %1334 = vmatpush1.msra.mxu0 0.0
  %1335 = vmatprep.subr.mxu0 0.0
  %1336 = vmatpush1.msra.mxu0 0.0
  %1337 = vmatprep.subr.mxu0 0.0
  %1338 = vmatpush1.msra.mxu0 0.0
  %1339 = vmatprep.subr.mxu0 0.0
  %1340 = vmatpush1.msra.mxu0 0.0
  %1341 = vmatprep.subr.mxu0 0.0
  %1342 = vmatpush1.msra.mxu0 0.0
  %1343 = vmatprep.subr.mxu0 0.0
  %1344 = vmatpush1.msra.mxu0 0.0
  %1345 = vmatprep.subr.mxu0 0.0
  %1346 = vmatpush1.msra.mxu0 0.0
  %1347 = vmatprep.subr.mxu0 0.0
  %1348 = vmatpush1.msra.mxu0 0.0
  %1349 = vmatprep.subr.mxu0 0.0
  %1350 = vmatpush1.msra.mxu0 0.0
  %1351 = vmatprep.subr.mxu0 0.0
  %1352 = vmatpush1.msra.mxu0 0.0
  %1353 = vmatprep.subr.mxu0 0.0
  %1354 = vmatpush1.msra.mxu0 0.0
  %1355 = vmatprep.subr.mxu0 0.0
  %1356 = vmatpush1.msra.mxu0 0.0
  %1357 = vmatprep.subr.mxu0 0.0
  %1358 = vmatpush1.msra.mxu0 0.0
  %1359 = vmatprep.subr.mxu0 0.0
  %1360 = vmatpush1.msra.mxu0 0.0
  %1361 = vmatprep.mubr.f32.mxu0 0.0
  %1362 = vmatmul.mubr.f32.gmra.mrb[0].mxu0 %v1295
  %v1363 = vpop.f32.mrb[0].mxu0
  %v1364 = vadd.f32 0.0, %v1363
  %v1365 = vpop.f32.mrb[0].mxu0
  %1366 = vdwg.mxu0
  %v1368 = vrot.slane %v1364, 4
  %v1370 = vadd.f32 %v1069, %v1368
  %v1371 = vxor.u32 %v1370, 2147483648
  %v1372 = vmul.f32 %v1371, 1.442695
  %v1373 = vpow.pop %v1372
  %v1374 = vadd.f32 %v1373, 1.0
  %v1375 = vrcp.pop %v1374
  %v1376 = vmul.f32 1.0, %v1375
  %v1377 = vtanh.pop %v1370
  %v1379 = vrot.slane %v1280, 6
  %v1381 = vmul.f32 %v1376, %v1379
  %1383 = vrot.lane.b32.xlu0 %v1377, 112
  %v1384 = vpop.permute.xlu0 %1383
  %v1386 = vmul.f32 %v1376, %v1384
  %1388 = vrot.lane.b32.xlu0 %v1386, 8
  %v1389 = vpop.permute.xlu0 %1388
  %v1391 = vadd.f32 %v1381, %v1389
  %v1392 = vtanh.pop %v1391
  %1394 = vrot.lane.b32.xlu0 %v1392, 16
  %v1395 = vpop.permute.xlu0 %1394
  %v1397 = vmul.f32 %v1376, %v1395
  %1399 = vrot.lane.b32.xlu0 %v1397, 104
  %v1400 = vpop.permute.xlu0 %1399
  %1402 = vst.msk [vmem:[#allocation2] sm:$0x30] %vm436, %v1400
  %v1403 = vrot.slane %v1397, 4
  %1404 = vrot.lane.b32.xlu0 %v1403, 104
  %v1405 = vpop.permute.xlu0 %1404
  %v1406 = vsel %vm27, %v1405, 0
  %1408 = vmatprep.subr.mxu0 0.0
  %1409 = vmatpush1.msra.mxu0 %v12
  %1410 = vmatprep.subr.mxu0 0.0
  %1411 = vmatpush1.msra.mxu0 0.0
  %1412 = vmatprep.subr.mxu0 0.0
  %1413 = vmatpush1.msra.mxu0 0.0
  %1414 = vmatprep.subr.mxu0 0.0
  %1415 = vmatpush1.msra.mxu0 0.0
  %1416 = vmatprep.subr.mxu0 0.0
  %1417 = vmatpush1.msra.mxu0 0.0
  %1418 = vmatprep.subr.mxu0 0.0
  %1419 = vmatpush1.msra.mxu0 0.0
  %1420 = vmatprep.subr.mxu0 0.0
  %1421 = vmatpush1.msra.mxu0 0.0
  %1422 = vmatprep.subr.mxu0 0.0
  %1423 = vmatpush1.msra.mxu0 0.0
  %1424 = vmatprep.subr.mxu0 0.0
  %1425 = vmatpush1.msra.mxu0 0.0
  %1426 = vmatprep.subr.mxu0 0.0
  %1427 = vmatpush1.msra.mxu0 0.0
  %1428 = vmatprep.subr.mxu0 0.0
  %1429 = vmatpush1.msra.mxu0 0.0
  %1430 = vmatprep.subr.mxu0 0.0
  %1431 = vmatpush1.msra.mxu0 0.0
  %1432 = vmatprep.subr.mxu0 0.0
  %1433 = vmatpush1.msra.mxu0 0.0
  %1434 = vmatprep.subr.mxu0 0.0
  %1435 = vmatpush1.msra.mxu0 0.0
  %1436 = vmatprep.subr.mxu0 0.0
  %1437 = vmatpush1.msra.mxu0 0.0
  %1438 = vmatprep.subr.mxu0 0.0
  %1439 = vmatpush1.msra.mxu0 0.0
  %1440 = vmatprep.subr.mxu0 0.0
  %1441 = vmatpush1.msra.mxu0 0.0
  %1442 = vmatprep.subr.mxu0 0.0
  %1443 = vmatpush1.msra.mxu0 0.0
  %1444 = vmatprep.subr.mxu0 0.0
  %1445 = vmatpush1.msra.mxu0 0.0
  %1446 = vmatprep.subr.mxu0 0.0
  %1447 = vmatpush1.msra.mxu0 0.0
  %1448 = vmatprep.subr.mxu0 0.0
  %1449 = vmatpush1.msra.mxu0 0.0
  %1450 = vmatprep.subr.mxu0 0.0
  %1451 = vmatpush1.msra.mxu0 0.0
  %1452 = vmatprep.subr.mxu0 0.0
  %1453 = vmatpush1.msra.mxu0 0.0
  %1454 = vmatprep.subr.mxu0 0.0
  %1455 = vmatpush1.msra.mxu0 0.0
  %1456 = vmatprep.subr.mxu0 0.0
  %1457 = vmatpush1.msra.mxu0 0.0
  %1458 = vmatprep.subr.mxu0 0.0
  %1459 = vmatpush1.msra.mxu0 0.0
  %1460 = vmatprep.subr.mxu0 0.0
  %1461 = vmatpush1.msra.mxu0 0.0
  %1462 = vmatprep.subr.mxu0 0.0
  %1463 = vmatpush1.msra.mxu0 0.0
  %1464 = vmatprep.subr.mxu0 0.0
  %1465 = vmatpush1.msra.mxu0 0.0
  %1466 = vmatprep.subr.mxu0 0.0
  %1467 = vmatpush1.msra.mxu0 0.0
  %1468 = vmatprep.subr.mxu0 0.0
  %1469 = vmatpush1.msra.mxu0 0.0
  %1470 = vmatprep.subr.mxu0 0.0
  %1471 = vmatpush1.msra.mxu0 0.0
  %1472 = vmatprep.mubr.f32.mxu0 0.0
  %1473 = vmatmul.mubr.f32.gmra.mrb[0].mxu0 %v1406
  %v1474 = vpop.f32.mrb[0].mxu0
  %v1475 = vadd.f32 0.0, %v1474
  %v1476 = vpop.f32.mrb[0].mxu0
  %1477 = vdwg.mxu0
  %v1479 = vrot.slane %v1475, 2
  %v1481 = vadd.f32 %v1069, %v1479
  %v1482 = vxor.u32 %v1481, 2147483648
  %v1483 = vmul.f32 %v1482, 1.442695
  %v1484 = vpow.pop %v1483
  %v1485 = vadd.f32 %v1484, 1.0
  %v1486 = vrcp.pop %v1485
  %v1487 = vmul.f32 1.0, %v1486
  %v1488 = vtanh.pop %v1481
  %v1490 = vrot.slane %v1391, 6
  %v1492 = vmul.f32 %v1487, %v1490
  %1494 = vrot.lane.b32.xlu0 %v1488, 112
  %v1495 = vpop.permute.xlu0 %1494
  %v1497 = vmul.f32 %v1487, %v1495
  %1499 = vrot.lane.b32.xlu0 %v1497, 8
  %v1500 = vpop.permute.xlu0 %1499
  %v1502 = vadd.f32 %v1492, %v1500
  %v1503 = vtanh.pop %v1502
  %1505 = vrot.lane.b32.xlu0 %v1503, 16
  %v1506 = vpop.permute.xlu0 %1505
  %v1508 = vmul.f32 %v1487, %v1506
  %1510 = vrot.lane.b32.xlu0 %v1508, 104
  %v1511 = vpop.permute.xlu0 %1510
  %1513 = vst.msk [vmem:[#allocation2] sm:$0xc0] %vm548, %v1511
  %v1514 = vrot.slane %v1508, 6
  %1515 = vrot.lane.b32.xlu0 %v1514, 104
  %v1516 = vpop.permute.xlu0 %1515
  %v1517 = vsel %vm27, %v1516, 0
  %1519 = vmatprep.subr.mxu0 0.0
  %1520 = vmatpush1.msra.mxu0 %v12
  %1521 = vmatprep.subr.mxu0 0.0
  %1522 = vmatpush1.msra.mxu0 0.0
  %1523 = vmatprep.subr.mxu0 0.0
  %1524 = vmatpush1.msra.mxu0 0.0
  %1525 = vmatprep.subr.mxu0 0.0
  %1526 = vmatpush1.msra.mxu0 0.0
  %1527 = vmatprep.subr.mxu0 0.0
  %1528 = vmatpush1.msra.mxu0 0.0
  %1529 = vmatprep.subr.mxu0 0.0
  %1530 = vmatpush1.msra.mxu0 0.0
  %1531 = vmatprep.subr.mxu0 0.0
  %1532 = vmatpush1.msra.mxu0 0.0
  %1533 = vmatprep.subr.mxu0 0.0
  %1534 = vmatpush1.msra.mxu0 0.0
  %1535 = vmatprep.subr.mxu0 0.0
  %1536 = vmatpush1.msra.mxu0 0.0
  %1537 = vmatprep.subr.mxu0 0.0
  %1538 = vmatpush1.msra.mxu0 0.0
  %1539 = vmatprep.subr.mxu0 0.0
  %1540 = vmatpush1.msra.mxu0 0.0
  %1541 = vmatprep.subr.mxu0 0.0
  %1542 = vmatpush1.msra.mxu0 0.0
  %1543 = vmatprep.subr.mxu0 0.0
  %1544 = vmatpush1.msra.mxu0 0.0
  %1545 = vmatprep.subr.mxu0 0.0
  %1546 = vmatpush1.msra.mxu0 0.0
  %1547 = vmatprep.subr.mxu0 0.0
  %1548 = vmatpush1.msra.mxu0 0.0
  %1549 = vmatprep.subr.mxu0 0.0
  %1550 = vmatpush1.msra.mxu0 0.0
  %1551 = vmatprep.subr.mxu0 0.0
  %1552 = vmatpush1.msra.mxu0 0.0
  %1553 = vmatprep.subr.mxu0 0.0
  %1554 = vmatpush1.msra.mxu0 0.0
  %1555 = vmatprep.subr.mxu0 0.0
  %1556 = vmatpush1.msra.mxu0 0.0
  %1557 = vmatprep.subr.mxu0 0.0
  %1558 = vmatpush1.msra.mxu0 0.0
  %1559 = vmatprep.subr.mxu0 0.0
  %1560 = vmatpush1.msra.mxu0 0.0
  %1561 = vmatprep.subr.mxu0 0.0
  %1562 = vmatpush1.msra.mxu0 0.0
  %1563 = vmatprep.subr.mxu0 0.0
  %1564 = vmatpush1.msra.mxu0 0.0
  %1565 = vmatprep.subr.mxu0 0.0
  %1566 = vmatpush1.msra.mxu0 0.0
  %1567 = vmatprep.subr.mxu0 0.0
  %1568 = vmatpush1.msra.mxu0 0.0
  %1569 = vmatprep.subr.mxu0 0.0
  %1570 = vmatpush1.msra.mxu0 0.0
  %1571 = vmatprep.subr.mxu0 0.0
  %1572 = vmatpush1.msra.mxu0 0.0
  %1573 = vmatprep.subr.mxu0 0.0
  %1574 = vmatpush1.msra.mxu0 0.0
  %1575 = vmatprep.subr.mxu0 0.0
  %1576 = vmatpush1.msra.mxu0 0.0
  %1577 = vmatprep.subr.mxu0 0.0
  %1578 = vmatpush1.msra.mxu0 0.0
  %1579 = vmatprep.subr.mxu0 0.0
  %1580 = vmatpush1.msra.mxu0 0.0
  %1581 = vmatprep.subr.mxu0 0.0
  %1582 = vmatpush1.msra.mxu0 0.0
  %1583 = vmatprep.mubr.f32.mxu0 0.0
  %1584 = vmatmul.mubr.f32.gmra.mrb[0].mxu0 %v1517
  %v1585 = vpop.f32.mrb[0].mxu0
  %v1586 = vadd.f32 0.0, %v1585
  %v1587 = vpop.f32.mrb[0].mxu0
  %1588 = vdwg.mxu0
  %v1589 = vadd.f32 %v1074, %v1586
  %v1590 = vxor.u32 %v1589, 2147483648
  %v1591 = vmul.f32 %v1590, 1.442695
  %v1592 = vpow.pop %v1591
  %v1593 = vadd.f32 %v1592, 1.0
  %v1594 = vrcp.pop %v1593
  %v1595 = vmul.f32 1.0, %v1594
  %v1596 = vtanh.pop %v1589
  %v1598 = vrot.slane %v1502, 6
  %v1600 = vmul.f32 %v1595, %v1598
  %1602 = vrot.lane.b32.xlu0 %v1596, 112
  %v1603 = vpop.permute.xlu0 %1602
  %v1605 = vmul.f32 %v1595, %v1603
  %1607 = vrot.lane.b32.xlu0 %v1605, 8
  %v1608 = vpop.permute.xlu0 %1607
  %v1610 = vadd.f32 %v1600, %v1608
  %v1611 = vtanh.pop %v1610
  %1613 = vrot.lane.b32.xlu0 %v1611, 16
  %v1614 = vpop.permute.xlu0 %1613
  %v1616 = vmul.f32 %v1595, %v1614
  %1618 = vrot.lane.b32.xlu0 %v1616, 104
  %v1619 = vpop.permute.xlu0 %1618
  %1621 = vst.msk [vmem:[#allocation2 + $0x8] sm:$0x3] %vm215, %v1619
  %v1622 = vsel %vm27, %v1619, 0
  %1624 = vmatprep.subr.mxu0 0.0
  %1625 = vmatpush1.msra.mxu0 %v12
  %1626 = vmatprep.subr.mxu0 0.0
  %1627 = vmatpush1.msra.mxu0 0.0
  %1628 = vmatprep.subr.mxu0 0.0
  %1629 = vmatpush1.msra.mxu0 0.0
  %1630 = vmatprep.subr.mxu0 0.0
  %1631 = vmatpush1.msra.mxu0 0.0
  %1632 = vmatprep.subr.mxu0 0.0
  %1633 = vmatpush1.msra.mxu0 0.0
  %1634 = vmatprep.subr.mxu0 0.0
  %1635 = vmatpush1.msra.mxu0 0.0
  %1636 = vmatprep.subr.mxu0 0.0
  %1637 = vmatpush1.msra.mxu0 0.0
  %1638 = vmatprep.subr.mxu0 0.0
  %1639 = vmatpush1.msra.mxu0 0.0
  %1640 = vmatprep.subr.mxu0 0.0
  %1641 = vmatpush1.msra.mxu0 0.0
  %1642 = vmatprep.subr.mxu0 0.0
  %1643 = vmatpush1.msra.mxu0 0.0
  %1644 = vmatprep.subr.mxu0 0.0
  %1645 = vmatpush1.msra.mxu0 0.0
  %1646 = vmatprep.subr.mxu0 0.0
  %1647 = vmatpush1.msra.mxu0 0.0
  %1648 = vmatprep.subr.mxu0 0.0
  %1649 = vmatpush1.msra.mxu0 0.0
  %1650 = vmatprep.subr.mxu0 0.0
  %1651 = vmatpush1.msra.mxu0 0.0
  %1652 = vmatprep.subr.mxu0 0.0
  %1653 = vmatpush1.msra.mxu0 0.0
  %1654 = vmatprep.subr.mxu0 0.0
  %1655 = vmatpush1.msra.mxu0 0.0
  %1656 = vmatprep.subr.mxu0 0.0
  %1657 = vmatpush1.msra.mxu0 0.0
  %1658 = vmatprep.subr.mxu0 0.0
  %1659 = vmatpush1.msra.mxu0 0.0
  %1660 = vmatprep.subr.mxu0 0.0
  %1661 = vmatpush1.msra.mxu0 0.0
  %1662 = vmatprep.subr.mxu0 0.0
  %1663 = vmatpush1.msra.mxu0 0.0
  %1664 = vmatprep.subr.mxu0 0.0
  %1665 = vmatpush1.msra.mxu0 0.0
  %1666 = vmatprep.subr.mxu0 0.0
  %1667 = vmatpush1.msra.mxu0 0.0
  %1668 = vmatprep.subr.mxu0 0.0
  %1669 = vmatpush1.msra.mxu0 0.0
  %1670 = vmatprep.subr.mxu0 0.0
  %1671 = vmatpush1.msra.mxu0 0.0
  %1672 = vmatprep.subr.mxu0 0.0
  %1673 = vmatpush1.msra.mxu0 0.0
  %1674 = vmatprep.subr.mxu0 0.0
  %1675 = vmatpush1.msra.mxu0 0.0
  %1676 = vmatprep.subr.mxu0 0.0
  %1677 = vmatpush1.msra.mxu0 0.0
  %1678 = vmatprep.subr.mxu0 0.0
  %1679 = vmatpush1.msra.mxu0 0.0
  %1680 = vmatprep.subr.mxu0 0.0
  %1681 = vmatpush1.msra.mxu0 0.0
  %1682 = vmatprep.subr.mxu0 0.0
  %1683 = vmatpush1.msra.mxu0 0.0
  %1684 = vmatprep.subr.mxu0 0.0
  %1685 = vmatpush1.msra.mxu0 0.0
  %1686 = vmatprep.subr.mxu0 0.0
  %1687 = vmatpush1.msra.mxu0 0.0
  %1688 = vmatprep.mubr.f32.mxu0 0.0
  %1689 = vmatmul.mubr.f32.gmra.mrb[0].mxu0 %v1622
  %v1690 = vpop.f32.mrb[0].mxu0
  %v1691 = vadd.f32 0.0, %v1690
  %v1692 = vpop.f32.mrb[0].mxu0
  %1693 = vdwg.mxu0
  %v1695 = vrot.slane %v1691, 6
  %v1697 = vadd.f32 %v1074, %v1695
  %v1698 = vxor.u32 %v1697, 2147483648
  %v1699 = vmul.f32 %v1698, 1.442695
  %v1700 = vpow.pop %v1699
  %v1701 = vadd.f32 %v1700, 1.0
  %v1702 = vrcp.pop %v1701
  %v1703 = vmul.f32 1.0, %v1702
  %v1704 = vtanh.pop %v1697
  %v1706 = vrot.slane %v1610, 6
  %v1708 = vmul.f32 %v1703, %v1706
  %1710 = vrot.lane.b32.xlu0 %v1704, 112
  %v1711 = vpop.permute.xlu0 %1710
  %v1713 = vmul.f32 %v1703, %v1711
  %1715 = vrot.lane.b32.xlu0 %v1713, 8
  %v1716 = vpop.permute.xlu0 %1715
  %v1718 = vadd.f32 %v1708, %v1716
  %v1719 = vtanh.pop %v1718
  %1721 = vrot.lane.b32.xlu0 %v1719, 16
  %v1722 = vpop.permute.xlu0 %1721
  %v1724 = vmul.f32 %v1703, %v1722
  %1726 = vrot.lane.b32.xlu0 %v1724, 104
  %v1727 = vpop.permute.xlu0 %1726
  %1729 = vst.msk [vmem:[#allocation2 + $0x8] sm:$0xc] %vm324, %v1727
  %v1730 = vrot.slane %v1724, 2
  %1731 = vrot.lane.b32.xlu0 %v1730, 104
  %v1732 = vpop.permute.xlu0 %1731
  %v1733 = vsel %vm27, %v1732, 0
  %1735 = vmatprep.subr.mxu0 0.0
  %1736 = vmatpush1.msra.mxu0 %v12
  %1737 = vmatprep.subr.mxu0 0.0
  %1738 = vmatpush1.msra.mxu0 0.0
  %1739 = vmatprep.subr.mxu0 0.0
  %1740 = vmatpush1.msra.mxu0 0.0
  %1741 = vmatprep.subr.mxu0 0.0
  %1742 = vmatpush1.msra.mxu0 0.0
  %1743 = vmatprep.subr.mxu0 0.0
  %1744 = vmatpush1.msra.mxu0 0.0
  %1745 = vmatprep.subr.mxu0 0.0
  %1746 = vmatpush1.msra.mxu0 0.0
  %1747 = vmatprep.subr.mxu0 0.0
  %1748 = vmatpush1.msra.mxu0 0.0
  %1749 = vmatprep.subr.mxu0 0.0
  %1750 = vmatpush1.msra.mxu0 0.0
  %1751 = vmatprep.subr.mxu0 0.0
  %1752 = vmatpush1.msra.mxu0 0.0
  %1753 = vmatprep.subr.mxu0 0.0
  %1754 = vmatpush1.msra.mxu0 0.0
  %1755 = vmatprep.subr.mxu0 0.0
  %1756 = vmatpush1.msra.mxu0 0.0
  %1757 = vmatprep.subr.mxu0 0.0
  %1758 = vmatpush1.msra.mxu0 0.0
  %1759 = vmatprep.subr.mxu0 0.0
  %1760 = vmatpush1.msra.mxu0 0.0
  %1761 = vmatprep.subr.mxu0 0.0
  %1762 = vmatpush1.msra.mxu0 0.0
  %1763 = vmatprep.subr.mxu0 0.0
  %1764 = vmatpush1.msra.mxu0 0.0
  %1765 = vmatprep.subr.mxu0 0.0
  %1766 = vmatpush1.msra.mxu0 0.0
  %1767 = vmatprep.subr.mxu0 0.0
  %1768 = vmatpush1.msra.mxu0 0.0
  %1769 = vmatprep.subr.mxu0 0.0
  %1770 = vmatpush1.msra.mxu0 0.0
  %1771 = vmatprep.subr.mxu0 0.0
  %1772 = vmatpush1.msra.mxu0 0.0
  %1773 = vmatprep.subr.mxu0 0.0
  %1774 = vmatpush1.msra.mxu0 0.0
  %1775 = vmatprep.subr.mxu0 0.0
  %1776 = vmatpush1.msra.mxu0 0.0
  %1777 = vmatprep.subr.mxu0 0.0
  %1778 = vmatpush1.msra.mxu0 0.0
  %1779 = vmatprep.subr.mxu0 0.0
  %1780 = vmatpush1.msra.mxu0 0.0
  %1781 = vmatprep.subr.mxu0 0.0
  %1782 = vmatpush1.msra.mxu0 0.0
  %1783 = vmatprep.subr.mxu0 0.0
  %1784 = vmatpush1.msra.mxu0 0.0
  %1785 = vmatprep.subr.mxu0 0.0
  %1786 = vmatpush1.msra.mxu0 0.0
  %1787 = vmatprep.subr.mxu0 0.0
  %1788 = vmatpush1.msra.mxu0 0.0
  %1789 = vmatprep.subr.mxu0 0.0
  %1790 = vmatpush1.msra.mxu0 0.0
  %1791 = vmatprep.subr.mxu0 0.0
  %1792 = vmatpush1.msra.mxu0 0.0
  %1793 = vmatprep.subr.mxu0 0.0
  %1794 = vmatpush1.msra.mxu0 0.0
  %1795 = vmatprep.subr.mxu0 0.0
  %1796 = vmatpush1.msra.mxu0 0.0
  %1797 = vmatprep.subr.mxu0 0.0
  %1798 = vmatpush1.msra.mxu0 0.0
  %1799 = vmatprep.mubr.f32.mxu0 0.0
  %1800 = vmatmul.mubr.f32.gmra.mrb[0].mxu0 %v1733
  %v1801 = vpop.f32.mrb[0].mxu0
  %v1802 = vadd.f32 0.0, %v1801
  %v1803 = vpop.f32.mrb[0].mxu0
  %1804 = vdwg.mxu0
  %v1806 = vrot.slane %v1802, 4
  %v1808 = vadd.f32 %v1074, %v1806
  %v1809 = vxor.u32 %v1808, 2147483648
  %v1810 = vmul.f32 %v1809, 1.442695
  %v1811 = vpow.pop %v1810
  %v1812 = vadd.f32 %v1811, 1.0
  %v1813 = vrcp.pop %v1812
  %v1814 = vmul.f32 1.0, %v1813
  %v1815 = vtanh.pop %v1808
  %v1817 = vrot.slane %v1718, 6
  %v1819 = vmul.f32 %v1814, %v1817
  %1821 = vrot.lane.b32.xlu0 %v1815, 112
  %v1822 = vpop.permute.xlu0 %1821
  %v1824 = vmul.f32 %v1814, %v1822
  %1826 = vrot.lane.b32.xlu0 %v1824, 8
  %v1827 = vpop.permute.xlu0 %1826
  %v1829 = vadd.f32 %v1819, %v1827
  %v1830 = vtanh.pop %v1829
  %1832 = vrot.lane.b32.xlu0 %v1830, 16
  %v1833 = vpop.permute.xlu0 %1832
  %v1835 = vmul.f32 %v1814, %v1833
  %1837 = vrot.lane.b32.xlu0 %v1835, 104
  %v1838 = vpop.permute.xlu0 %1837
  %1840 = vst.msk [vmem:[#allocation2 + $0x8] sm:$0x30] %vm436, %v1838
  %v1841 = vrot.slane %v1835, 4
  %1842 = vrot.lane.b32.xlu0 %v1841, 104
  %v1843 = vpop.permute.xlu0 %1842
  %v1844 = vsel %vm27, %v1843, 0
  %1846 = vmatprep.subr.mxu0 0.0
  %1847 = vmatpush1.msra.mxu0 %v12
  %1848 = vmatprep.subr.mxu0 0.0
  %1849 = vmatpush1.msra.mxu0 0.0
  %1850 = vmatprep.subr.mxu0 0.0
  %1851 = vmatpush1.msra.mxu0 0.0
  %1852 = vmatprep.subr.mxu0 0.0
  %1853 = vmatpush1.msra.mxu0 0.0
  %1854 = vmatprep.subr.mxu0 0.0
  %1855 = vmatpush1.msra.mxu0 0.0
  %1856 = vmatprep.subr.mxu0 0.0
  %1857 = vmatpush1.msra.mxu0 0.0
  %1858 = vmatprep.subr.mxu0 0.0
  %1859 = vmatpush1.msra.mxu0 0.0
  %1860 = vmatprep.subr.mxu0 0.0
  %1861 = vmatpush1.msra.mxu0 0.0
  %1862 = vmatprep.subr.mxu0 0.0
  %1863 = vmatpush1.msra.mxu0 0.0
  %1864 = vmatprep.subr.mxu0 0.0
  %1865 = vmatpush1.msra.mxu0 0.0
  %1866 = vmatprep.subr.mxu0 0.0
  %1867 = vmatpush1.msra.mxu0 0.0
  %1868 = vmatprep.subr.mxu0 0.0
  %1869 = vmatpush1.msra.mxu0 0.0
  %1870 = vmatprep.subr.mxu0 0.0
  %1871 = vmatpush1.msra.mxu0 0.0
  %1872 = vmatprep.subr.mxu0 0.0
  %1873 = vmatpush1.msra.mxu0 0.0
  %1874 = vmatprep.subr.mxu0 0.0
  %1875 = vmatpush1.msra.mxu0 0.0
  %1876 = vmatprep.subr.mxu0 0.0
  %1877 = vmatpush1.msra.mxu0 0.0
  %1878 = vmatprep.subr.mxu0 0.0
  %1879 = vmatpush1.msra.mxu0 0.0
  %1880 = vmatprep.subr.mxu0 0.0
  %1881 = vmatpush1.msra.mxu0 0.0
  %1882 = vmatprep.subr.mxu0 0.0
  %1883 = vmatpush1.msra.mxu0 0.0
  %1884 = vmatprep.subr.mxu0 0.0
  %1885 = vmatpush1.msra.mxu0 0.0
  %1886 = vmatprep.subr.mxu0 0.0
  %1887 = vmatpush1.msra.mxu0 0.0
  %1888 = vmatprep.subr.mxu0 0.0
  %1889 = vmatpush1.msra.mxu0 0.0
  %1890 = vmatprep.subr.mxu0 0.0
  %1891 = vmatpush1.msra.mxu0 0.0
  %1892 = vmatprep.subr.mxu0 0.0
  %1893 = vmatpush1.msra.mxu0 0.0
  %1894 = vmatprep.subr.mxu0 0.0
  %1895 = vmatpush1.msra.mxu0 0.0
  %1896 = vmatprep.subr.mxu0 0.0
  %1897 = vmatpush1.msra.mxu0 0.0
  %1898 = vmatprep.subr.mxu0 0.0
  %1899 = vmatpush1.msra.mxu0 0.0
  %1900 = vmatprep.subr.mxu0 0.0
  %1901 = vmatpush1.msra.mxu0 0.0
  %1902 = vmatprep.subr.mxu0 0.0
  %1903 = vmatpush1.msra.mxu0 0.0
  %1904 = vmatprep.subr.mxu0 0.0
  %1905 = vmatpush1.msra.mxu0 0.0
  %1906 = vmatprep.subr.mxu0 0.0
  %1907 = vmatpush1.msra.mxu0 0.0
  %1908 = vmatprep.subr.mxu0 0.0
  %1909 = vmatpush1.msra.mxu0 0.0
  %1910 = vmatprep.mubr.f32.mxu0 0.0
  %1911 = vmatmul.mubr.f32.gmra.mrb[0].mxu0 %v1844
  %v1912 = vpop.f32.mrb[0].mxu0
  %v1913 = vadd.f32 0.0, %v1912
  %v1914 = vpop.f32.mrb[0].mxu0
  %1915 = vdwg.mxu0
  %v1917 = vrot.slane %v1913, 2
  %v1919 = vadd.f32 %v1074, %v1917
  %v1920 = vxor.u32 %v1919, 2147483648
  %v1921 = vmul.f32 %v1920, 1.442695
  %v1922 = vpow.pop %v1921
  %v1923 = vadd.f32 %v1922, 1.0
  %v1924 = vrcp.pop %v1923
  %v1925 = vmul.f32 1.0, %v1924
  %v1926 = vtanh.pop %v1919
  %v1928 = vrot.slane %v1829, 6
  %v1930 = vmul.f32 %v1925, %v1928
  %1932 = vrot.lane.b32.xlu0 %v1926, 112
  %v1933 = vpop.permute.xlu0 %1932
  %v1935 = vmul.f32 %v1925, %v1933
  %1937 = vrot.lane.b32.xlu0 %v1935, 8
  %v1938 = vpop.permute.xlu0 %1937
  %v1940 = vadd.f32 %v1930, %v1938
  %v1941 = vtanh.pop %v1940
  %1943 = vrot.lane.b32.xlu0 %v1941, 16
  %v1944 = vpop.permute.xlu0 %1943
  %v1946 = vmul.f32 %v1925, %v1944
  %1948 = vrot.lane.b32.xlu0 %v1946, 104
  %v1949 = vpop.permute.xlu0 %1948
  %1951 = vst.msk [vmem:[#allocation2 + $0x8] sm:$0xc0] %vm548, %v1949
  %v1952 = vld [vmem:[#allocation2] sm:$0xff]
  %v1953 = vld [vmem:[#allocation2 + $0x8] sm:$0xff]
  %v1954 = vld [vmem:[%s1 + $0x20] sm:$0xff]
  %v1955 = vld [vmem:[%s1 + $0x4a] sm:$0x1]
  %v1956 = vlaneseq
  %v1957 = vshrl.u32 %v1956, 7
  %v1958 = vsub.s32 0, %v1957
  %v1959 = vrot.slane %v1955, %v1958
  %v1961 = vsel %vm27, %v1952, 0
  %v1964 = vsel %vm27, %v1953, 0
  %1966 = vmatprep.subr.mxu0 0.0
  %1967 = vmatpush1.msra.mxu0 %v1954
  %1968 = vmatprep.subr.mxu0 0.0
  %1969 = vmatpush1.msra.mxu0 0.0
  %1970 = vmatprep.subr.mxu0 0.0
  %1971 = vmatpush1.msra.mxu0 0.0
  %1972 = vmatprep.subr.mxu0 0.0
  %1973 = vmatpush1.msra.mxu0 0.0
  %1974 = vmatprep.subr.mxu0 0.0
  %1975 = vmatpush1.msra.mxu0 0.0
  %1976 = vmatprep.subr.mxu0 0.0
  %1977 = vmatpush1.msra.mxu0 0.0
  %1978 = vmatprep.subr.mxu0 0.0
  %1979 = vmatpush1.msra.mxu0 0.0
  %1980 = vmatprep.subr.mxu0 0.0
  %1981 = vmatpush1.msra.mxu0 0.0
  %1982 = vmatprep.subr.mxu0 0.0
  %1983 = vmatpush1.msra.mxu0 0.0
  %1984 = vmatprep.subr.mxu0 0.0
  %1985 = vmatpush1.msra.mxu0 0.0
  %1986 = vmatprep.subr.mxu0 0.0
  %1987 = vmatpush1.msra.mxu0 0.0
  %1988 = vmatprep.subr.mxu0 0.0
  %1989 = vmatpush1.msra.mxu0 0.0
  %1990 = vmatprep.subr.mxu0 0.0
  %1991 = vmatpush1.msra.mxu0 0.0
  %1992 = vmatprep.subr.mxu0 0.0
  %1993 = vmatpush1.msra.mxu0 0.0
  %1994 = vmatprep.subr.mxu0 0.0
  %1995 = vmatpush1.msra.mxu0 0.0
  %1996 = vmatprep.subr.mxu0 0.0
  %1997 = vmatpush1.msra.mxu0 0.0
  %1998 = vmatprep.subr.mxu0 0.0
  %1999 = vmatpush1.msra.mxu0 0.0
  %2000 = vmatprep.subr.mxu0 0.0
  %2001 = vmatpush1.msra.mxu0 0.0
  %2002 = vmatprep.subr.mxu0 0.0
  %2003 = vmatpush1.msra.mxu0 0.0
  %2004 = vmatprep.subr.mxu0 0.0
  %2005 = vmatpush1.msra.mxu0 0.0
  %2006 = vmatprep.subr.mxu0 0.0
  %2007 = vmatpush1.msra.mxu0 0.0
  %2008 = vmatprep.subr.mxu0 0.0
  %2009 = vmatpush1.msra.mxu0 0.0
  %2010 = vmatprep.subr.mxu0 0.0
  %2011 = vmatpush1.msra.mxu0 0.0
  %2012 = vmatprep.subr.mxu0 0.0
  %2013 = vmatpush1.msra.mxu0 0.0
  %2014 = vmatprep.subr.mxu0 0.0
  %2015 = vmatpush1.msra.mxu0 0.0
  %2016 = vmatprep.subr.mxu0 0.0
  %2017 = vmatpush1.msra.mxu0 0.0
  %2018 = vmatprep.subr.mxu0 0.0
  %2019 = vmatpush1.msra.mxu0 0.0
  %2020 = vmatprep.subr.mxu0 0.0
  %2021 = vmatpush1.msra.mxu0 0.0
  %2022 = vmatprep.subr.mxu0 0.0
  %2023 = vmatpush1.msra.mxu0 0.0
  %2024 = vmatprep.subr.mxu0 0.0
  %2025 = vmatpush1.msra.mxu0 0.0
  %2026 = vmatprep.subr.mxu0 0.0
  %2027 = vmatpush1.msra.mxu0 0.0
  %2028 = vmatprep.subr.mxu0 0.0
  %2029 = vmatpush1.msra.mxu0 0.0
  %2030 = vmatprep.mubr.f32.mxu0 0.0
  %2031 = vmatmul.mubr.f32.gmra.mrb[0].mxu0 %v1961
  %v2032 = vpop.f32.mrb[0].mxu0
  %v2033 = vadd.f32 %v1959, %v2032
  %v2034 = vpop.f32.mrb[0].mxu0
  %2035 = vmatprep.mubr.f32.mxu0 0.0
  %2036 = vmatmul.mubr.f32.gmra.mrb[0].mxu0 %v1964
  %v2037 = vpop.f32.mrb[0].mxu0
  %v2038 = vadd.f32 %v1959, %v2037
  %v2039 = vpop.f32.mrb[0].mxu0
  %2040 = vdwg.mxu0
  %v2041 = vrot.slane %v982, 6
  %2042 = vrot.lane.b32.xlu0 %v2041, 104
  %v2043 = vpop.permute.xlu0 %2042
  %v2044 = vsel %vm27, %v2043, 0
  %2046 = vmatprep.subr.mxu0 0.0
  %2047 = vmatpush1.msra.mxu0 %v13
  %2048 = vmatprep.subr.mxu0 0.0
  %2049 = vmatpush1.msra.mxu0 0.0
  %2050 = vmatprep.subr.mxu0 0.0
  %2051 = vmatpush1.msra.mxu0 0.0
  %2052 = vmatprep.subr.mxu0 0.0
  %2053 = vmatpush1.msra.mxu0 0.0
  %2054 = vmatprep.subr.mxu0 0.0
  %2055 = vmatpush1.msra.mxu0 0.0
  %2056 = vmatprep.subr.mxu0 0.0
  %2057 = vmatpush1.msra.mxu0 0.0
  %2058 = vmatprep.subr.mxu0 0.0
  %2059 = vmatpush1.msra.mxu0 0.0
  %2060 = vmatprep.subr.mxu0 0.0
  %2061 = vmatpush1.msra.mxu0 0.0
  %2062 = vmatprep.subr.mxu0 0.0
  %2063 = vmatpush1.msra.mxu0 0.0
  %2064 = vmatprep.subr.mxu0 0.0
  %2065 = vmatpush1.msra.mxu0 0.0
  %2066 = vmatprep.subr.mxu0 0.0
  %2067 = vmatpush1.msra.mxu0 0.0
  %2068 = vmatprep.subr.mxu0 0.0
  %2069 = vmatpush1.msra.mxu0 0.0
  %2070 = vmatprep.subr.mxu0 0.0
  %2071 = vmatpush1.msra.mxu0 0.0
  %2072 = vmatprep.subr.mxu0 0.0
  %2073 = vmatpush1.msra.mxu0 0.0
  %2074 = vmatprep.subr.mxu0 0.0
  %2075 = vmatpush1.msra.mxu0 0.0
  %2076 = vmatprep.subr.mxu0 0.0
  %2077 = vmatpush1.msra.mxu0 0.0
  %2078 = vmatprep.subr.mxu0 0.0
  %2079 = vmatpush1.msra.mxu0 0.0
  %2080 = vmatprep.subr.mxu0 0.0
  %2081 = vmatpush1.msra.mxu0 0.0
  %2082 = vmatprep.subr.mxu0 0.0
  %2083 = vmatpush1.msra.mxu0 0.0
  %2084 = vmatprep.subr.mxu0 0.0
  %2085 = vmatpush1.msra.mxu0 0.0
  %2086 = vmatprep.subr.mxu0 0.0
  %2087 = vmatpush1.msra.mxu0 0.0
  %2088 = vmatprep.subr.mxu0 0.0
  %2089 = vmatpush1.msra.mxu0 0.0
  %2090 = vmatprep.subr.mxu0 0.0
  %2091 = vmatpush1.msra.mxu0 0.0
  %2092 = vmatprep.subr.mxu0 0.0
  %2093 = vmatpush1.msra.mxu0 0.0
  %2094 = vmatprep.subr.mxu0 0.0
  %2095 = vmatpush1.msra.mxu0 0.0
  %2096 = vmatprep.subr.mxu0 0.0
  %2097 = vmatpush1.msra.mxu0 0.0
  %2098 = vmatprep.subr.mxu0 0.0
  %2099 = vmatpush1.msra.mxu0 0.0
  %2100 = vmatprep.subr.mxu0 0.0
  %2101 = vmatpush1.msra.mxu0 0.0
  %2102 = vmatprep.subr.mxu0 0.0
  %2103 = vmatpush1.msra.mxu0 0.0
  %2104 = vmatprep.subr.mxu0 0.0
  %2105 = vmatpush1.msra.mxu0 0.0
  %2106 = vmatprep.subr.mxu0 0.0
  %2107 = vmatpush1.msra.mxu0 0.0
  %2108 = vmatprep.subr.mxu0 0.0
  %2109 = vmatpush1.msra.mxu0 0.0
  %2110 = vmatprep.mubr.f32.mxu0 0.0
  %2111 = vmatmul.mubr.f32.gmra.mrb[0].mxu0 %v2044
  %v2112 = vpop.f32.mrb[0].mxu0
  %v2113 = vadd.f32 0.0, %v2112
  %v2114 = vpop.f32.mrb[0].mxu0
  %2115 = vdwg.mxu0
  %v2116 = vadd.f32 %v2033, %v2113
  %v2117 = vxor.u32 %v2116, 2147483648
  %v2118 = vmul.f32 %v2117, 1.442695
  %v2119 = vpow.pop %v2118
  %v2120 = vadd.f32 %v2119, 1.0
  %v2121 = vrcp.pop %v2120
  %v2122 = vmul.f32 1.0, %v2121
  %v2123 = vtanh.pop %v2116
  %v2125 = vrot.slane %v976, 6
  %v2127 = vmul.f32 %v2122, %v2125
  %2129 = vrot.lane.b32.xlu0 %v2123, 112
  %v2130 = vpop.permute.xlu0 %2129
  %v2132 = vmul.f32 %v2122, %v2130
  %2134 = vrot.lane.b32.xlu0 %v2132, 8
  %v2135 = vpop.permute.xlu0 %2134
  %v2137 = vadd.f32 %v2127, %v2135
  %v2138 = vtanh.pop %v2137
  %2140 = vrot.lane.b32.xlu0 %v2138, 16
  %v2141 = vpop.permute.xlu0 %2140
  %v2143 = vmul.f32 %v2122, %v2141
  %2145 = vrot.lane.b32.xlu0 %v2143, 104
  %v2146 = vpop.permute.xlu0 %2145
  %2148 = vst.msk [vmem:[#allocation2] sm:$0x3] %vm215, %v2146
  %v2149 = vsel %vm27, %v2146, 0
  %2151 = vmatprep.subr.mxu0 0.0
  %2152 = vmatpush1.msra.mxu0 %v13
  %2153 = vmatprep.subr.mxu0 0.0
  %2154 = vmatpush1.msra.mxu0 0.0
  %2155 = vmatprep.subr.mxu0 0.0
  %2156 = vmatpush1.msra.mxu0 0.0
  %2157 = vmatprep.subr.mxu0 0.0
  %2158 = vmatpush1.msra.mxu0 0.0
  %2159 = vmatprep.subr.mxu0 0.0
  %2160 = vmatpush1.msra.mxu0 0.0
  %2161 = vmatprep.subr.mxu0 0.0
  %2162 = vmatpush1.msra.mxu0 0.0
  %2163 = vmatprep.subr.mxu0 0.0
  %2164 = vmatpush1.msra.mxu0 0.0
  %2165 = vmatprep.subr.mxu0 0.0
  %2166 = vmatpush1.msra.mxu0 0.0
  %2167 = vmatprep.subr.mxu0 0.0
  %2168 = vmatpush1.msra.mxu0 0.0
  %2169 = vmatprep.subr.mxu0 0.0
  %2170 = vmatpush1.msra.mxu0 0.0
  %2171 = vmatprep.subr.mxu0 0.0
  %2172 = vmatpush1.msra.mxu0 0.0
  %2173 = vmatprep.subr.mxu0 0.0
  %2174 = vmatpush1.msra.mxu0 0.0
  %2175 = vmatprep.subr.mxu0 0.0
  %2176 = vmatpush1.msra.mxu0 0.0
  %2177 = vmatprep.subr.mxu0 0.0
  %2178 = vmatpush1.msra.mxu0 0.0
  %2179 = vmatprep.subr.mxu0 0.0
  %2180 = vmatpush1.msra.mxu0 0.0
  %2181 = vmatprep.subr.mxu0 0.0
  %2182 = vmatpush1.msra.mxu0 0.0
  %2183 = vmatprep.subr.mxu0 0.0
  %2184 = vmatpush1.msra.mxu0 0.0
  %2185 = vmatprep.subr.mxu0 0.0
  %2186 = vmatpush1.msra.mxu0 0.0
  %2187 = vmatprep.subr.mxu0 0.0
  %2188 = vmatpush1.msra.mxu0 0.0
  %2189 = vmatprep.subr.mxu0 0.0
  %2190 = vmatpush1.msra.mxu0 0.0
  %2191 = vmatprep.subr.mxu0 0.0
  %2192 = vmatpush1.msra.mxu0 0.0
  %2193 = vmatprep.subr.mxu0 0.0
  %2194 = vmatpush1.msra.mxu0 0.0
  %2195 = vmatprep.subr.mxu0 0.0
  %2196 = vmatpush1.msra.mxu0 0.0
  %2197 = vmatprep.subr.mxu0 0.0
  %2198 = vmatpush1.msra.mxu0 0.0
  %2199 = vmatprep.subr.mxu0 0.0
  %2200 = vmatpush1.msra.mxu0 0.0
  %2201 = vmatprep.subr.mxu0 0.0
  %2202 = vmatpush1.msra.mxu0 0.0
  %2203 = vmatprep.subr.mxu0 0.0
  %2204 = vmatpush1.msra.mxu0 0.0
  %2205 = vmatprep.subr.mxu0 0.0
  %2206 = vmatpush1.msra.mxu0 0.0
  %2207 = vmatprep.subr.mxu0 0.0
  %2208 = vmatpush1.msra.mxu0 0.0
  %2209 = vmatprep.subr.mxu0 0.0
  %2210 = vmatpush1.msra.mxu0 0.0
  %2211 = vmatprep.subr.mxu0 0.0
  %2212 = vmatpush1.msra.mxu0 0.0
  %2213 = vmatprep.subr.mxu0 0.0
  %2214 = vmatpush1.msra.mxu0 0.0
  %2215 = vmatprep.mubr.f32.mxu0 0.0
  %2216 = vmatmul.mubr.f32.gmra.mrb[0].mxu0 %v2149
  %v2217 = vpop.f32.mrb[0].mxu0
  %v2218 = vadd.f32 0.0, %v2217
  %v2219 = vpop.f32.mrb[0].mxu0
  %2220 = vdwg.mxu0
  %v2222 = vrot.slane %v2218, 6
  %v2224 = vadd.f32 %v2033, %v2222
  %v2225 = vxor.u32 %v2224, 2147483648
  %v2226 = vmul.f32 %v2225, 1.442695
  %v2227 = vpow.pop %v2226
  %v2228 = vadd.f32 %v2227, 1.0
  %v2229 = vrcp.pop %v2228
  %v2230 = vmul.f32 1.0, %v2229
  %v2231 = vtanh.pop %v2224
  %v2233 = vrot.slane %v2137, 6
  %v2235 = vmul.f32 %v2230, %v2233
  %2237 = vrot.lane.b32.xlu0 %v2231, 112
  %v2238 = vpop.permute.xlu0 %2237
  %v2240 = vmul.f32 %v2230, %v2238
  %2242 = vrot.lane.b32.xlu0 %v2240, 8
  %v2243 = vpop.permute.xlu0 %2242
  %v2245 = vadd.f32 %v2235, %v2243
  %v2246 = vtanh.pop %v2245
  %2248 = vrot.lane.b32.xlu0 %v2246, 16
  %v2249 = vpop.permute.xlu0 %2248
  %v2251 = vmul.f32 %v2230, %v2249
  %2253 = vrot.lane.b32.xlu0 %v2251, 104
  %v2254 = vpop.permute.xlu0 %2253
  %2256 = vst.msk [vmem:[#allocation2] sm:$0xc] %vm324, %v2254
  %v2257 = vrot.slane %v2251, 2
  %2258 = vrot.lane.b32.xlu0 %v2257, 104
  %v2259 = vpop.permute.xlu0 %2258
  %v2260 = vsel %vm27, %v2259, 0
  %2262 = vmatprep.subr.mxu0 0.0
  %2263 = vmatpush1.msra.mxu0 %v13
  %2264 = vmatprep.subr.mxu0 0.0
  %2265 = vmatpush1.msra.mxu0 0.0
  %2266 = vmatprep.subr.mxu0 0.0
  %2267 = vmatpush1.msra.mxu0 0.0
  %2268 = vmatprep.subr.mxu0 0.0
  %2269 = vmatpush1.msra.mxu0 0.0
  %2270 = vmatprep.subr.mxu0 0.0
  %2271 = vmatpush1.msra.mxu0 0.0
  %2272 = vmatprep.subr.mxu0 0.0
  %2273 = vmatpush1.msra.mxu0 0.0
  %2274 = vmatprep.subr.mxu0 0.0
  %2275 = vmatpush1.msra.mxu0 0.0
  %2276 = vmatprep.subr.mxu0 0.0
  %2277 = vmatpush1.msra.mxu0 0.0
  %2278 = vmatprep.subr.mxu0 0.0
  %2279 = vmatpush1.msra.mxu0 0.0
  %2280 = vmatprep.subr.mxu0 0.0
  %2281 = vmatpush1.msra.mxu0 0.0
  %2282 = vmatprep.subr.mxu0 0.0
  %2283 = vmatpush1.msra.mxu0 0.0
  %2284 = vmatprep.subr.mxu0 0.0
  %2285 = vmatpush1.msra.mxu0 0.0
  %2286 = vmatprep.subr.mxu0 0.0
  %2287 = vmatpush1.msra.mxu0 0.0
  %2288 = vmatprep.subr.mxu0 0.0
  %2289 = vmatpush1.msra.mxu0 0.0
  %2290 = vmatprep.subr.mxu0 0.0
  %2291 = vmatpush1.msra.mxu0 0.0
  %2292 = vmatprep.subr.mxu0 0.0
  %2293 = vmatpush1.msra.mxu0 0.0
  %2294 = vmatprep.subr.mxu0 0.0
  %2295 = vmatpush1.msra.mxu0 0.0
  %2296 = vmatprep.subr.mxu0 0.0
  %2297 = vmatpush1.msra.mxu0 0.0
  %2298 = vmatprep.subr.mxu0 0.0
  %2299 = vmatpush1.msra.mxu0 0.0
  %2300 = vmatprep.subr.mxu0 0.0
  %2301 = vmatpush1.msra.mxu0 0.0
  %2302 = vmatprep.subr.mxu0 0.0
  %2303 = vmatpush1.msra.mxu0 0.0
  %2304 = vmatprep.subr.mxu0 0.0
  %2305 = vmatpush1.msra.mxu0 0.0
  %2306 = vmatprep.subr.mxu0 0.0
  %2307 = vmatpush1.msra.mxu0 0.0
  %2308 = vmatprep.subr.mxu0 0.0
  %2309 = vmatpush1.msra.mxu0 0.0
  %2310 = vmatprep.subr.mxu0 0.0
  %2311 = vmatpush1.msra.mxu0 0.0
  %2312 = vmatprep.subr.mxu0 0.0
  %2313 = vmatpush1.msra.mxu0 0.0
  %2314 = vmatprep.subr.mxu0 0.0
  %2315 = vmatpush1.msra.mxu0 0.0
  %2316 = vmatprep.subr.mxu0 0.0
  %2317 = vmatpush1.msra.mxu0 0.0
  %2318 = vmatprep.subr.mxu0 0.0
  %2319 = vmatpush1.msra.mxu0 0.0
  %2320 = vmatprep.subr.mxu0 0.0
  %2321 = vmatpush1.msra.mxu0 0.0
  %2322 = vmatprep.subr.mxu0 0.0
  %2323 = vmatpush1.msra.mxu0 0.0
  %2324 = vmatprep.subr.mxu0 0.0
  %2325 = vmatpush1.msra.mxu0 0.0
  %2326 = vmatprep.mubr.f32.mxu0 0.0
  %2327 = vmatmul.mubr.f32.gmra.mrb[0].mxu0 %v2260
  %v2328 = vpop.f32.mrb[0].mxu0
  %v2329 = vadd.f32 0.0, %v2328
  %v2330 = vpop.f32.mrb[0].mxu0
  %2331 = vdwg.mxu0
  %v2333 = vrot.slane %v2329, 4
  %v2335 = vadd.f32 %v2033, %v2333
  %v2336 = vxor.u32 %v2335, 2147483648
  %v2337 = vmul.f32 %v2336, 1.442695
  %v2338 = vpow.pop %v2337
  %v2339 = vadd.f32 %v2338, 1.0
  %v2340 = vrcp.pop %v2339
  %v2341 = vmul.f32 1.0, %v2340
  %v2342 = vtanh.pop %v2335
  %v2344 = vrot.slane %v2245, 6
  %v2346 = vmul.f32 %v2341, %v2344
  %2348 = vrot.lane.b32.xlu0 %v2342, 112
  %v2349 = vpop.permute.xlu0 %2348
  %v2351 = vmul.f32 %v2341, %v2349
  %2353 = vrot.lane.b32.xlu0 %v2351, 8
  %v2354 = vpop.permute.xlu0 %2353
  %v2356 = vadd.f32 %v2346, %v2354
  %v2357 = vtanh.pop %v2356
  %2359 = vrot.lane.b32.xlu0 %v2357, 16
  %v2360 = vpop.permute.xlu0 %2359
  %v2362 = vmul.f32 %v2341, %v2360
  %2364 = vrot.lane.b32.xlu0 %v2362, 104
  %v2365 = vpop.permute.xlu0 %2364
  %2367 = vst.msk [vmem:[#allocation2] sm:$0x30] %vm436, %v2365
  %v2368 = vrot.slane %v2362, 4
  %2369 = vrot.lane.b32.xlu0 %v2368, 104
  %v2370 = vpop.permute.xlu0 %2369
  %v2371 = vsel %vm27, %v2370, 0
  %2373 = vmatprep.subr.mxu0 0.0
  %2374 = vmatpush1.msra.mxu0 %v13
  %2375 = vmatprep.subr.mxu0 0.0
  %2376 = vmatpush1.msra.mxu0 0.0
  %2377 = vmatprep.subr.mxu0 0.0
  %2378 = vmatpush1.msra.mxu0 0.0
  %2379 = vmatprep.subr.mxu0 0.0
  %2380 = vmatpush1.msra.mxu0 0.0
  %2381 = vmatprep.subr.mxu0 0.0
  %2382 = vmatpush1.msra.mxu0 0.0
  %2383 = vmatprep.subr.mxu0 0.0
  %2384 = vmatpush1.msra.mxu0 0.0
  %2385 = vmatprep.subr.mxu0 0.0
  %2386 = vmatpush1.msra.mxu0 0.0
  %2387 = vmatprep.subr.mxu0 0.0
  %2388 = vmatpush1.msra.mxu0 0.0
  %2389 = vmatprep.subr.mxu0 0.0
  %2390 = vmatpush1.msra.mxu0 0.0
  %2391 = vmatprep.subr.mxu0 0.0
  %2392 = vmatpush1.msra.mxu0 0.0
  %2393 = vmatprep.subr.mxu0 0.0
  %2394 = vmatpush1.msra.mxu0 0.0
  %2395 = vmatprep.subr.mxu0 0.0
  %2396 = vmatpush1.msra.mxu0 0.0
  %2397 = vmatprep.subr.mxu0 0.0
  %2398 = vmatpush1.msra.mxu0 0.0
  %2399 = vmatprep.subr.mxu0 0.0
  %2400 = vmatpush1.msra.mxu0 0.0
  %2401 = vmatprep.subr.mxu0 0.0
  %2402 = vmatpush1.msra.mxu0 0.0
  %2403 = vmatprep.subr.mxu0 0.0
  %2404 = vmatpush1.msra.mxu0 0.0
  %2405 = vmatprep.subr.mxu0 0.0
  %2406 = vmatpush1.msra.mxu0 0.0
  %2407 = vmatprep.subr.mxu0 0.0
  %2408 = vmatpush1.msra.mxu0 0.0
  %2409 = vmatprep.subr.mxu0 0.0
  %2410 = vmatpush1.msra.mxu0 0.0
  %2411 = vmatprep.subr.mxu0 0.0
  %2412 = vmatpush1.msra.mxu0 0.0
  %2413 = vmatprep.subr.mxu0 0.0
  %2414 = vmatpush1.msra.mxu0 0.0
  %2415 = vmatprep.subr.mxu0 0.0
  %2416 = vmatpush1.msra.mxu0 0.0
  %2417 = vmatprep.subr.mxu0 0.0
  %2418 = vmatpush1.msra.mxu0 0.0
  %2419 = vmatprep.subr.mxu0 0.0
  %2420 = vmatpush1.msra.mxu0 0.0
  %2421 = vmatprep.subr.mxu0 0.0
  %2422 = vmatpush1.msra.mxu0 0.0
  %2423 = vmatprep.subr.mxu0 0.0
  %2424 = vmatpush1.msra.mxu0 0.0
  %2425 = vmatprep.subr.mxu0 0.0
  %2426 = vmatpush1.msra.mxu0 0.0
  %2427 = vmatprep.subr.mxu0 0.0
  %2428 = vmatpush1.msra.mxu0 0.0
  %2429 = vmatprep.subr.mxu0 0.0
  %2430 = vmatpush1.msra.mxu0 0.0
  %2431 = vmatprep.subr.mxu0 0.0
  %2432 = vmatpush1.msra.mxu0 0.0
  %2433 = vmatprep.subr.mxu0 0.0
  %2434 = vmatpush1.msra.mxu0 0.0
  %2435 = vmatprep.subr.mxu0 0.0
  %2436 = vmatpush1.msra.mxu0 0.0
  %2437 = vmatprep.mubr.f32.mxu0 0.0
  %2438 = vmatmul.mubr.f32.gmra.mrb[0].mxu0 %v2371
  %v2439 = vpop.f32.mrb[0].mxu0
  %v2440 = vadd.f32 0.0, %v2439
  %v2441 = vpop.f32.mrb[0].mxu0
  %2442 = vdwg.mxu0
  %v2444 = vrot.slane %v2440, 2
  %v2446 = vadd.f32 %v2033, %v2444
  %v2447 = vxor.u32 %v2446, 2147483648
  %v2448 = vmul.f32 %v2447, 1.442695
  %v2449 = vpow.pop %v2448
  %v2450 = vadd.f32 %v2449, 1.0
  %v2451 = vrcp.pop %v2450
  %v2452 = vmul.f32 1.0, %v2451
  %v2453 = vtanh.pop %v2446
  %v2455 = vrot.slane %v2356, 6
  %v2457 = vmul.f32 %v2452, %v2455
  %2459 = vrot.lane.b32.xlu0 %v2453, 112
  %v2460 = vpop.permute.xlu0 %2459
  %v2462 = vmul.f32 %v2452, %v2460
  %2464 = vrot.lane.b32.xlu0 %v2462, 8
  %v2465 = vpop.permute.xlu0 %2464
  %v2467 = vadd.f32 %v2457, %v2465
  %v2468 = vtanh.pop %v2467
  %2470 = vrot.lane.b32.xlu0 %v2468, 16
  %v2471 = vpop.permute.xlu0 %2470
  %v2473 = vmul.f32 %v2452, %v2471
  %2475 = vrot.lane.b32.xlu0 %v2473, 104
  %v2476 = vpop.permute.xlu0 %2475
  %2478 = vst.msk [vmem:[#allocation2] sm:$0xc0] %vm548, %v2476
  %v2479 = vrot.slane %v2473, 6
  %2480 = vrot.lane.b32.xlu0 %v2479, 104
  %v2481 = vpop.permute.xlu0 %2480
  %v2482 = vsel %vm27, %v2481, 0
  %2484 = vmatprep.subr.mxu0 0.0
  %2485 = vmatpush1.msra.mxu0 %v13
  %2486 = vmatprep.subr.mxu0 0.0
  %2487 = vmatpush1.msra.mxu0 0.0
  %2488 = vmatprep.subr.mxu0 0.0
  %2489 = vmatpush1.msra.mxu0 0.0
  %2490 = vmatprep.subr.mxu0 0.0
  %2491 = vmatpush1.msra.mxu0 0.0
  %2492 = vmatprep.subr.mxu0 0.0
  %2493 = vmatpush1.msra.mxu0 0.0
  %2494 = vmatprep.subr.mxu0 0.0
  %2495 = vmatpush1.msra.mxu0 0.0
  %2496 = vmatprep.subr.mxu0 0.0
  %2497 = vmatpush1.msra.mxu0 0.0
  %2498 = vmatprep.subr.mxu0 0.0
  %2499 = vmatpush1.msra.mxu0 0.0
  %2500 = vmatprep.subr.mxu0 0.0
  %2501 = vmatpush1.msra.mxu0 0.0
  %2502 = vmatprep.subr.mxu0 0.0
  %2503 = vmatpush1.msra.mxu0 0.0
  %2504 = vmatprep.subr.mxu0 0.0
  %2505 = vmatpush1.msra.mxu0 0.0
  %2506 = vmatprep.subr.mxu0 0.0
  %2507 = vmatpush1.msra.mxu0 0.0
  %2508 = vmatprep.subr.mxu0 0.0
  %2509 = vmatpush1.msra.mxu0 0.0
  %2510 = vmatprep.subr.mxu0 0.0
  %2511 = vmatpush1.msra.mxu0 0.0
  %2512 = vmatprep.subr.mxu0 0.0
  %2513 = vmatpush1.msra.mxu0 0.0
  %2514 = vmatprep.subr.mxu0 0.0
  %2515 = vmatpush1.msra.mxu0 0.0
  %2516 = vmatprep.subr.mxu0 0.0
  %2517 = vmatpush1.msra.mxu0 0.0
  %2518 = vmatprep.subr.mxu0 0.0
  %2519 = vmatpush1.msra.mxu0 0.0
  %2520 = vmatprep.subr.mxu0 0.0
  %2521 = vmatpush1.msra.mxu0 0.0
  %2522 = vmatprep.subr.mxu0 0.0
  %2523 = vmatpush1.msra.mxu0 0.0
  %2524 = vmatprep.subr.mxu0 0.0
  %2525 = vmatpush1.msra.mxu0 0.0
  %2526 = vmatprep.subr.mxu0 0.0
  %2527 = vmatpush1.msra.mxu0 0.0
  %2528 = vmatprep.subr.mxu0 0.0
  %2529 = vmatpush1.msra.mxu0 0.0
  %2530 = vmatprep.subr.mxu0 0.0
  %2531 = vmatpush1.msra.mxu0 0.0
  %2532 = vmatprep.subr.mxu0 0.0
  %2533 = vmatpush1.msra.mxu0 0.0
  %2534 = vmatprep.subr.mxu0 0.0
  %2535 = vmatpush1.msra.mxu0 0.0
  %2536 = vmatprep.subr.mxu0 0.0
  %2537 = vmatpush1.msra.mxu0 0.0
  %2538 = vmatprep.subr.mxu0 0.0
  %2539 = vmatpush1.msra.mxu0 0.0
  %2540 = vmatprep.subr.mxu0 0.0
  %2541 = vmatpush1.msra.mxu0 0.0
  %2542 = vmatprep.subr.mxu0 0.0
  %2543 = vmatpush1.msra.mxu0 0.0
  %2544 = vmatprep.subr.mxu0 0.0
  %2545 = vmatpush1.msra.mxu0 0.0
  %2546 = vmatprep.subr.mxu0 0.0
  %2547 = vmatpush1.msra.mxu0 0.0
  %2548 = vmatprep.mubr.f32.mxu0 0.0
  %2549 = vmatmul.mubr.f32.gmra.mrb[0].mxu0 %v2482
  %v2550 = vpop.f32.mrb[0].mxu0
  %v2551 = vadd.f32 0.0, %v2550
  %v2552 = vpop.f32.mrb[0].mxu0
  %2553 = vdwg.mxu0
  %v2554 = vadd.f32 %v2038, %v2551
  %v2555 = vxor.u32 %v2554, 2147483648
  %v2556 = vmul.f32 %v2555, 1.442695
  %v2557 = vpow.pop %v2556
  %v2558 = vadd.f32 %v2557, 1.0
  %v2559 = vrcp.pop %v2558
  %v2560 = vmul.f32 1.0, %v2559
  %v2561 = vtanh.pop %v2554
  %v2563 = vrot.slane %v2467, 6
  %v2565 = vmul.f32 %v2560, %v2563
  %2567 = vrot.lane.b32.xlu0 %v2561, 112
  %v2568 = vpop.permute.xlu0 %2567
  %v2570 = vmul.f32 %v2560, %v2568
  %2572 = vrot.lane.b32.xlu0 %v2570, 8
  %v2573 = vpop.permute.xlu0 %2572
  %v2575 = vadd.f32 %v2565, %v2573
  %v2576 = vtanh.pop %v2575
  %2578 = vrot.lane.b32.xlu0 %v2576, 16
  %v2579 = vpop.permute.xlu0 %2578
  %v2581 = vmul.f32 %v2560, %v2579
  %2583 = vrot.lane.b32.xlu0 %v2581, 104
  %v2584 = vpop.permute.xlu0 %2583
  %2586 = vst.msk [vmem:[#allocation2 + $0x8] sm:$0x3] %vm215, %v2584
  %v2587 = vsel %vm27, %v2584, 0
  %2589 = vmatprep.subr.mxu0 0.0
  %2590 = vmatpush1.msra.mxu0 %v13
  %2591 = vmatprep.subr.mxu0 0.0
  %2592 = vmatpush1.msra.mxu0 0.0
  %2593 = vmatprep.subr.mxu0 0.0
  %2594 = vmatpush1.msra.mxu0 0.0
  %2595 = vmatprep.subr.mxu0 0.0
  %2596 = vmatpush1.msra.mxu0 0.0
  %2597 = vmatprep.subr.mxu0 0.0
  %2598 = vmatpush1.msra.mxu0 0.0
  %2599 = vmatprep.subr.mxu0 0.0
  %2600 = vmatpush1.msra.mxu0 0.0
  %2601 = vmatprep.subr.mxu0 0.0
  %2602 = vmatpush1.msra.mxu0 0.0
  %2603 = vmatprep.subr.mxu0 0.0
  %2604 = vmatpush1.msra.mxu0 0.0
  %2605 = vmatprep.subr.mxu0 0.0
  %2606 = vmatpush1.msra.mxu0 0.0
  %2607 = vmatprep.subr.mxu0 0.0
  %2608 = vmatpush1.msra.mxu0 0.0
  %2609 = vmatprep.subr.mxu0 0.0
  %2610 = vmatpush1.msra.mxu0 0.0
  %2611 = vmatprep.subr.mxu0 0.0
  %2612 = vmatpush1.msra.mxu0 0.0
  %2613 = vmatprep.subr.mxu0 0.0
  %2614 = vmatpush1.msra.mxu0 0.0
  %2615 = vmatprep.subr.mxu0 0.0
  %2616 = vmatpush1.msra.mxu0 0.0
  %2617 = vmatprep.subr.mxu0 0.0
  %2618 = vmatpush1.msra.mxu0 0.0
  %2619 = vmatprep.subr.mxu0 0.0
  %2620 = vmatpush1.msra.mxu0 0.0
  %2621 = vmatprep.subr.mxu0 0.0
  %2622 = vmatpush1.msra.mxu0 0.0
  %2623 = vmatprep.subr.mxu0 0.0
  %2624 = vmatpush1.msra.mxu0 0.0
  %2625 = vmatprep.subr.mxu0 0.0
  %2626 = vmatpush1.msra.mxu0 0.0
  %2627 = vmatprep.subr.mxu0 0.0
  %2628 = vmatpush1.msra.mxu0 0.0
  %2629 = vmatprep.subr.mxu0 0.0
  %2630 = vmatpush1.msra.mxu0 0.0
  %2631 = vmatprep.subr.mxu0 0.0
  %2632 = vmatpush1.msra.mxu0 0.0
  %2633 = vmatprep.subr.mxu0 0.0
  %2634 = vmatpush1.msra.mxu0 0.0
  %2635 = vmatprep.subr.mxu0 0.0
  %2636 = vmatpush1.msra.mxu0 0.0
  %2637 = vmatprep.subr.mxu0 0.0
  %2638 = vmatpush1.msra.mxu0 0.0
  %2639 = vmatprep.subr.mxu0 0.0
  %2640 = vmatpush1.msra.mxu0 0.0
  %2641 = vmatprep.subr.mxu0 0.0
  %2642 = vmatpush1.msra.mxu0 0.0
  %2643 = vmatprep.subr.mxu0 0.0
  %2644 = vmatpush1.msra.mxu0 0.0
  %2645 = vmatprep.subr.mxu0 0.0
  %2646 = vmatpush1.msra.mxu0 0.0
  %2647 = vmatprep.subr.mxu0 0.0
  %2648 = vmatpush1.msra.mxu0 0.0
  %2649 = vmatprep.subr.mxu0 0.0
  %2650 = vmatpush1.msra.mxu0 0.0
  %2651 = vmatprep.subr.mxu0 0.0
  %2652 = vmatpush1.msra.mxu0 0.0
  %2653 = vmatprep.mubr.f32.mxu0 0.0
  %2654 = vmatmul.mubr.f32.gmra.mrb[0].mxu0 %v2587
  %v2655 = vpop.f32.mrb[0].mxu0
  %v2656 = vadd.f32 0.0, %v2655
  %v2657 = vpop.f32.mrb[0].mxu0
  %2658 = vdwg.mxu0
  %v2660 = vrot.slane %v2656, 6
  %v2662 = vadd.f32 %v2038, %v2660
  %v2663 = vxor.u32 %v2662, 2147483648
  %v2664 = vmul.f32 %v2663, 1.442695
  %v2665 = vpow.pop %v2664
  %v2666 = vadd.f32 %v2665, 1.0
  %v2667 = vrcp.pop %v2666
  %v2668 = vmul.f32 1.0, %v2667
  %v2669 = vtanh.pop %v2662
  %v2671 = vrot.slane %v2575, 6
  %v2673 = vmul.f32 %v2668, %v2671
  %2675 = vrot.lane.b32.xlu0 %v2669, 112
  %v2676 = vpop.permute.xlu0 %2675
  %v2678 = vmul.f32 %v2668, %v2676
  %2680 = vrot.lane.b32.xlu0 %v2678, 8
  %v2681 = vpop.permute.xlu0 %2680
  %v2683 = vadd.f32 %v2673, %v2681
  %v2684 = vtanh.pop %v2683
  %2686 = vrot.lane.b32.xlu0 %v2684, 16
  %v2687 = vpop.permute.xlu0 %2686
  %v2689 = vmul.f32 %v2668, %v2687
  %2691 = vrot.lane.b32.xlu0 %v2689, 104
  %v2692 = vpop.permute.xlu0 %2691
  %2694 = vst.msk [vmem:[#allocation2 + $0x8] sm:$0xc] %vm324, %v2692
  %v2695 = vrot.slane %v2689, 2
  %2696 = vrot.lane.b32.xlu0 %v2695, 104
  %v2697 = vpop.permute.xlu0 %2696
  %v2698 = vsel %vm27, %v2697, 0
  %2700 = vmatprep.subr.mxu0 0.0
  %2701 = vmatpush1.msra.mxu0 %v13
  %2702 = vmatprep.subr.mxu0 0.0
  %2703 = vmatpush1.msra.mxu0 0.0
  %2704 = vmatprep.subr.mxu0 0.0
  %2705 = vmatpush1.msra.mxu0 0.0
  %2706 = vmatprep.subr.mxu0 0.0
  %2707 = vmatpush1.msra.mxu0 0.0
  %2708 = vmatprep.subr.mxu0 0.0
  %2709 = vmatpush1.msra.mxu0 0.0
  %2710 = vmatprep.subr.mxu0 0.0
  %2711 = vmatpush1.msra.mxu0 0.0
  %2712 = vmatprep.subr.mxu0 0.0
  %2713 = vmatpush1.msra.mxu0 0.0
  %2714 = vmatprep.subr.mxu0 0.0
  %2715 = vmatpush1.msra.mxu0 0.0
  %2716 = vmatprep.subr.mxu0 0.0
  %2717 = vmatpush1.msra.mxu0 0.0
  %2718 = vmatprep.subr.mxu0 0.0
  %2719 = vmatpush1.msra.mxu0 0.0
  %2720 = vmatprep.subr.mxu0 0.0
  %2721 = vmatpush1.msra.mxu0 0.0
  %2722 = vmatprep.subr.mxu0 0.0
  %2723 = vmatpush1.msra.mxu0 0.0
  %2724 = vmatprep.subr.mxu0 0.0
  %2725 = vmatpush1.msra.mxu0 0.0
  %2726 = vmatprep.subr.mxu0 0.0
  %2727 = vmatpush1.msra.mxu0 0.0
  %2728 = vmatprep.subr.mxu0 0.0
  %2729 = vmatpush1.msra.mxu0 0.0
  %2730 = vmatprep.subr.mxu0 0.0
  %2731 = vmatpush1.msra.mxu0 0.0
  %2732 = vmatprep.subr.mxu0 0.0
  %2733 = vmatpush1.msra.mxu0 0.0
  %2734 = vmatprep.subr.mxu0 0.0
  %2735 = vmatpush1.msra.mxu0 0.0
  %2736 = vmatprep.subr.mxu0 0.0
  %2737 = vmatpush1.msra.mxu0 0.0
  %2738 = vmatprep.subr.mxu0 0.0
  %2739 = vmatpush1.msra.mxu0 0.0
  %2740 = vmatprep.subr.mxu0 0.0
  %2741 = vmatpush1.msra.mxu0 0.0
  %2742 = vmatprep.subr.mxu0 0.0
  %2743 = vmatpush1.msra.mxu0 0.0
  %2744 = vmatprep.subr.mxu0 0.0
  %2745 = vmatpush1.msra.mxu0 0.0
  %2746 = vmatprep.subr.mxu0 0.0
  %2747 = vmatpush1.msra.mxu0 0.0
  %2748 = vmatprep.subr.mxu0 0.0
  %2749 = vmatpush1.msra.mxu0 0.0
  %2750 = vmatprep.subr.mxu0 0.0
  %2751 = vmatpush1.msra.mxu0 0.0
  %2752 = vmatprep.subr.mxu0 0.0
  %2753 = vmatpush1.msra.mxu0 0.0
  %2754 = vmatprep.subr.mxu0 0.0
  %2755 = vmatpush1.msra.mxu0 0.0
  %2756 = vmatprep.subr.mxu0 0.0
  %2757 = vmatpush1.msra.mxu0 0.0
  %2758 = vmatprep.subr.mxu0 0.0
  %2759 = vmatpush1.msra.mxu0 0.0
  %2760 = vmatprep.subr.mxu0 0.0
  %2761 = vmatpush1.msra.mxu0 0.0
  %2762 = vmatprep.subr.mxu0 0.0
  %2763 = vmatpush1.msra.mxu0 0.0
  %2764 = vmatprep.mubr.f32.mxu0 0.0
  %2765 = vmatmul.mubr.f32.gmra.mrb[0].mxu0 %v2698
  %v2766 = vpop.f32.mrb[0].mxu0
  %v2767 = vadd.f32 0.0, %v2766
  %v2768 = vpop.f32.mrb[0].mxu0
  %2769 = vdwg.mxu0
  %v2771 = vrot.slane %v2767, 4
  %v2773 = vadd.f32 %v2038, %v2771
  %v2774 = vxor.u32 %v2773, 2147483648
  %v2775 = vmul.f32 %v2774, 1.442695
  %v2776 = vpow.pop %v2775
  %v2777 = vadd.f32 %v2776, 1.0
  %v2778 = vrcp.pop %v2777
  %v2779 = vmul.f32 1.0, %v2778
  %v2780 = vtanh.pop %v2773
  %v2782 = vrot.slane %v2683, 6
  %v2784 = vmul.f32 %v2779, %v2782
  %2786 = vrot.lane.b32.xlu0 %v2780, 112
  %v2787 = vpop.permute.xlu0 %2786
  %v2789 = vmul.f32 %v2779, %v2787
  %2791 = vrot.lane.b32.xlu0 %v2789, 8
  %v2792 = vpop.permute.xlu0 %2791
  %v2794 = vadd.f32 %v2784, %v2792
  %v2795 = vtanh.pop %v2794
  %2797 = vrot.lane.b32.xlu0 %v2795, 16
  %v2798 = vpop.permute.xlu0 %2797
  %v2800 = vmul.f32 %v2779, %v2798
  %2802 = vrot.lane.b32.xlu0 %v2800, 104
  %v2803 = vpop.permute.xlu0 %2802
  %2805 = vst.msk [vmem:[#allocation2 + $0x8] sm:$0x30] %vm436, %v2803
  %v2806 = vrot.slane %v2800, 4
  %2807 = vrot.lane.b32.xlu0 %v2806, 104
  %v2808 = vpop.permute.xlu0 %2807
  %v2809 = vsel %vm27, %v2808, 0
  %2811 = vmatprep.subr.mxu0 0.0
  %2812 = vmatpush1.msra.mxu0 %v13
  %2813 = vmatprep.subr.mxu0 0.0
  %2814 = vmatpush1.msra.mxu0 0.0
  %2815 = vmatprep.subr.mxu0 0.0
  %2816 = vmatpush1.msra.mxu0 0.0
  %2817 = vmatprep.subr.mxu0 0.0
  %2818 = vmatpush1.msra.mxu0 0.0
  %2819 = vmatprep.subr.mxu0 0.0
  %2820 = vmatpush1.msra.mxu0 0.0
  %2821 = vmatprep.subr.mxu0 0.0
  %2822 = vmatpush1.msra.mxu0 0.0
  %2823 = vmatprep.subr.mxu0 0.0
  %2824 = vmatpush1.msra.mxu0 0.0
  %2825 = vmatprep.subr.mxu0 0.0
  %2826 = vmatpush1.msra.mxu0 0.0
  %2827 = vmatprep.subr.mxu0 0.0
  %2828 = vmatpush1.msra.mxu0 0.0
  %2829 = vmatprep.subr.mxu0 0.0
  %2830 = vmatpush1.msra.mxu0 0.0
  %2831 = vmatprep.subr.mxu0 0.0
  %2832 = vmatpush1.msra.mxu0 0.0
  %2833 = vmatprep.subr.mxu0 0.0
  %2834 = vmatpush1.msra.mxu0 0.0
  %2835 = vmatprep.subr.mxu0 0.0
  %2836 = vmatpush1.msra.mxu0 0.0
  %2837 = vmatprep.subr.mxu0 0.0
  %2838 = vmatpush1.msra.mxu0 0.0
  %2839 = vmatprep.subr.mxu0 0.0
  %2840 = vmatpush1.msra.mxu0 0.0
  %2841 = vmatprep.subr.mxu0 0.0
  %2842 = vmatpush1.msra.mxu0 0.0
  %2843 = vmatprep.subr.mxu0 0.0
  %2844 = vmatpush1.msra.mxu0 0.0
  %2845 = vmatprep.subr.mxu0 0.0
  %2846 = vmatpush1.msra.mxu0 0.0
  %2847 = vmatprep.subr.mxu0 0.0
  %2848 = vmatpush1.msra.mxu0 0.0
  %2849 = vmatprep.subr.mxu0 0.0
  %2850 = vmatpush1.msra.mxu0 0.0
  %2851 = vmatprep.subr.mxu0 0.0
  %2852 = vmatpush1.msra.mxu0 0.0
  %2853 = vmatprep.subr.mxu0 0.0
  %2854 = vmatpush1.msra.mxu0 0.0
  %2855 = vmatprep.subr.mxu0 0.0
  %2856 = vmatpush1.msra.mxu0 0.0
  %2857 = vmatprep.subr.mxu0 0.0
  %2858 = vmatpush1.msra.mxu0 0.0
  %2859 = vmatprep.subr.mxu0 0.0
  %2860 = vmatpush1.msra.mxu0 0.0
  %2861 = vmatprep.subr.mxu0 0.0
  %2862 = vmatpush1.msra.mxu0 0.0
  %2863 = vmatprep.subr.mxu0 0.0
  %2864 = vmatpush1.msra.mxu0 0.0
  %2865 = vmatprep.subr.mxu0 0.0
  %2866 = vmatpush1.msra.mxu0 0.0
  %2867 = vmatprep.subr.mxu0 0.0
  %2868 = vmatpush1.msra.mxu0 0.0
  %2869 = vmatprep.subr.mxu0 0.0
  %2870 = vmatpush1.msra.mxu0 0.0
  %2871 = vmatprep.subr.mxu0 0.0
  %2872 = vmatpush1.msra.mxu0 0.0
  %2873 = vmatprep.subr.mxu0 0.0
  %2874 = vmatpush1.msra.mxu0 0.0
  %2875 = vmatprep.mubr.f32.mxu0 0.0
  %2876 = vmatmul.mubr.f32.gmra.mrb[0].mxu0 %v2809
  %v2877 = vpop.f32.mrb[0].mxu0
  %v2878 = vadd.f32 0.0, %v2877
  %v2879 = vpop.f32.mrb[0].mxu0
  %2880 = vdwg.mxu0
  %v2882 = vrot.slane %v2878, 2
  %v2884 = vadd.f32 %v2038, %v2882
  %v2885 = vxor.u32 %v2884, 2147483648
  %v2886 = vmul.f32 %v2885, 1.442695
  %v2887 = vpow.pop %v2886
  %v2888 = vadd.f32 %v2887, 1.0
  %v2889 = vrcp.pop %v2888
  %v2890 = vmul.f32 1.0, %v2889
  %v2891 = vtanh.pop %v2884
  %v2893 = vrot.slane %v2794, 6
  %v2895 = vmul.f32 %v2890, %v2893
  %2897 = vrot.lane.b32.xlu0 %v2891, 112
  %v2898 = vpop.permute.xlu0 %2897
  %v2900 = vmul.f32 %v2890, %v2898
  %2902 = vrot.lane.b32.xlu0 %v2900, 8
  %v2903 = vpop.permute.xlu0 %2902
  %v2905 = vadd.f32 %v2895, %v2903
  %v2906 = vtanh.pop %v2905
  %2908 = vrot.lane.b32.xlu0 %v2906, 16
  %v2909 = vpop.permute.xlu0 %2908
  %v2911 = vmul.f32 %v2890, %v2909
  %2913 = vrot.lane.b32.xlu0 %v2911, 104
  %v2914 = vpop.permute.xlu0 %2913
  %2916 = vst.msk [vmem:[#allocation2 + $0x8] sm:$0xc0] %vm548, %v2914
  %v2917 = vld [vmem:[#allocation2] sm:$0xff]
  %v2918 = vld [vmem:[#allocation2 + $0x8] sm:$0xff]
  %v2919 = vld [vmem:[%s1 + $0x30] sm:$0xff]
  %v2920 = vld [vmem:[%s1 + $0x4b] sm:$0x1]
  %v2921 = vlaneseq
  %v2922 = vshrl.u32 %v2921, 7
  %v2923 = vsub.s32 0, %v2922
  %v2924 = vrot.slane %v2920, %v2923
  %v2926 = vsel %vm27, %v2917, 0
  %v2929 = vsel %vm27, %v2918, 0
  %2931 = vmatprep.subr.mxu0 0.0
  %2932 = vmatpush1.msra.mxu0 %v2919
  %2933 = vmatprep.subr.mxu0 0.0
  %2934 = vmatpush1.msra.mxu0 0.0
  %2935 = vmatprep.subr.mxu0 0.0
  %2936 = vmatpush1.msra.mxu0 0.0
  %2937 = vmatprep.subr.mxu0 0.0
  %2938 = vmatpush1.msra.mxu0 0.0
  %2939 = vmatprep.subr.mxu0 0.0
  %2940 = vmatpush1.msra.mxu0 0.0
  %2941 = vmatprep.subr.mxu0 0.0
  %2942 = vmatpush1.msra.mxu0 0.0
  %2943 = vmatprep.subr.mxu0 0.0
  %2944 = vmatpush1.msra.mxu0 0.0
  %2945 = vmatprep.subr.mxu0 0.0
  %2946 = vmatpush1.msra.mxu0 0.0
  %2947 = vmatprep.subr.mxu0 0.0
  %2948 = vmatpush1.msra.mxu0 0.0
  %2949 = vmatprep.subr.mxu0 0.0
  %2950 = vmatpush1.msra.mxu0 0.0
  %2951 = vmatprep.subr.mxu0 0.0
  %2952 = vmatpush1.msra.mxu0 0.0
  %2953 = vmatprep.subr.mxu0 0.0
  %2954 = vmatpush1.msra.mxu0 0.0
  %2955 = vmatprep.subr.mxu0 0.0
  %2956 = vmatpush1.msra.mxu0 0.0
  %2957 = vmatprep.subr.mxu0 0.0
  %2958 = vmatpush1.msra.mxu0 0.0
  %2959 = vmatprep.subr.mxu0 0.0
  %2960 = vmatpush1.msra.mxu0 0.0
  %2961 = vmatprep.subr.mxu0 0.0
  %2962 = vmatpush1.msra.mxu0 0.0
  %2963 = vmatprep.subr.mxu0 0.0
  %2964 = vmatpush1.msra.mxu0 0.0
  %2965 = vmatprep.subr.mxu0 0.0
  %2966 = vmatpush1.msra.mxu0 0.0
  %2967 = vmatprep.subr.mxu0 0.0
  %2968 = vmatpush1.msra.mxu0 0.0
  %2969 = vmatprep.subr.mxu0 0.0
  %2970 = vmatpush1.msra.mxu0 0.0
  %2971 = vmatprep.subr.mxu0 0.0
  %2972 = vmatpush1.msra.mxu0 0.0
  %2973 = vmatprep.subr.mxu0 0.0
  %2974 = vmatpush1.msra.mxu0 0.0
  %2975 = vmatprep.subr.mxu0 0.0
  %2976 = vmatpush1.msra.mxu0 0.0
  %2977 = vmatprep.subr.mxu0 0.0
  %2978 = vmatpush1.msra.mxu0 0.0
  %2979 = vmatprep.subr.mxu0 0.0
  %2980 = vmatpush1.msra.mxu0 0.0
  %2981 = vmatprep.subr.mxu0 0.0
  %2982 = vmatpush1.msra.mxu0 0.0
  %2983 = vmatprep.subr.mxu0 0.0
  %2984 = vmatpush1.msra.mxu0 0.0
  %2985 = vmatprep.subr.mxu0 0.0
  %2986 = vmatpush1.msra.mxu0 0.0
  %2987 = vmatprep.subr.mxu0 0.0
  %2988 = vmatpush1.msra.mxu0 0.0
  %2989 = vmatprep.subr.mxu0 0.0
  %2990 = vmatpush1.msra.mxu0 0.0
  %2991 = vmatprep.subr.mxu0 0.0
  %2992 = vmatpush1.msra.mxu0 0.0
  %2993 = vmatprep.subr.mxu0 0.0
  %2994 = vmatpush1.msra.mxu0 0.0
  %2995 = vmatprep.mubr.f32.mxu0 0.0
  %2996 = vmatmul.mubr.f32.gmra.mrb[0].mxu0 %v2926
  %v2997 = vpop.f32.mrb[0].mxu0
  %v2998 = vadd.f32 %v2924, %v2997
  %v2999 = vpop.f32.mrb[0].mxu0
  %3000 = vmatprep.mubr.f32.mxu0 0.0
  %3001 = vmatmul.mubr.f32.gmra.mrb[0].mxu0 %v2929
  %v3002 = vpop.f32.mrb[0].mxu0
  %v3003 = vadd.f32 %v2924, %v3002
  %v3004 = vpop.f32.mrb[0].mxu0
  %3005 = vdwg.mxu0
  %v3006 = vrot.slane %v1946, 6
  %3007 = vrot.lane.b32.xlu0 %v3006, 104
  %v3008 = vpop.permute.xlu0 %3007
  %v3009 = vsel %vm27, %v3008, 0
  %3011 = vmatprep.subr.mxu0 0.0
  %3012 = vmatpush1.msra.mxu0 %v14
  %3013 = vmatprep.subr.mxu0 0.0
  %3014 = vmatpush1.msra.mxu0 0.0
  %3015 = vmatprep.subr.mxu0 0.0
  %3016 = vmatpush1.msra.mxu0 0.0
  %3017 = vmatprep.subr.mxu0 0.0
  %3018 = vmatpush1.msra.mxu0 0.0
  %3019 = vmatprep.subr.mxu0 0.0
  %3020 = vmatpush1.msra.mxu0 0.0
  %3021 = vmatprep.subr.mxu0 0.0
  %3022 = vmatpush1.msra.mxu0 0.0
  %3023 = vmatprep.subr.mxu0 0.0
  %3024 = vmatpush1.msra.mxu0 0.0
  %3025 = vmatprep.subr.mxu0 0.0
  %3026 = vmatpush1.msra.mxu0 0.0
  %3027 = vmatprep.subr.mxu0 0.0
  %3028 = vmatpush1.msra.mxu0 0.0
  %3029 = vmatprep.subr.mxu0 0.0
  %3030 = vmatpush1.msra.mxu0 0.0
  %3031 = vmatprep.subr.mxu0 0.0
  %3032 = vmatpush1.msra.mxu0 0.0
  %3033 = vmatprep.subr.mxu0 0.0
  %3034 = vmatpush1.msra.mxu0 0.0
  %3035 = vmatprep.subr.mxu0 0.0
  %3036 = vmatpush1.msra.mxu0 0.0
  %3037 = vmatprep.subr.mxu0 0.0
  %3038 = vmatpush1.msra.mxu0 0.0
  %3039 = vmatprep.subr.mxu0 0.0
  %3040 = vmatpush1.msra.mxu0 0.0
  %3041 = vmatprep.subr.mxu0 0.0
  %3042 = vmatpush1.msra.mxu0 0.0
  %3043 = vmatprep.subr.mxu0 0.0
  %3044 = vmatpush1.msra.mxu0 0.0
  %3045 = vmatprep.subr.mxu0 0.0
  %3046 = vmatpush1.msra.mxu0 0.0
  %3047 = vmatprep.subr.mxu0 0.0
  %3048 = vmatpush1.msra.mxu0 0.0
  %3049 = vmatprep.subr.mxu0 0.0
  %3050 = vmatpush1.msra.mxu0 0.0
  %3051 = vmatprep.subr.mxu0 0.0
  %3052 = vmatpush1.msra.mxu0 0.0
  %3053 = vmatprep.subr.mxu0 0.0
  %3054 = vmatpush1.msra.mxu0 0.0
  %3055 = vmatprep.subr.mxu0 0.0
  %3056 = vmatpush1.msra.mxu0 0.0
  %3057 = vmatprep.subr.mxu0 0.0
  %3058 = vmatpush1.msra.mxu0 0.0
  %3059 = vmatprep.subr.mxu0 0.0
  %3060 = vmatpush1.msra.mxu0 0.0
  %3061 = vmatprep.subr.mxu0 0.0
  %3062 = vmatpush1.msra.mxu0 0.0
  %3063 = vmatprep.subr.mxu0 0.0
  %3064 = vmatpush1.msra.mxu0 0.0
  %3065 = vmatprep.subr.mxu0 0.0
  %3066 = vmatpush1.msra.mxu0 0.0
  %3067 = vmatprep.subr.mxu0 0.0
  %3068 = vmatpush1.msra.mxu0 0.0
  %3069 = vmatprep.subr.mxu0 0.0
  %3070 = vmatpush1.msra.mxu0 0.0
  %3071 = vmatprep.subr.mxu0 0.0
  %3072 = vmatpush1.msra.mxu0 0.0
  %3073 = vmatprep.subr.mxu0 0.0
  %3074 = vmatpush1.msra.mxu0 0.0
  %3075 = vmatprep.mubr.f32.mxu0 0.0
  %3076 = vmatmul.mubr.f32.gmra.mrb[0].mxu0 %v3009
  %v3077 = vpop.f32.mrb[0].mxu0
  %v3078 = vadd.f32 0.0, %v3077
  %v3079 = vpop.f32.mrb[0].mxu0
  %3080 = vdwg.mxu0
  %v3081 = vadd.f32 %v2998, %v3078
  %v3082 = vxor.u32 %v3081, 2147483648
  %v3083 = vmul.f32 %v3082, 1.442695
  %v3084 = vpow.pop %v3083
  %v3085 = vadd.f32 %v3084, 1.0
  %v3086 = vrcp.pop %v3085
  %v3087 = vmul.f32 1.0, %v3086
  %v3088 = vtanh.pop %v3081
  %v3090 = vrot.slane %v1940, 6
  %v3092 = vmul.f32 %v3087, %v3090
  %3094 = vrot.lane.b32.xlu0 %v3088, 112
  %v3095 = vpop.permute.xlu0 %3094
  %v3097 = vmul.f32 %v3087, %v3095
  %3099 = vrot.lane.b32.xlu0 %v3097, 8
  %v3100 = vpop.permute.xlu0 %3099
  %v3102 = vadd.f32 %v3092, %v3100
  %v3103 = vtanh.pop %v3102
  %3105 = vrot.lane.b32.xlu0 %v3103, 16
  %v3106 = vpop.permute.xlu0 %3105
  %v3108 = vmul.f32 %v3087, %v3106
  %3110 = vrot.lane.b32.xlu0 %v3108, 104
  %v3111 = vpop.permute.xlu0 %3110
  %3113 = vst.msk [vmem:[#allocation2] sm:$0x3] %vm215, %v3111
  %v3114 = vsel %vm27, %v3111, 0
  %3116 = vmatprep.subr.mxu0 0.0
  %3117 = vmatpush1.msra.mxu0 %v14
  %3118 = vmatprep.subr.mxu0 0.0
  %3119 = vmatpush1.msra.mxu0 0.0
  %3120 = vmatprep.subr.mxu0 0.0
  %3121 = vmatpush1.msra.mxu0 0.0
  %3122 = vmatprep.subr.mxu0 0.0
  %3123 = vmatpush1.msra.mxu0 0.0
  %3124 = vmatprep.subr.mxu0 0.0
  %3125 = vmatpush1.msra.mxu0 0.0
  %3126 = vmatprep.subr.mxu0 0.0
  %3127 = vmatpush1.msra.mxu0 0.0
  %3128 = vmatprep.subr.mxu0 0.0
  %3129 = vmatpush1.msra.mxu0 0.0
  %3130 = vmatprep.subr.mxu0 0.0
  %3131 = vmatpush1.msra.mxu0 0.0
  %3132 = vmatprep.subr.mxu0 0.0
  %3133 = vmatpush1.msra.mxu0 0.0
  %3134 = vmatprep.subr.mxu0 0.0
  %3135 = vmatpush1.msra.mxu0 0.0
  %3136 = vmatprep.subr.mxu0 0.0
  %3137 = vmatpush1.msra.mxu0 0.0
  %3138 = vmatprep.subr.mxu0 0.0
  %3139 = vmatpush1.msra.mxu0 0.0
  %3140 = vmatprep.subr.mxu0 0.0
  %3141 = vmatpush1.msra.mxu0 0.0
  %3142 = vmatprep.subr.mxu0 0.0
  %3143 = vmatpush1.msra.mxu0 0.0
  %3144 = vmatprep.subr.mxu0 0.0
  %3145 = vmatpush1.msra.mxu0 0.0
  %3146 = vmatprep.subr.mxu0 0.0
  %3147 = vmatpush1.msra.mxu0 0.0
  %3148 = vmatprep.subr.mxu0 0.0
  %3149 = vmatpush1.msra.mxu0 0.0
  %3150 = vmatprep.subr.mxu0 0.0
  %3151 = vmatpush1.msra.mxu0 0.0
  %3152 = vmatprep.subr.mxu0 0.0
  %3153 = vmatpush1.msra.mxu0 0.0
  %3154 = vmatprep.subr.mxu0 0.0
  %3155 = vmatpush1.msra.mxu0 0.0
  %3156 = vmatprep.subr.mxu0 0.0
  %3157 = vmatpush1.msra.mxu0 0.0
  %3158 = vmatprep.subr.mxu0 0.0
  %3159 = vmatpush1.msra.mxu0 0.0
  %3160 = vmatprep.subr.mxu0 0.0
  %3161 = vmatpush1.msra.mxu0 0.0
  %3162 = vmatprep.subr.mxu0 0.0
  %3163 = vmatpush1.msra.mxu0 0.0
  %3164 = vmatprep.subr.mxu0 0.0
  %3165 = vmatpush1.msra.mxu0 0.0
  %3166 = vmatprep.subr.mxu0 0.0
  %3167 = vmatpush1.msra.mxu0 0.0
  %3168 = vmatprep.subr.mxu0 0.0
  %3169 = vmatpush1.msra.mxu0 0.0
  %3170 = vmatprep.subr.mxu0 0.0
  %3171 = vmatpush1.msra.mxu0 0.0
  %3172 = vmatprep.subr.mxu0 0.0
  %3173 = vmatpush1.msra.mxu0 0.0
  %3174 = vmatprep.subr.mxu0 0.0
  %3175 = vmatpush1.msra.mxu0 0.0
  %3176 = vmatprep.subr.mxu0 0.0
  %3177 = vmatpush1.msra.mxu0 0.0
  %3178 = vmatprep.subr.mxu0 0.0
  %3179 = vmatpush1.msra.mxu0 0.0
  %3180 = vmatprep.mubr.f32.mxu0 0.0
  %3181 = vmatmul.mubr.f32.gmra.mrb[0].mxu0 %v3114
  %v3182 = vpop.f32.mrb[0].mxu0
  %v3183 = vadd.f32 0.0, %v3182
  %v3184 = vpop.f32.mrb[0].mxu0
  %3185 = vdwg.mxu0
  %v3187 = vrot.slane %v3183, 6
  %v3189 = vadd.f32 %v2998, %v3187
  %v3190 = vxor.u32 %v3189, 2147483648
  %v3191 = vmul.f32 %v3190, 1.442695
  %v3192 = vpow.pop %v3191
  %v3193 = vadd.f32 %v3192, 1.0
  %v3194 = vrcp.pop %v3193
  %v3195 = vmul.f32 1.0, %v3194
  %v3196 = vtanh.pop %v3189
  %v3198 = vrot.slane %v3102, 6
  %v3200 = vmul.f32 %v3195, %v3198
  %3202 = vrot.lane.b32.xlu0 %v3196, 112
  %v3203 = vpop.permute.xlu0 %3202
  %v3205 = vmul.f32 %v3195, %v3203
  %3207 = vrot.lane.b32.xlu0 %v3205, 8
  %v3208 = vpop.permute.xlu0 %3207
  %v3210 = vadd.f32 %v3200, %v3208
  %v3211 = vtanh.pop %v3210
  %3213 = vrot.lane.b32.xlu0 %v3211, 16
  %v3214 = vpop.permute.xlu0 %3213
  %v3216 = vmul.f32 %v3195, %v3214
  %3218 = vrot.lane.b32.xlu0 %v3216, 104
  %v3219 = vpop.permute.xlu0 %3218
  %3221 = vst.msk [vmem:[#allocation2] sm:$0xc] %vm324, %v3219
  %v3222 = vrot.slane %v3216, 2
  %3223 = vrot.lane.b32.xlu0 %v3222, 104
  %v3224 = vpop.permute.xlu0 %3223
  %v3225 = vsel %vm27, %v3224, 0
  %3227 = vmatprep.subr.mxu0 0.0
  %3228 = vmatpush1.msra.mxu0 %v14
  %3229 = vmatprep.subr.mxu0 0.0
  %3230 = vmatpush1.msra.mxu0 0.0
  %3231 = vmatprep.subr.mxu0 0.0
  %3232 = vmatpush1.msra.mxu0 0.0
  %3233 = vmatprep.subr.mxu0 0.0
  %3234 = vmatpush1.msra.mxu0 0.0
  %3235 = vmatprep.subr.mxu0 0.0
  %3236 = vmatpush1.msra.mxu0 0.0
  %3237 = vmatprep.subr.mxu0 0.0
  %3238 = vmatpush1.msra.mxu0 0.0
  %3239 = vmatprep.subr.mxu0 0.0
  %3240 = vmatpush1.msra.mxu0 0.0
  %3241 = vmatprep.subr.mxu0 0.0
  %3242 = vmatpush1.msra.mxu0 0.0
  %3243 = vmatprep.subr.mxu0 0.0
  %3244 = vmatpush1.msra.mxu0 0.0
  %3245 = vmatprep.subr.mxu0 0.0
  %3246 = vmatpush1.msra.mxu0 0.0
  %3247 = vmatprep.subr.mxu0 0.0
  %3248 = vmatpush1.msra.mxu0 0.0
  %3249 = vmatprep.subr.mxu0 0.0
  %3250 = vmatpush1.msra.mxu0 0.0
  %3251 = vmatprep.subr.mxu0 0.0
  %3252 = vmatpush1.msra.mxu0 0.0
  %3253 = vmatprep.subr.mxu0 0.0
  %3254 = vmatpush1.msra.mxu0 0.0
  %3255 = vmatprep.subr.mxu0 0.0
  %3256 = vmatpush1.msra.mxu0 0.0
  %3257 = vmatprep.subr.mxu0 0.0
  %3258 = vmatpush1.msra.mxu0 0.0
  %3259 = vmatprep.subr.mxu0 0.0
  %3260 = vmatpush1.msra.mxu0 0.0
  %3261 = vmatprep.subr.mxu0 0.0
  %3262 = vmatpush1.msra.mxu0 0.0
  %3263 = vmatprep.subr.mxu0 0.0
  %3264 = vmatpush1.msra.mxu0 0.0
  %3265 = vmatprep.subr.mxu0 0.0
  %3266 = vmatpush1.msra.mxu0 0.0
  %3267 = vmatprep.subr.mxu0 0.0
  %3268 = vmatpush1.msra.mxu0 0.0
  %3269 = vmatprep.subr.mxu0 0.0
  %3270 = vmatpush1.msra.mxu0 0.0
  %3271 = vmatprep.subr.mxu0 0.0
  %3272 = vmatpush1.msra.mxu0 0.0
  %3273 = vmatprep.subr.mxu0 0.0
  %3274 = vmatpush1.msra.mxu0 0.0
  %3275 = vmatprep.subr.mxu0 0.0
  %3276 = vmatpush1.msra.mxu0 0.0
  %3277 = vmatprep.subr.mxu0 0.0
  %3278 = vmatpush1.msra.mxu0 0.0
  %3279 = vmatprep.subr.mxu0 0.0
  %3280 = vmatpush1.msra.mxu0 0.0
  %3281 = vmatprep.subr.mxu0 0.0
  %3282 = vmatpush1.msra.mxu0 0.0
  %3283 = vmatprep.subr.mxu0 0.0
  %3284 = vmatpush1.msra.mxu0 0.0
  %3285 = vmatprep.subr.mxu0 0.0
  %3286 = vmatpush1.msra.mxu0 0.0
  %3287 = vmatprep.subr.mxu0 0.0
  %3288 = vmatpush1.msra.mxu0 0.0
  %3289 = vmatprep.subr.mxu0 0.0
  %3290 = vmatpush1.msra.mxu0 0.0
  %3291 = vmatprep.mubr.f32.mxu0 0.0
  %3292 = vmatmul.mubr.f32.gmra.mrb[0].mxu0 %v3225
  %v3293 = vpop.f32.mrb[0].mxu0
  %v3294 = vadd.f32 0.0, %v3293
  %v3295 = vpop.f32.mrb[0].mxu0
  %3296 = vdwg.mxu0
  %v3298 = vrot.slane %v3294, 4
  %v3300 = vadd.f32 %v2998, %v3298
  %v3301 = vxor.u32 %v3300, 2147483648
  %v3302 = vmul.f32 %v3301, 1.442695
  %v3303 = vpow.pop %v3302
  %v3304 = vadd.f32 %v3303, 1.0
  %v3305 = vrcp.pop %v3304
  %v3306 = vmul.f32 1.0, %v3305
  %v3307 = vtanh.pop %v3300
  %v3309 = vrot.slane %v3210, 6
  %v3311 = vmul.f32 %v3306, %v3309
  %3313 = vrot.lane.b32.xlu0 %v3307, 112
  %v3314 = vpop.permute.xlu0 %3313
  %v3316 = vmul.f32 %v3306, %v3314
  %3318 = vrot.lane.b32.xlu0 %v3316, 8
  %v3319 = vpop.permute.xlu0 %3318
  %v3321 = vadd.f32 %v3311, %v3319
  %v3322 = vtanh.pop %v3321
  %3324 = vrot.lane.b32.xlu0 %v3322, 16
  %v3325 = vpop.permute.xlu0 %3324
  %v3327 = vmul.f32 %v3306, %v3325
  %3329 = vrot.lane.b32.xlu0 %v3327, 104
  %v3330 = vpop.permute.xlu0 %3329
  %3332 = vst.msk [vmem:[#allocation2] sm:$0x30] %vm436, %v3330
  %v3333 = vrot.slane %v3327, 4
  %3334 = vrot.lane.b32.xlu0 %v3333, 104
  %v3335 = vpop.permute.xlu0 %3334
  %v3336 = vsel %vm27, %v3335, 0
  %3338 = vmatprep.subr.mxu0 0.0
  %3339 = vmatpush1.msra.mxu0 %v14
  %3340 = vmatprep.subr.mxu0 0.0
  %3341 = vmatpush1.msra.mxu0 0.0
  %3342 = vmatprep.subr.mxu0 0.0
  %3343 = vmatpush1.msra.mxu0 0.0
  %3344 = vmatprep.subr.mxu0 0.0
  %3345 = vmatpush1.msra.mxu0 0.0
  %3346 = vmatprep.subr.mxu0 0.0
  %3347 = vmatpush1.msra.mxu0 0.0
  %3348 = vmatprep.subr.mxu0 0.0
  %3349 = vmatpush1.msra.mxu0 0.0
  %3350 = vmatprep.subr.mxu0 0.0
  %3351 = vmatpush1.msra.mxu0 0.0
  %3352 = vmatprep.subr.mxu0 0.0
  %3353 = vmatpush1.msra.mxu0 0.0
  %3354 = vmatprep.subr.mxu0 0.0
  %3355 = vmatpush1.msra.mxu0 0.0
  %3356 = vmatprep.subr.mxu0 0.0
  %3357 = vmatpush1.msra.mxu0 0.0
  %3358 = vmatprep.subr.mxu0 0.0
  %3359 = vmatpush1.msra.mxu0 0.0
  %3360 = vmatprep.subr.mxu0 0.0
  %3361 = vmatpush1.msra.mxu0 0.0
  %3362 = vmatprep.subr.mxu0 0.0
  %3363 = vmatpush1.msra.mxu0 0.0
  %3364 = vmatprep.subr.mxu0 0.0
  %3365 = vmatpush1.msra.mxu0 0.0
  %3366 = vmatprep.subr.mxu0 0.0
  %3367 = vmatpush1.msra.mxu0 0.0
  %3368 = vmatprep.subr.mxu0 0.0
  %3369 = vmatpush1.msra.mxu0 0.0
  %3370 = vmatprep.subr.mxu0 0.0
  %3371 = vmatpush1.msra.mxu0 0.0
  %3372 = vmatprep.subr.mxu0 0.0
  %3373 = vmatpush1.msra.mxu0 0.0
  %3374 = vmatprep.subr.mxu0 0.0
  %3375 = vmatpush1.msra.mxu0 0.0
  %3376 = vmatprep.subr.mxu0 0.0
  %3377 = vmatpush1.msra.mxu0 0.0
  %3378 = vmatprep.subr.mxu0 0.0
  %3379 = vmatpush1.msra.mxu0 0.0
  %3380 = vmatprep.subr.mxu0 0.0
  %3381 = vmatpush1.msra.mxu0 0.0
  %3382 = vmatprep.subr.mxu0 0.0
  %3383 = vmatpush1.msra.mxu0 0.0
  %3384 = vmatprep.subr.mxu0 0.0
  %3385 = vmatpush1.msra.mxu0 0.0
  %3386 = vmatprep.subr.mxu0 0.0
  %3387 = vmatpush1.msra.mxu0 0.0
  %3388 = vmatprep.subr.mxu0 0.0
  %3389 = vmatpush1.msra.mxu0 0.0
  %3390 = vmatprep.subr.mxu0 0.0
  %3391 = vmatpush1.msra.mxu0 0.0
  %3392 = vmatprep.subr.mxu0 0.0
  %3393 = vmatpush1.msra.mxu0 0.0
  %3394 = vmatprep.subr.mxu0 0.0
  %3395 = vmatpush1.msra.mxu0 0.0
  %3396 = vmatprep.subr.mxu0 0.0
  %3397 = vmatpush1.msra.mxu0 0.0
  %3398 = vmatprep.subr.mxu0 0.0
  %3399 = vmatpush1.msra.mxu0 0.0
  %3400 = vmatprep.subr.mxu0 0.0
  %3401 = vmatpush1.msra.mxu0 0.0
  %3402 = vmatprep.mubr.f32.mxu0 0.0
  %3403 = vmatmul.mubr.f32.gmra.mrb[0].mxu0 %v3336
  %v3404 = vpop.f32.mrb[0].mxu0
  %v3405 = vadd.f32 0.0, %v3404
  %v3406 = vpop.f32.mrb[0].mxu0
  %3407 = vdwg.mxu0
  %v3409 = vrot.slane %v3405, 2
  %v3411 = vadd.f32 %v2998, %v3409
  %v3412 = vxor.u32 %v3411, 2147483648
  %v3413 = vmul.f32 %v3412, 1.442695
  %v3414 = vpow.pop %v3413
  %v3415 = vadd.f32 %v3414, 1.0
  %v3416 = vrcp.pop %v3415
  %v3417 = vmul.f32 1.0, %v3416
  %v3418 = vtanh.pop %v3411
  %v3420 = vrot.slane %v3321, 6
  %v3422 = vmul.f32 %v3417, %v3420
  %3424 = vrot.lane.b32.xlu0 %v3418, 112
  %v3425 = vpop.permute.xlu0 %3424
  %v3427 = vmul.f32 %v3417, %v3425
  %3429 = vrot.lane.b32.xlu0 %v3427, 8
  %v3430 = vpop.permute.xlu0 %3429
  %v3432 = vadd.f32 %v3422, %v3430
  %v3433 = vtanh.pop %v3432
  %3435 = vrot.lane.b32.xlu0 %v3433, 16
  %v3436 = vpop.permute.xlu0 %3435
  %v3438 = vmul.f32 %v3417, %v3436
  %3440 = vrot.lane.b32.xlu0 %v3438, 104
  %v3441 = vpop.permute.xlu0 %3440
  %3443 = vst.msk [vmem:[#allocation2] sm:$0xc0] %vm548, %v3441
  %v3444 = vrot.slane %v3438, 6
  %3445 = vrot.lane.b32.xlu0 %v3444, 104
  %v3446 = vpop.permute.xlu0 %3445
  %v3447 = vsel %vm27, %v3446, 0
  %3449 = vmatprep.subr.mxu0 0.0
  %3450 = vmatpush1.msra.mxu0 %v14
  %3451 = vmatprep.subr.mxu0 0.0
  %3452 = vmatpush1.msra.mxu0 0.0
  %3453 = vmatprep.subr.mxu0 0.0
  %3454 = vmatpush1.msra.mxu0 0.0
  %3455 = vmatprep.subr.mxu0 0.0
  %3456 = vmatpush1.msra.mxu0 0.0
  %3457 = vmatprep.subr.mxu0 0.0
  %3458 = vmatpush1.msra.mxu0 0.0
  %3459 = vmatprep.subr.mxu0 0.0
  %3460 = vmatpush1.msra.mxu0 0.0
  %3461 = vmatprep.subr.mxu0 0.0
  %3462 = vmatpush1.msra.mxu0 0.0
  %3463 = vmatprep.subr.mxu0 0.0
  %3464 = vmatpush1.msra.mxu0 0.0
  %3465 = vmatprep.subr.mxu0 0.0
  %3466 = vmatpush1.msra.mxu0 0.0
  %3467 = vmatprep.subr.mxu0 0.0
  %3468 = vmatpush1.msra.mxu0 0.0
  %3469 = vmatprep.subr.mxu0 0.0
  %3470 = vmatpush1.msra.mxu0 0.0
  %3471 = vmatprep.subr.mxu0 0.0
  %3472 = vmatpush1.msra.mxu0 0.0
  %3473 = vmatprep.subr.mxu0 0.0
  %3474 = vmatpush1.msra.mxu0 0.0
  %3475 = vmatprep.subr.mxu0 0.0
  %3476 = vmatpush1.msra.mxu0 0.0
  %3477 = vmatprep.subr.mxu0 0.0
  %3478 = vmatpush1.msra.mxu0 0.0
  %3479 = vmatprep.subr.mxu0 0.0
  %3480 = vmatpush1.msra.mxu0 0.0
  %3481 = vmatprep.subr.mxu0 0.0
  %3482 = vmatpush1.msra.mxu0 0.0
  %3483 = vmatprep.subr.mxu0 0.0
  %3484 = vmatpush1.msra.mxu0 0.0
  %3485 = vmatprep.subr.mxu0 0.0
  %3486 = vmatpush1.msra.mxu0 0.0
  %3487 = vmatprep.subr.mxu0 0.0
  %3488 = vmatpush1.msra.mxu0 0.0
  %3489 = vmatprep.subr.mxu0 0.0
  %3490 = vmatpush1.msra.mxu0 0.0
  %3491 = vmatprep.subr.mxu0 0.0
  %3492 = vmatpush1.msra.mxu0 0.0
  %3493 = vmatprep.subr.mxu0 0.0
  %3494 = vmatpush1.msra.mxu0 0.0
  %3495 = vmatprep.subr.mxu0 0.0
  %3496 = vmatpush1.msra.mxu0 0.0
  %3497 = vmatprep.subr.mxu0 0.0
  %3498 = vmatpush1.msra.mxu0 0.0
  %3499 = vmatprep.subr.mxu0 0.0
  %3500 = vmatpush1.msra.mxu0 0.0
  %3501 = vmatprep.subr.mxu0 0.0
  %3502 = vmatpush1.msra.mxu0 0.0
  %3503 = vmatprep.subr.mxu0 0.0
  %3504 = vmatpush1.msra.mxu0 0.0
  %3505 = vmatprep.subr.mxu0 0.0
  %3506 = vmatpush1.msra.mxu0 0.0
  %3507 = vmatprep.subr.mxu0 0.0
  %3508 = vmatpush1.msra.mxu0 0.0
  %3509 = vmatprep.subr.mxu0 0.0
  %3510 = vmatpush1.msra.mxu0 0.0
  %3511 = vmatprep.subr.mxu0 0.0
  %3512 = vmatpush1.msra.mxu0 0.0
  %3513 = vmatprep.mubr.f32.mxu0 0.0
  %3514 = vmatmul.mubr.f32.gmra.mrb[0].mxu0 %v3447
  %v3515 = vpop.f32.mrb[0].mxu0
  %v3516 = vadd.f32 0.0, %v3515
  %v3517 = vpop.f32.mrb[0].mxu0
  %3518 = vdwg.mxu0
  %v3519 = vadd.f32 %v3003, %v3516
  %v3520 = vxor.u32 %v3519, 2147483648
  %v3521 = vmul.f32 %v3520, 1.442695
  %v3522 = vpow.pop %v3521
  %v3523 = vadd.f32 %v3522, 1.0
  %v3524 = vrcp.pop %v3523
  %v3525 = vmul.f32 1.0, %v3524
  %v3526 = vtanh.pop %v3519
  %v3528 = vrot.slane %v3432, 6
  %v3530 = vmul.f32 %v3525, %v3528
  %3532 = vrot.lane.b32.xlu0 %v3526, 112
  %v3533 = vpop.permute.xlu0 %3532
  %v3535 = vmul.f32 %v3525, %v3533
  %3537 = vrot.lane.b32.xlu0 %v3535, 8
  %v3538 = vpop.permute.xlu0 %3537
  %v3540 = vadd.f32 %v3530, %v3538
  %v3541 = vtanh.pop %v3540
  %3543 = vrot.lane.b32.xlu0 %v3541, 16
  %v3544 = vpop.permute.xlu0 %3543
  %v3546 = vmul.f32 %v3525, %v3544
  %3548 = vrot.lane.b32.xlu0 %v3546, 104
  %v3549 = vpop.permute.xlu0 %3548
  %3551 = vst.msk [vmem:[#allocation2 + $0x8] sm:$0x3] %vm215, %v3549
  %v3552 = vsel %vm27, %v3549, 0
  %3554 = vmatprep.subr.mxu0 0.0
  %3555 = vmatpush1.msra.mxu0 %v14
  %3556 = vmatprep.subr.mxu0 0.0
  %3557 = vmatpush1.msra.mxu0 0.0
  %3558 = vmatprep.subr.mxu0 0.0
  %3559 = vmatpush1.msra.mxu0 0.0
  %3560 = vmatprep.subr.mxu0 0.0
  %3561 = vmatpush1.msra.mxu0 0.0
  %3562 = vmatprep.subr.mxu0 0.0
  %3563 = vmatpush1.msra.mxu0 0.0
  %3564 = vmatprep.subr.mxu0 0.0
  %3565 = vmatpush1.msra.mxu0 0.0
  %3566 = vmatprep.subr.mxu0 0.0
  %3567 = vmatpush1.msra.mxu0 0.0
  %3568 = vmatprep.subr.mxu0 0.0
  %3569 = vmatpush1.msra.mxu0 0.0
  %3570 = vmatprep.subr.mxu0 0.0
  %3571 = vmatpush1.msra.mxu0 0.0
  %3572 = vmatprep.subr.mxu0 0.0
  %3573 = vmatpush1.msra.mxu0 0.0
  %3574 = vmatprep.subr.mxu0 0.0
  %3575 = vmatpush1.msra.mxu0 0.0
  %3576 = vmatprep.subr.mxu0 0.0
  %3577 = vmatpush1.msra.mxu0 0.0
  %3578 = vmatprep.subr.mxu0 0.0
  %3579 = vmatpush1.msra.mxu0 0.0
  %3580 = vmatprep.subr.mxu0 0.0
  %3581 = vmatpush1.msra.mxu0 0.0
  %3582 = vmatprep.subr.mxu0 0.0
  %3583 = vmatpush1.msra.mxu0 0.0
  %3584 = vmatprep.subr.mxu0 0.0
  %3585 = vmatpush1.msra.mxu0 0.0
  %3586 = vmatprep.subr.mxu0 0.0
  %3587 = vmatpush1.msra.mxu0 0.0
  %3588 = vmatprep.subr.mxu0 0.0
  %3589 = vmatpush1.msra.mxu0 0.0
  %3590 = vmatprep.subr.mxu0 0.0
  %3591 = vmatpush1.msra.mxu0 0.0
  %3592 = vmatprep.subr.mxu0 0.0
  %3593 = vmatpush1.msra.mxu0 0.0
  %3594 = vmatprep.subr.mxu0 0.0
  %3595 = vmatpush1.msra.mxu0 0.0
  %3596 = vmatprep.subr.mxu0 0.0
  %3597 = vmatpush1.msra.mxu0 0.0
  %3598 = vmatprep.subr.mxu0 0.0
  %3599 = vmatpush1.msra.mxu0 0.0
  %3600 = vmatprep.subr.mxu0 0.0
  %3601 = vmatpush1.msra.mxu0 0.0
  %3602 = vmatprep.subr.mxu0 0.0
  %3603 = vmatpush1.msra.mxu0 0.0
  %3604 = vmatprep.subr.mxu0 0.0
  %3605 = vmatpush1.msra.mxu0 0.0
  %3606 = vmatprep.subr.mxu0 0.0
  %3607 = vmatpush1.msra.mxu0 0.0
  %3608 = vmatprep.subr.mxu0 0.0
  %3609 = vmatpush1.msra.mxu0 0.0
  %3610 = vmatprep.subr.mxu0 0.0
  %3611 = vmatpush1.msra.mxu0 0.0
  %3612 = vmatprep.subr.mxu0 0.0
  %3613 = vmatpush1.msra.mxu0 0.0
  %3614 = vmatprep.subr.mxu0 0.0
  %3615 = vmatpush1.msra.mxu0 0.0
  %3616 = vmatprep.subr.mxu0 0.0
  %3617 = vmatpush1.msra.mxu0 0.0
  %3618 = vmatprep.mubr.f32.mxu0 0.0
  %3619 = vmatmul.mubr.f32.gmra.mrb[0].mxu0 %v3552
  %v3620 = vpop.f32.mrb[0].mxu0
  %v3621 = vadd.f32 0.0, %v3620
  %v3622 = vpop.f32.mrb[0].mxu0
  %3623 = vdwg.mxu0
  %v3625 = vrot.slane %v3621, 6
  %v3627 = vadd.f32 %v3003, %v3625
  %v3628 = vxor.u32 %v3627, 2147483648
  %v3629 = vmul.f32 %v3628, 1.442695
  %v3630 = vpow.pop %v3629
  %v3631 = vadd.f32 %v3630, 1.0
  %v3632 = vrcp.pop %v3631
  %v3633 = vmul.f32 1.0, %v3632
  %v3634 = vtanh.pop %v3627
  %v3636 = vrot.slane %v3540, 6
  %v3638 = vmul.f32 %v3633, %v3636
  %3640 = vrot.lane.b32.xlu0 %v3634, 112
  %v3641 = vpop.permute.xlu0 %3640
  %v3643 = vmul.f32 %v3633, %v3641
  %3645 = vrot.lane.b32.xlu0 %v3643, 8
  %v3646 = vpop.permute.xlu0 %3645
  %v3648 = vadd.f32 %v3638, %v3646
  %v3649 = vtanh.pop %v3648
  %3651 = vrot.lane.b32.xlu0 %v3649, 16
  %v3652 = vpop.permute.xlu0 %3651
  %v3654 = vmul.f32 %v3633, %v3652
  %3656 = vrot.lane.b32.xlu0 %v3654, 104
  %v3657 = vpop.permute.xlu0 %3656
  %3659 = vst.msk [vmem:[#allocation2 + $0x8] sm:$0xc] %vm324, %v3657
  %v3660 = vrot.slane %v3654, 2
  %3661 = vrot.lane.b32.xlu0 %v3660, 104
  %v3662 = vpop.permute.xlu0 %3661
  %v3663 = vsel %vm27, %v3662, 0
  %3665 = vmatprep.subr.mxu0 0.0
  %3666 = vmatpush1.msra.mxu0 %v14
  %3667 = vmatprep.subr.mxu0 0.0
  %3668 = vmatpush1.msra.mxu0 0.0
  %3669 = vmatprep.subr.mxu0 0.0
  %3670 = vmatpush1.msra.mxu0 0.0
  %3671 = vmatprep.subr.mxu0 0.0
  %3672 = vmatpush1.msra.mxu0 0.0
  %3673 = vmatprep.subr.mxu0 0.0
  %3674 = vmatpush1.msra.mxu0 0.0
  %3675 = vmatprep.subr.mxu0 0.0
  %3676 = vmatpush1.msra.mxu0 0.0
  %3677 = vmatprep.subr.mxu0 0.0
  %3678 = vmatpush1.msra.mxu0 0.0
  %3679 = vmatprep.subr.mxu0 0.0
  %3680 = vmatpush1.msra.mxu0 0.0
  %3681 = vmatprep.subr.mxu0 0.0
  %3682 = vmatpush1.msra.mxu0 0.0
  %3683 = vmatprep.subr.mxu0 0.0
  %3684 = vmatpush1.msra.mxu0 0.0
  %3685 = vmatprep.subr.mxu0 0.0
  %3686 = vmatpush1.msra.mxu0 0.0
  %3687 = vmatprep.subr.mxu0 0.0
  %3688 = vmatpush1.msra.mxu0 0.0
  %3689 = vmatprep.subr.mxu0 0.0
  %3690 = vmatpush1.msra.mxu0 0.0
  %3691 = vmatprep.subr.mxu0 0.0
  %3692 = vmatpush1.msra.mxu0 0.0
  %3693 = vmatprep.subr.mxu0 0.0
  %3694 = vmatpush1.msra.mxu0 0.0
  %3695 = vmatprep.subr.mxu0 0.0
  %3696 = vmatpush1.msra.mxu0 0.0
  %3697 = vmatprep.subr.mxu0 0.0
  %3698 = vmatpush1.msra.mxu0 0.0
  %3699 = vmatprep.subr.mxu0 0.0
  %3700 = vmatpush1.msra.mxu0 0.0
  %3701 = vmatprep.subr.mxu0 0.0
  %3702 = vmatpush1.msra.mxu0 0.0
  %3703 = vmatprep.subr.mxu0 0.0
  %3704 = vmatpush1.msra.mxu0 0.0
  %3705 = vmatprep.subr.mxu0 0.0
  %3706 = vmatpush1.msra.mxu0 0.0
  %3707 = vmatprep.subr.mxu0 0.0
  %3708 = vmatpush1.msra.mxu0 0.0
  %3709 = vmatprep.subr.mxu0 0.0
  %3710 = vmatpush1.msra.mxu0 0.0
  %3711 = vmatprep.subr.mxu0 0.0
  %3712 = vmatpush1.msra.mxu0 0.0
  %3713 = vmatprep.subr.mxu0 0.0
  %3714 = vmatpush1.msra.mxu0 0.0
  %3715 = vmatprep.subr.mxu0 0.0
  %3716 = vmatpush1.msra.mxu0 0.0
  %3717 = vmatprep.subr.mxu0 0.0
  %3718 = vmatpush1.msra.mxu0 0.0
  %3719 = vmatprep.subr.mxu0 0.0
  %3720 = vmatpush1.msra.mxu0 0.0
  %3721 = vmatprep.subr.mxu0 0.0
  %3722 = vmatpush1.msra.mxu0 0.0
  %3723 = vmatprep.subr.mxu0 0.0
  %3724 = vmatpush1.msra.mxu0 0.0
  %3725 = vmatprep.subr.mxu0 0.0
  %3726 = vmatpush1.msra.mxu0 0.0
  %3727 = vmatprep.subr.mxu0 0.0
  %3728 = vmatpush1.msra.mxu0 0.0
  %3729 = vmatprep.mubr.f32.mxu0 0.0
  %3730 = vmatmul.mubr.f32.gmra.mrb[0].mxu0 %v3663
  %v3731 = vpop.f32.mrb[0].mxu0
  %v3732 = vadd.f32 0.0, %v3731
  %v3733 = vpop.f32.mrb[0].mxu0
  %3734 = vdwg.mxu0
  %v3736 = vrot.slane %v3732, 4
  %v3738 = vadd.f32 %v3003, %v3736
  %v3739 = vxor.u32 %v3738, 2147483648
  %v3740 = vmul.f32 %v3739, 1.442695
  %v3741 = vpow.pop %v3740
  %v3742 = vadd.f32 %v3741, 1.0
  %v3743 = vrcp.pop %v3742
  %v3744 = vmul.f32 1.0, %v3743
  %v3745 = vtanh.pop %v3738
  %v3747 = vrot.slane %v3648, 6
  %v3749 = vmul.f32 %v3744, %v3747
  %3751 = vrot.lane.b32.xlu0 %v3745, 112
  %v3752 = vpop.permute.xlu0 %3751
  %v3754 = vmul.f32 %v3744, %v3752
  %3756 = vrot.lane.b32.xlu0 %v3754, 8
  %v3757 = vpop.permute.xlu0 %3756
  %v3759 = vadd.f32 %v3749, %v3757
  %v3760 = vtanh.pop %v3759
  %3762 = vrot.lane.b32.xlu0 %v3760, 16
  %v3763 = vpop.permute.xlu0 %3762
  %v3765 = vmul.f32 %v3744, %v3763
  %3767 = vrot.lane.b32.xlu0 %v3765, 104
  %v3768 = vpop.permute.xlu0 %3767
  %3770 = vst.msk [vmem:[#allocation2 + $0x8] sm:$0x30] %vm436, %v3768
  %v3771 = vrot.slane %v3765, 4
  %3772 = vrot.lane.b32.xlu0 %v3771, 104
  %v3773 = vpop.permute.xlu0 %3772
  %v3774 = vsel %vm27, %v3773, 0
  %3776 = vmatprep.subr.mxu0 0.0
  %3777 = vmatpush1.msra.mxu0 %v14
  %3778 = vmatprep.subr.mxu0 0.0
  %3779 = vmatpush1.msra.mxu0 0.0
  %3780 = vmatprep.subr.mxu0 0.0
  %3781 = vmatpush1.msra.mxu0 0.0
  %3782 = vmatprep.subr.mxu0 0.0
  %3783 = vmatpush1.msra.mxu0 0.0
  %3784 = vmatprep.subr.mxu0 0.0
  %3785 = vmatpush1.msra.mxu0 0.0
  %3786 = vmatprep.subr.mxu0 0.0
  %3787 = vmatpush1.msra.mxu0 0.0
  %3788 = vmatprep.subr.mxu0 0.0
  %3789 = vmatpush1.msra.mxu0 0.0
  %3790 = vmatprep.subr.mxu0 0.0
  %3791 = vmatpush1.msra.mxu0 0.0
  %3792 = vmatprep.subr.mxu0 0.0
  %3793 = vmatpush1.msra.mxu0 0.0
  %3794 = vmatprep.subr.mxu0 0.0
  %3795 = vmatpush1.msra.mxu0 0.0
  %3796 = vmatprep.subr.mxu0 0.0
  %3797 = vmatpush1.msra.mxu0 0.0
  %3798 = vmatprep.subr.mxu0 0.0
  %3799 = vmatpush1.msra.mxu0 0.0
  %3800 = vmatprep.subr.mxu0 0.0
  %3801 = vmatpush1.msra.mxu0 0.0
  %3802 = vmatprep.subr.mxu0 0.0
  %3803 = vmatpush1.msra.mxu0 0.0
  %3804 = vmatprep.subr.mxu0 0.0
  %3805 = vmatpush1.msra.mxu0 0.0
  %3806 = vmatprep.subr.mxu0 0.0
  %3807 = vmatpush1.msra.mxu0 0.0
  %3808 = vmatprep.subr.mxu0 0.0
  %3809 = vmatpush1.msra.mxu0 0.0
  %3810 = vmatprep.subr.mxu0 0.0
  %3811 = vmatpush1.msra.mxu0 0.0
  %3812 = vmatprep.subr.mxu0 0.0
  %3813 = vmatpush1.msra.mxu0 0.0
  %3814 = vmatprep.subr.mxu0 0.0
  %3815 = vmatpush1.msra.mxu0 0.0
  %3816 = vmatprep.subr.mxu0 0.0
  %3817 = vmatpush1.msra.mxu0 0.0
  %3818 = vmatprep.subr.mxu0 0.0
  %3819 = vmatpush1.msra.mxu0 0.0
  %3820 = vmatprep.subr.mxu0 0.0
  %3821 = vmatpush1.msra.mxu0 0.0
  %3822 = vmatprep.subr.mxu0 0.0
  %3823 = vmatpush1.msra.mxu0 0.0
  %3824 = vmatprep.subr.mxu0 0.0
  %3825 = vmatpush1.msra.mxu0 0.0
  %3826 = vmatprep.subr.mxu0 0.0
  %3827 = vmatpush1.msra.mxu0 0.0
  %3828 = vmatprep.subr.mxu0 0.0
  %3829 = vmatpush1.msra.mxu0 0.0
  %3830 = vmatprep.subr.mxu0 0.0
  %3831 = vmatpush1.msra.mxu0 0.0
  %3832 = vmatprep.subr.mxu0 0.0
  %3833 = vmatpush1.msra.mxu0 0.0
  %3834 = vmatprep.subr.mxu0 0.0
  %3835 = vmatpush1.msra.mxu0 0.0
  %3836 = vmatprep.subr.mxu0 0.0
  %3837 = vmatpush1.msra.mxu0 0.0
  %3838 = vmatprep.subr.mxu0 0.0
  %3839 = vmatpush1.msra.mxu0 0.0
  %3840 = vmatprep.mubr.f32.mxu0 0.0
  %3841 = vmatmul.mubr.f32.gmra.mrb[0].mxu0 %v3774
  %v3842 = vpop.f32.mrb[0].mxu0
  %v3843 = vadd.f32 0.0, %v3842
  %v3844 = vpop.f32.mrb[0].mxu0
  %3845 = vdwg.mxu0
  %v3847 = vrot.slane %v3843, 2
  %v3849 = vadd.f32 %v3003, %v3847
  %v3850 = vxor.u32 %v3849, 2147483648
  %v3851 = vmul.f32 %v3850, 1.442695
  %v3852 = vpow.pop %v3851
  %v3853 = vadd.f32 %v3852, 1.0
  %v3854 = vrcp.pop %v3853
  %v3855 = vmul.f32 1.0, %v3854
  %v3856 = vtanh.pop %v3849
  %v3858 = vrot.slane %v3759, 6
  %v3860 = vmul.f32 %v3855, %v3858
  %3862 = vrot.lane.b32.xlu0 %v3856, 112
  %v3863 = vpop.permute.xlu0 %3862
  %v3865 = vmul.f32 %v3855, %v3863
  %3867 = vrot.lane.b32.xlu0 %v3865, 8
  %v3868 = vpop.permute.xlu0 %3867
  %v3870 = vadd.f32 %v3860, %v3868
  %v3871 = vtanh.pop %v3870
  %3873 = vrot.lane.b32.xlu0 %v3871, 16
  %v3874 = vpop.permute.xlu0 %3873
  %v3876 = vmul.f32 %v3855, %v3874
  %3878 = vrot.lane.b32.xlu0 %v3876, 104
  %v3879 = vpop.permute.xlu0 %3878
  %3881 = vst.msk [vmem:[#allocation2 + $0x8] sm:$0xc0] %vm548, %v3879
  %v3882 = vld [vmem:[#allocation2] sm:$0xff]
  %v3883 = vld [vmem:[#allocation2 + $0x8] sm:$0xff]
  %v3884 = vmax.f32 %v3882, -1.0
  %v3885 = vmax.f32 %v3883, -1.0
  %v3886 = vmin.f32 %v3884, 1.0
  %v3887 = vmin.f32 %v3885, 1.0
  %v3888 = vxor.u32 %v3886, 2147483648
  %v3889 = vxor.u32 %v3887, 2147483648
  %v3890 = vmul.f32 %v3888, 1.442695
  %v3891 = vpow.pop %v3890
  %v3892 = vmul.f32 %v3889, 1.442695
  %v3893 = vpow.pop %v3892
  %v3894 = vadd.f32 %v3891, 1.0
  %v3895 = vadd.f32 %v3893, 1.0
  %v3896 = vrcp.pop %v3894
  %v3897 = vmul.f32 1.0, %v3896
  %v3898 = vrcp.pop %v3895
  %v3899 = vmul.f32 1.0, %v3898
  %v3900 = vld [vmem:[%s1 + $0x40] sm:$0xff]
  %v3901 = vld [vmem:[%s1 + $0x4c] sm:$0x1]
  %v3902 = vlaneseq
  %v3903 = vshrl.u32 %v3902, 7
  %v3904 = vsub.s32 0, %v3903
  %v3905 = vrot.slane %v3901, %v3904
  %v3907 = vsel %vm27, %v3897, 0
  %v3910 = vsel %vm27, %v3899, 0
  %3912 = vmatprep.subr.mxu0 0.0
  %3913 = vmatpush1.msra.mxu0 %v3900
  %3914 = vmatprep.subr.mxu0 0.0
  %3915 = vmatpush1.msra.mxu0 0.0
  %3916 = vmatprep.subr.mxu0 0.0
  %3917 = vmatpush1.msra.mxu0 0.0
  %3918 = vmatprep.subr.mxu0 0.0
  %3919 = vmatpush1.msra.mxu0 0.0
  %3920 = vmatprep.subr.mxu0 0.0
  %3921 = vmatpush1.msra.mxu0 0.0
  %3922 = vmatprep.subr.mxu0 0.0
  %3923 = vmatpush1.msra.mxu0 0.0
  %3924 = vmatprep.subr.mxu0 0.0
  %3925 = vmatpush1.msra.mxu0 0.0
  %3926 = vmatprep.subr.mxu0 0.0
  %3927 = vmatpush1.msra.mxu0 0.0
  %3928 = vmatprep.subr.mxu0 0.0
  %3929 = vmatpush1.msra.mxu0 0.0
  %3930 = vmatprep.subr.mxu0 0.0
  %3931 = vmatpush1.msra.mxu0 0.0
  %3932 = vmatprep.subr.mxu0 0.0
  %3933 = vmatpush1.msra.mxu0 0.0
  %3934 = vmatprep.subr.mxu0 0.0
  %3935 = vmatpush1.msra.mxu0 0.0
  %3936 = vmatprep.subr.mxu0 0.0
  %3937 = vmatpush1.msra.mxu0 0.0
  %3938 = vmatprep.subr.mxu0 0.0
  %3939 = vmatpush1.msra.mxu0 0.0
  %3940 = vmatprep.subr.mxu0 0.0
  %3941 = vmatpush1.msra.mxu0 0.0
  %3942 = vmatprep.subr.mxu0 0.0
  %3943 = vmatpush1.msra.mxu0 0.0
  %3944 = vmatprep.subr.mxu0 0.0
  %3945 = vmatpush1.msra.mxu0 0.0
  %3946 = vmatprep.subr.mxu0 0.0
  %3947 = vmatpush1.msra.mxu0 0.0
  %3948 = vmatprep.subr.mxu0 0.0
  %3949 = vmatpush1.msra.mxu0 0.0
  %3950 = vmatprep.subr.mxu0 0.0
  %3951 = vmatpush1.msra.mxu0 0.0
  %3952 = vmatprep.subr.mxu0 0.0
  %3953 = vmatpush1.msra.mxu0 0.0
  %3954 = vmatprep.subr.mxu0 0.0
  %3955 = vmatpush1.msra.mxu0 0.0
  %3956 = vmatprep.subr.mxu0 0.0
  %3957 = vmatpush1.msra.mxu0 0.0
  %3958 = vmatprep.subr.mxu0 0.0
  %3959 = vmatpush1.msra.mxu0 0.0
  %3960 = vmatprep.subr.mxu0 0.0
  %3961 = vmatpush1.msra.mxu0 0.0
  %3962 = vmatprep.subr.mxu0 0.0
  %3963 = vmatpush1.msra.mxu0 0.0
  %3964 = vmatprep.subr.mxu0 0.0
  %3965 = vmatpush1.msra.mxu0 0.0
  %3966 = vmatprep.subr.mxu0 0.0
  %3967 = vmatpush1.msra.mxu0 0.0
  %3968 = vmatprep.subr.mxu0 0.0
  %3969 = vmatpush1.msra.mxu0 0.0
  %3970 = vmatprep.subr.mxu0 0.0
  %3971 = vmatpush1.msra.mxu0 0.0
  %3972 = vmatprep.subr.mxu0 0.0
  %3973 = vmatpush1.msra.mxu0 0.0
  %3974 = vmatprep.subr.mxu0 0.0
  %3975 = vmatpush1.msra.mxu0 0.0
  %3976 = vmatprep.mubr.f32.mxu0 0.0
  %3977 = vmatmul.mubr.f32.gmra.mrb[0].mxu0 %v3907
  %v3978 = vpop.f32.mrb[0].mxu0
  %v3979 = vadd.f32 %v3905, %v3978
  %v3980 = vpop.f32.mrb[0].mxu0
  %3981 = vmatprep.mubr.f32.mxu0 0.0
  %3982 = vmatmul.mubr.f32.gmra.mrb[0].mxu0 %v3910
  %v3983 = vpop.f32.mrb[0].mxu0
  %v3984 = vadd.f32 %v3905, %v3983
  %v3985 = vpop.f32.mrb[0].mxu0
  %3986 = vdwg.mxu0
  %v3987 = vrot.slane %v2911, 6
  %v3989 = vrot.slane %v3876, 4
  %v3992 = vrot.slane %v2905, 2
  %3993 = vrot.lane.b32.xlu0 %v3992, 16
  %v3994 = vpop.permute.xlu0 %3993
  %3997 = vrot.lane.b32.xlu0 %v3870, 16
  %v3998 = vpop.permute.xlu0 %3997
  %vm4000 = vcmask 1041408
  %v4001 = vsel %vm4000, %v3987, %v3989
  %vm4002 = vcmask 1043456
  %v4003 = vsel %vm4002, %v4001, %v3994
  %vm4004 = vcmask 1045504
  %v4005 = vsel %vm4004, %v4003, %v3998
  %4007 = vrot.lane.b32.xlu0 %v4005, 104
  %v4008 = vpop.permute.xlu0 %4007
  %v4010 = vsel %vm27, %v4008, 0.0
  %vm4011 = vcmask 261120
  %4012 = vst.msk [vmem:[%s2] sm:$0xff] %vm4011, %v3979
  %4013 = vst.msk [vmem:[%s2 + $0x8] sm:$0xff] %vm4011, %v3984
  %4014 = vst.msk [vmem:[%s2 + $0x10] sm:$0xff] %vm4011, %v4010
  // Predicated region
  $region10: #{model_forward.1} parent=0 // pred_check
    _
  $region11: #{model_forward.1} parent=0 // pred_check_branch
    %4016 = sbr.rel (0) target = $region13
  $region12: #{model_forward.1} parent=0 // pred_region
    _
  $region13: #{model_forward.1} parent=0 // pred_fallthru
    _
  // Predicated region
  $region14: #{model_forward.1} parent=0 // pred_check
    _
  $region15: #{model_forward.1} parent=0 // pred_check_branch
    %4018 = sbr.rel (0) target = $region17
  $region16: #{model_forward.1} parent=0 // pred_region
    _
  $region17: #{model_forward.1} parent=0 // pred_fallthru
    _

</llo_original>
